<compile_context>
chip_gen: v6e
topology: v6e:2x2x1
jax: 0.10.0
libtpu: 0.0.40
codegen_flags: <defaults>
</compile_context>

<pallas_src>
import functools

import jax
import jax.numpy as jnp
from jax.experimental import pallas as pl
from jax.experimental.pallas import tpu as pltpu

NEG_INFTY = -1.0e9          # matches the PyTorch module's neg_infty
LN_EPS = 1e-6               # matches nn.LayerNorm(eps=1e-06) in the reference


# ------------------------------------------------------- generation-aware budgets --

def _tpu_vmem_capacity():
    try:
        return int(pltpu.get_tpu_info().vmem_capacity_bytes)
    except Exception:
        return 64 * 1024 * 1024     # conservative fallback (v7x-sized)


_VMEM_CAP = _tpu_vmem_capacity()
# Leave ~25% headroom for compiler scratch / semaphores / double buffers.
_VMEM_BUDGET = (_VMEM_CAP * 3) // 4
# Bigger tiles on 128 MiB parts (v5e/v6e), conservative on 64 MiB parts (v7x).
_ROW_TILE = 1024 if _VMEM_BUDGET >= 80 * 1024 * 1024 else 512
_COL_TILE = 1024 if _VMEM_BUDGET >= 80 * 1024 * 1024 else 512


def _pick_tile(dim, target, align, min_grid=1):
    """Largest tile <= target that divides `dim` and is a multiple of `align`;
    optionally capped so the grid has >= min_grid steps (2-TC chips); falls back
    to the full dim (always legal) for small / awkward sizes."""
    if min_grid > 1 and dim >= min_grid * align:
        target = min(target, dim // min_grid)
    if dim <= target:
        return dim
    t = (target // align) * align
    while t >= align:
        if dim % t == 0:
            return t
        t -= align
    return dim


def _mosaic(dims):
    return pltpu.CompilerParams(dimension_semantics=dims,
                                vmem_limit_bytes=_VMEM_BUDGET)


# ------------------------------------------------------------------- kernels --

def _proj_kernel(n_proj, apply_ln, *refs):
    """(optional LayerNorm) followed by n_proj matmuls; x is loaded once."""
    if apply_ln:
        x_ref, g_ref, b_ref = refs[0], refs[1], refs[2]
        w_refs = refs[3:3 + n_proj]
    else:
        x_ref = refs[0]
        w_refs = refs[1:1 + n_proj]
    out_refs = refs[len(refs) - n_proj:]

    x = x_ref[...]                                       # (tm, D) f32
    if apply_ln:
        mean = jnp.mean(x, axis=-1, keepdims=True)
        var = jnp.mean(jnp.square(x - mean), axis=-1, keepdims=True)
        x = (x - mean) * jax.lax.rsqrt(var + LN_EPS) * g_ref[...] + b_ref[...]
    xb = x.astype(jnp.bfloat16)                          # MXU input
    for w_ref, o_ref in zip(w_refs, out_refs):
        o_ref[...] = jnp.dot(xb, w_ref[...],
                             preferred_element_type=jnp.float32).astype(o_ref.dtype)


def _attention_kernel(causal, n_heads, q_ref, k_ref, v_ref, wc_ref, r_ref, o_ref):
    """Head-packed attention for one (batch, q-tile):
       out = residual + combine_heads(softmax(q k^T / sqrt(dd)) v) @ wc."""
    q_all = q_ref[0]                                     # (tq, D) bf16
    k_all = k_ref[0]                                     # (Lk, D) bf16
    v_all = v_ref[0]                                     # (Lk, D) bf16
    tq, d_model = q_all.shape
    lk = k_all.shape[0]
    dd = d_model // n_heads
    scale = float(dd) ** -0.5

    # Fold the 1/sqrt(dd) scale into q (tq*D multiplies instead of tq*Lk*H).
    q_all = q_all * scale

    if causal:
        qi = pl.program_id(1)
        row = qi * tq + jax.lax.broadcasted_iota(jnp.int32, (tq, lk), 0)
        col = jax.lax.broadcasted_iota(jnp.int32, (tq, lk), 1)
        # Reference adds mask * neg_infty additively; reproduce that.
        mask = jnp.where(col > row, NEG_INFTY, 0.0)

    head_outs = []
    for h in range(n_heads):
        sl = slice(h * dd, (h + 1) * dd)
        qh = q_all[:, sl]                                # (tq, dd) bf16
        kh = k_all[:, sl]                                # (Lk, dd) bf16
        vh = v_all[:, sl]                                # (Lk, dd) bf16

        # Contract last dims -> no k transpose materialized.
        logits = jax.lax.dot_general(
            qh, kh, dimension_numbers=(((1,), (1,)), ((), ())),
            preferred_element_type=jnp.float32)          # (tq, Lk) f32
        if causal:
            logits = logits + mask

        m = jnp.max(logits, axis=-1, keepdims=True)
        p = jnp.exp(logits - m)
        l = jnp.sum(p, axis=-1, keepdims=True)           # (tq, 1) f32, >= 1
        o_h = jnp.dot(p.astype(jnp.bfloat16), vh,
                      preferred_element_type=jnp.float32)        # (tq, dd) f32
        # Normalize AFTER the PV matmul (tq*dd mults) with the EUP reciprocal.
        o_h = o_h * pl.reciprocal(l, approx=True)
        head_outs.append(o_h)

    combined = jnp.concatenate(head_outs, axis=-1)       # (tq, D) f32 == combine_heads
    # Fused output projection + residual; lane-dense (tq, D) store.
    o_ref[0] = r_ref[0] + jnp.dot(combined.astype(jnp.bfloat16), wc_ref[...],
                                  preferred_element_type=jnp.float32)


def _ln_ffn_single_kernel(x_ref, g_ref, b_ref, w1_ref, b1_ref, w2_ref, b2_ref, o_ref):
    """out = x + Linear2(relu(Linear1(LayerNorm(x)))), single pass (w1/w2 resident)."""
    x = x_ref[...]
    mean = jnp.mean(x, axis=-1, keepdims=True)
    var = jnp.mean(jnp.square(x - mean), axis=-1, keepdims=True)
    xn = ((x - mean) * jax.lax.rsqrt(var + LN_EPS) * g_ref[...] + b_ref[...]
          ).astype(jnp.bfloat16)
    h = jnp.dot(xn, w1_ref[...], preferred_element_type=jnp.float32) + b1_ref[...]
    h = jnp.maximum(h, 0.0)
    o_ref[...] = (jnp.dot(h.astype(jnp.bfloat16), w2_ref[...],
                          preferred_element_type=jnp.float32) + b2_ref[...] + x)


def _ln_ffn_tiled_kernel(x_ref, g_ref, b_ref, w1_ref, b1_ref, w2_ref, b2_ref,
                         o_ref, xn_ref, acc_ref):
    """Same as above with d_ffwd tiled on grid axis 1 and an f32 accumulator."""
    f = pl.program_id(1)

    @pl.when(f == 0)
    def _ln():
        x = x_ref[...]
        mean = jnp.mean(x, axis=-1, keepdims=True)
        var = jnp.mean(jnp.square(x - mean), axis=-1, keepdims=True)
        xn = (x - mean) * jax.lax.rsqrt(var + LN_EPS) * g_ref[...] + b_ref[...]
        xn_ref[...] = xn.astype(jnp.bfloat16)

    h = (jnp.dot(xn_ref[...], w1_ref[...], preferred_element_type=jnp.float32)
         + b1_ref[...])
    h = jnp.maximum(h, 0.0)
    partial = jnp.dot(h.astype(jnp.bfloat16), w2_ref[...],
                      preferred_element_type=jnp.float32)

    # Initialize the accumulator with the first partial product (no zero-fill RMW).
    @pl.when(f == 0)
    def _first():
        acc_ref[...] = partial

    @pl.when(f != 0)
    def _rest():
        acc_ref[...] += partial

    @pl.when(f == pl.num_programs(1) - 1)
    def _finish():
        o_ref[...] = acc_ref[...] + b2_ref[...] + x_ref[...]


def _logits_kernel(x_ref, e_ref, o_ref):
    """logits tile = x @ embed^T, contracting embed's dim 1 (no HBM transpose);
    both inputs arrive pre-cast to bf16."""
    o_ref[...] = jax.lax.dot_general(
        x_ref[...], e_ref[...],
        dimension_numbers=(((1,), (1,)), ((), ())),
        preferred_element_type=jnp.float32)


# ------------------------------------------------------------------ wrappers --

def fused_proj(x2d, weights, gamma=None, beta=None):
    """(optional LayerNorm) + matmul against each weight; outputs are bf16."""
    M, D = x2d.shape
    n = len(weights)
    apply_ln = gamma is not None
    tm = _pick_tile(M, _ROW_TILE, 16, min_grid=2)
    grid = (M // tm,)

    x_spec = pl.BlockSpec((tm, D), lambda m: (m, 0))
    vec_spec = pl.BlockSpec((1, D), lambda m: (0, 0))
    w_specs = [pl.BlockSpec(w.shape, lambda m: (0, 0)) for w in weights]
    in_specs = [x_spec] + ([vec_spec, vec_spec] if apply_ln else []) + w_specs
    out_specs = [pl.BlockSpec((tm, w.shape[1]), lambda m: (m, 0)) for w in weights]
    out_shape = [jax.ShapeDtypeStruct((M, w.shape[1]), jnp.bfloat16) for w in weights]
    args = [x2d] + ([gamma, beta] if apply_ln else []) + list(weights)

    outs = pl.pallas_call(
        functools.partial(_proj_kernel, n, apply_ln),
        out_shape=out_shape,
        grid=grid,
        in_specs=in_specs,
        out_specs=out_specs,
        compiler_params=_mosaic(("parallel",)),
    )(*args)
    return tuple(outs)


def attention(qh, kh, vh, wc, residual, n_heads, causal):
    """qh: (B, Lq, D), kh/vh: (B, Lk, D) bf16; wc: (D, D) bf16; residual: (B, Lq, D) f32.
    Returns residual + combine_heads(attn) @ wc, as (B, Lq, D) f32."""
    B, Lq, D = qh.shape
    Lk = kh.shape[1]
    tq = _pick_tile(Lq, 256, 16)
    grid = (B, Lq // tq)
    return pl.pallas_call(
        functools.partial(_attention_kernel, causal, n_heads),
        out_shape=jax.ShapeDtypeStruct((B, Lq, D), jnp.float32),
        grid=grid,
        in_specs=[
            pl.BlockSpec((1, tq, D), lambda b, qi: (b, qi, 0)),
            pl.BlockSpec((1, Lk, D), lambda b, qi: (b, 0, 0)),
            pl.BlockSpec((1, Lk, D), lambda b, qi: (b, 0, 0)),
            pl.BlockSpec((D, D), lambda b, qi: (0, 0)),
            pl.BlockSpec((1, tq, D), lambda b, qi: (b, qi, 0)),
        ],
        out_specs=pl.BlockSpec((1, tq, D), lambda b, qi: (b, qi, 0)),
        compiler_params=_mosaic(("parallel", "parallel")),
    )(qh, kh, vh, wc, residual)


def ln_ffn_residual(x2d, gamma, beta, w1, b1, w2, b2):
    """x + FFN(LayerNorm(x)); single-pass when w1/w2 fit VMEM, else d_ffwd tiled."""
    M, D = x2d.shape
    F = w1.shape[1]
    tm = _pick_tile(M, _ROW_TILE, 16, min_grid=2)

    weight_bytes = 2 * (D * F + F * D) * 2               # double-buffered bf16 w1+w2
    act_bytes = tm * (4 * D * 4 + F * 4)                  # x/out tiles + hidden
    if weight_bytes + act_bytes <= _VMEM_BUDGET // 2:
        grid = (M // tm,)
        return pl.pallas_call(
            _ln_ffn_single_kernel,
            out_shape=jax.ShapeDtypeStruct((M, D), jnp.float32),
            grid=grid,
            in_specs=[
                pl.BlockSpec((tm, D), lambda m: (m, 0)),
                pl.BlockSpec((1, D), lambda m: (0, 0)),
                pl.BlockSpec((1, D), lambda m: (0, 0)),
                pl.BlockSpec((D, F), lambda m: (0, 0)),
                pl.BlockSpec((1, F), lambda m: (0, 0)),
                pl.BlockSpec((F, D), lambda m: (0, 0)),
                pl.BlockSpec((1, D), lambda m: (0, 0)),
            ],
            out_specs=pl.BlockSpec((tm, D), lambda m: (m, 0)),
            compiler_params=_mosaic(("parallel",)),
        )(x2d, gamma, beta, w1, b1, w2, b2)

    tf = _pick_tile(F, _COL_TILE, 128)
    grid = (M // tm, F // tf)
    return pl.pallas_call(
        _ln_ffn_tiled_kernel,
        out_shape=jax.ShapeDtypeStruct((M, D), jnp.float32),
        grid=grid,
        in_specs=[
            pl.BlockSpec((tm, D), lambda m, f: (m, 0)),
            pl.BlockSpec((1, D), lambda m, f: (0, 0)),
            pl.BlockSpec((1, D), lambda m, f: (0, 0)),
            pl.BlockSpec((D, tf), lambda m, f: (0, f)),
            pl.BlockSpec((1, tf), lambda m, f: (0, f)),
            pl.BlockSpec((tf, D), lambda m, f: (f, 0)),
            pl.BlockSpec((1, D), lambda m, f: (0, 0)),
        ],
        out_specs=pl.BlockSpec((tm, D), lambda m, f: (m, 0)),
        scratch_shapes=[pltpu.VMEM((tm, D), jnp.bfloat16),
                        pltpu.VMEM((tm, D), jnp.float32)],
        compiler_params=_mosaic(("parallel", "arbitrary")),
    )(x2d, gamma, beta, w1, b1, w2, b2)


def logits_matmul(x2d, embed):
    """x2d (M, D) @ embed^T (V, D) -> (M, V); bf16 inputs pre-cast once in the wrapper."""
    M, D = x2d.shape
    V = embed.shape[0]
    x_bf = x2d.astype(jnp.bfloat16)
    e_bf = embed if embed.dtype == jnp.bfloat16 else embed.astype(jnp.bfloat16)
    tm = _pick_tile(M, _ROW_TILE, 16, min_grid=2)
    tv = _pick_tile(V, _COL_TILE, 128)
    grid = (M // tm, V // tv)
    return pl.pallas_call(
        _logits_kernel,
        out_shape=jax.ShapeDtypeStruct((M, V), jnp.float32),
        grid=grid,
        in_specs=[
            pl.BlockSpec((tm, D), lambda m, v: (m, 0)),
            pl.BlockSpec((tv, D), lambda m, v: (v, 0)),
        ],
        out_specs=pl.BlockSpec((tm, tv), lambda m, v: (m, v)),
        compiler_params=_mosaic(("parallel", "parallel")),
    )(x_bf, e_bf)


# --------------------------------------------------------------- model glue --

def self_attention_block(x_embed, p_attn, ln_g, ln_b, n_heads, causal):
    """x_embed + wc(MHA(LN(x_embed))) — matches attn_self in the reference."""
    B, L, D = x_embed.shape
    x2 = x_embed.reshape(-1, D)
    q2, k2, v2 = fused_proj(x2, [p_attn["wq"], p_attn["wk"], p_attn["wv"]],
                            ln_g, ln_b)
    return attention(q2.reshape(B, L, D), k2.reshape(B, L, D), v2.reshape(B, L, D),
                     p_attn["wc"], x_embed, n_heads, causal)


def cross_attention_block(x_dec, x_enc, p_attn, ln_g, ln_b, n_heads):
    """x_dec + wc(MHA(q=LN(x_dec), k=v=x_enc)) — attn_enc_dec in the reference."""
    B, Lq, D = x_dec.shape
    Lk = x_enc.shape[1]
    (q2,) = fused_proj(x_dec.reshape(-1, D), [p_attn["wq"]], ln_g, ln_b)
    k2, v2 = fused_proj(x_enc.reshape(-1, D),
                        [p_attn["wk"], p_attn["wv"]])        # no LN on x_enc
    return attention(q2.reshape(B, Lq, D), k2.reshape(B, Lk, D), v2.reshape(B, Lk, D),
                     p_attn["wc"], x_dec, n_heads, causal=False)


def ffn_block(x, p_ffn, ln_g, ln_b):
    B, L, D = x.shape
    out = ln_ffn_residual(x.reshape(-1, D), ln_g, ln_b,
                          p_ffn["w1"], p_ffn["b1"], p_ffn["w2"], p_ffn["b2"])
    return out.reshape(B, L, D)


def encoder_layer(x_in, x_pos, p, n_heads):
    x_embed = x_in + x_pos
    a = self_attention_block(x_embed, p["attn_self"], p["ln1_g"], p["ln1_b"],
                             n_heads, causal=False)
    return ffn_block(a, p["ffw_self"], p["ln2_g"], p["ln2_b"])


def decoder_layer(x_enc, x_dec, x_pos, p, n_heads):
    x_embed = x_dec + x_pos
    a1 = self_attention_block(x_embed, p["attn_self"], p["ln1_g"], p["ln1_b"],
                              n_heads, causal=True)
    f1 = ffn_block(a1, p["ffw_self"], p["ln2_g"], p["ln2_b"])
    a2 = cross_attention_block(f1, x_enc, p["attn_enc_dec"],
                               p["ln3_g"], p["ln3_b"], n_heads)
    f2 = ffn_block(a2, p["ffw_enc_dec"], p["ln4_g"], p["ln4_b"])
    return f2


def encoder_forward(params, x, n_heads, d_model):
    B, L = x.shape
    d_rsqrt = float(d_model) ** -0.5
    # TODO(synk): embedding gathers stay in plain JAX (XLA gather)
    layer_in = jnp.take(params["embed"], x, axis=0) * d_rsqrt
    pos_idx = jnp.arange(L)
    for lp, pe in zip(params["layers"], params["pos_embed"]):
        x_pos = jnp.take(pe, pos_idx, axis=0)[None, :, :] * d_rsqrt
        layer_in = encoder_layer(layer_in, x_pos, lp, n_heads)
    return layer_in


def decoder_forward(params, x_enc, x_dec, n_heads, d_model):
    B, L = x_dec.shape
    d_rsqrt = float(d_model) ** -0.5
    layer_in = jnp.take(params["embed"], x_dec, axis=0) * d_rsqrt
    pos_idx = jnp.arange(L)
    for lp, pe in zip(params["layers"], params["pos_embed"]):
        x_pos = jnp.take(pe, pos_idx, axis=0)[None, :, :] * d_rsqrt
        layer_in = decoder_layer(x_enc, layer_in, x_pos, lp, n_heads)
    D = params["embed"].shape[1]
    V = params["embed"].shape[0]
    logits = logits_matmul(layer_in.reshape(-1, D), params["embed"]).reshape(B, L, V)
    return layer_in, logits


def transformer_forward(params, x_encode, x_decode, n_heads, d_model):
    enc_out = encoder_forward(params["encoder"], x_encode, n_heads, d_model)
    return decoder_forward(params["decoder"], enc_out, x_decode, n_heads, d_model)


# --------------------------------------------------------------- param init --

def init_mha(key, d_model):
    ks = jax.random.split(key, 4)
    scale = 0.05
    # MXU inputs are bf16: store the (bias-free) projection weights in bf16
    return {name: (jax.random.normal(k, (d_model, d_model), jnp.float32)
                   * scale).astype(jnp.bfloat16)
            for name, k in zip(("wq", "wk", "wv", "wc"), ks)}


def init_ffw(key, d_model, d_ffwd):
    k1, k2, k3, k4 = jax.random.split(key, 4)
    return {
        "w1": (jax.random.normal(k1, (d_model, d_ffwd), jnp.float32)
               * 0.05).astype(jnp.bfloat16),
        "b1": jax.random.normal(k2, (1, d_ffwd), jnp.float32) * 0.05,
        "w2": (jax.random.normal(k3, (d_ffwd, d_model), jnp.float32)
               * 0.05).astype(jnp.bfloat16),
        "b2": jax.random.normal(k4, (1, d_model), jnp.float32) * 0.05,
    }


def init_ln(d_model):
    return jnp.ones((1, d_model), jnp.float32), jnp.zeros((1, d_model), jnp.float32)


def init_encoder_layer(key, d_model, n_heads, d_ffwd):
    k1, k2 = jax.random.split(key)
    g1, b1 = init_ln(d_model)
    g2, b2 = init_ln(d_model)
    return {"attn_self": init_mha(k1, d_model),
            "ffw_self": init_ffw(k2, d_model, d_ffwd),
            "ln1_g": g1, "ln1_b": b1, "ln2_g": g2, "ln2_b": b2}


def init_decoder_layer(key, d_model, n_heads, d_ffwd):
    k1, k2, k3, k4 = jax.random.split(key, 4)
    g1, b1 = init_ln(d_model)
    g2, b2 = init_ln(d_model)
    g3, b3 = init_ln(d_model)
    g4, b4 = init_ln(d_model)
    return {"attn_self": init_mha(k1, d_model),
            "ffw_self": init_ffw(k2, d_model, d_ffwd),
            "attn_enc_dec": init_mha(k3, d_model),
            "ffw_enc_dec": init_ffw(k4, d_model, d_ffwd),
            "ln1_g": g1, "ln1_b": b1, "ln2_g": g2, "ln2_b": b2,
            "ln3_g": g3, "ln3_b": b3, "ln4_g": g4, "ln4_b": b4}


def init_stack(key, n_layers, d_model, n_heads, d_ffwd, vocab, seq_len, is_decoder):
    k_emb, k_pos, k_layers = jax.random.split(key, 3)
    layer_keys = jax.random.split(k_layers, n_layers)
    pos_keys = jax.random.split(k_pos, n_layers)
    init_layer = init_decoder_layer if is_decoder else init_encoder_layer
    return {
        "embed": jax.random.normal(k_emb, (vocab, d_model), jnp.float32),
        "pos_embed": [jax.random.normal(pk, (seq_len, d_model), jnp.float32)
                      for pk in pos_keys],
        "layers": [init_layer(lk, d_model, n_heads, d_ffwd) for lk in layer_keys],
    }


# --------------------------------------------------------------------- main --

if __name__ == "__main__":
    n_layers, n_heads, d_model, d_ffwd = 2, 4, 128, 256
    enc_vocab, dec_vocab = 64, 64
    enc_seq, dec_seq = 16, 16
    batch = 2

    root = jax.random.PRNGKey(0)
    k_enc, k_dec, k_xe, k_xd = jax.random.split(root, 4)
    params = {
        "encoder": init_stack(k_enc, n_layers, d_model, n_heads, d_ffwd,
                              enc_vocab, enc_seq, is_decoder=False),
        "decoder": init_stack(k_dec, n_layers, d_model, n_heads, d_ffwd,
                              dec_vocab, dec_seq, is_decoder=True),
    }

    x_encode = jax.random.randint(k_xe, (batch, enc_seq), 0, enc_vocab, jnp.int32)
    x_decode = jax.random.randint(k_xd, (batch, dec_seq), 0, dec_vocab, jnp.int32)

    fwd = jax.jit(functools.partial(transformer_forward,
                                    n_heads=n_heads, d_model=d_model))
    dec_output, dec_logits = fwd(params, x_encode, x_decode)
    jax.block_until_ready((dec_output, dec_logits))

    assert dec_output.shape == (batch, dec_seq, d_model)
    assert dec_logits.shape == (batch, dec_seq, dec_vocab)
    assert jnp.all(jnp.isfinite(dec_output)) and jnp.all(jnp.isfinite(dec_logits))
    print("KERNEL_OK")
</pallas_src>

<mosaic_0001>
module attributes {stable_mosaic.version = 11 : i64} {
  func.func @_proj_kernel(%arg0: i32, %arg1: memref<16x128xf32, #tpu.memory_space<vmem>>, %arg2: memref<1x128xf32, #tpu.memory_space<vmem>>, %arg3: memref<1x128xf32, #tpu.memory_space<vmem>>, %arg4: memref<128x128xbf16, #tpu.memory_space<vmem>>, %arg5: memref<128x128xbf16, #tpu.memory_space<vmem>>, %arg6: memref<128x128xbf16, #tpu.memory_space<vmem>>, %arg7: memref<16x128xbf16, #tpu.memory_space<vmem>>, %arg8: memref<16x128xbf16, #tpu.memory_space<vmem>>, %arg9: memref<16x128xbf16, #tpu.memory_space<vmem>>) attributes {dimension_semantics = [#tpu.dimension_semantics<parallel>], iteration_bounds = array<i64: 2>, scalar_prefetch = 0 : i64, scratch_operands = 0 : i64, tpu.core_type = #tpu.core_type<tc>, window_params = [{transform_indices = @transform_0, window_bounds = array<i64: 16, 128>}, {pipeline_mode = #tpu.pipeline_mode<synchronous>, transform_indices = @transform_1, window_bounds = array<i64: 1, 128>}, {pipeline_mode = #tpu.pipeline_mode<synchronous>, transform_indices = @transform_2, window_bounds = array<i64: 1, 128>}, {pipeline_mode = #tpu.pipeline_mode<synchronous>, transform_indices = @transform_3, window_bounds = array<i64: 128, 128>}, {pipeline_mode = #tpu.pipeline_mode<synchronous>, transform_indices = @transform_4, window_bounds = array<i64: 128, 128>}, {pipeline_mode = #tpu.pipeline_mode<synchronous>, transform_indices = @transform_5, window_bounds = array<i64: 128, 128>}, {transform_indices = @transform_6, window_bounds = array<i64: 16, 128>}, {transform_indices = @transform_7, window_bounds = array<i64: 16, 128>}, {transform_indices = @transform_8, window_bounds = array<i64: 16, 128>}]} {
    %c0 = arith.constant 0 : index
    %c0_0 = arith.constant 0 : index
    %0 = vector.load %arg1[%c0, %c0_0] : memref<16x128xf32, #tpu.memory_space<vmem>>, vector<16x128xf32>
    %cst = arith.constant dense<0.000000e+00> : vector<16xf32>
    %1 = vector.multi_reduction <add>, %0, %cst [1] : vector<16x128xf32> to vector<16xf32>
    %2 = vector.shape_cast %1 : vector<16xf32> to vector<16x1xf32>
    %cst_1 = arith.constant 1.280000e+02 : f32
    %3 = vector.broadcast %cst_1 : f32 to vector<16x1xf32>
    %4 = arith.divf %2, %3 : vector<16x1xf32>
    %5 = vector.broadcast %4 : vector<16x1xf32> to vector<16x128xf32>
    %6 = arith.subf %0, %5 : vector<16x128xf32>
    %7 = arith.mulf %6, %6 : vector<16x128xf32>
    %cst_2 = arith.constant dense<0.000000e+00> : vector<16xf32>
    %8 = vector.multi_reduction <add>, %7, %cst_2 [1] : vector<16x128xf32> to vector<16xf32>
    %9 = vector.shape_cast %8 : vector<16xf32> to vector<16x1xf32>
    %cst_3 = arith.constant 1.280000e+02 : f32
    %10 = vector.broadcast %cst_3 : f32 to vector<16x1xf32>
    %11 = arith.divf %9, %10 : vector<16x1xf32>
    %12 = vector.broadcast %4 : vector<16x1xf32> to vector<16x128xf32>
    %13 = arith.subf %0, %12 : vector<16x128xf32>
    %cst_4 = arith.constant 9.99999997E-7 : f32
    %14 = vector.broadcast %cst_4 : f32 to vector<16x1xf32>
    %15 = arith.addf %11, %14 : vector<16x1xf32>
    %16 = math.rsqrt %15 : vector<16x1xf32>
    %17 = vector.broadcast %16 : vector<16x1xf32> to vector<16x128xf32>
    %18 = arith.mulf %13, %17 : vector<16x128xf32>
    %c0_5 = arith.constant 0 : index
    %c0_6 = arith.constant 0 : index
    %19 = vector.load %arg2[%c0_5, %c0_6] : memref<1x128xf32, #tpu.memory_space<vmem>>, vector<1x128xf32>
    %20 = vector.broadcast %19 : vector<1x128xf32> to vector<16x128xf32>
    %21 = arith.mulf %18, %20 : vector<16x128xf32>
    %c0_7 = arith.constant 0 : index
    %c0_8 = arith.constant 0 : index
    %22 = vector.load %arg3[%c0_7, %c0_8] : memref<1x128xf32, #tpu.memory_space<vmem>>, vector<1x128xf32>
    %23 = vector.broadcast %22 : vector<1x128xf32> to vector<16x128xf32>
    %24 = arith.addf %21, %23 : vector<16x128xf32>
    %25 = arith.truncf %24 : vector<16x128xf32> to vector<16x128xbf16>
    %c0_9 = arith.constant 0 : index
    %c0_10 = arith.constant 0 : index
    %26 = vector.load %arg4[%c0_9, %c0_10] : memref<128x128xbf16, #tpu.memory_space<vmem>>, vector<128x128xbf16>
    %cst_11 = arith.constant dense<0.000000e+00> : vector<16x128xf32>
    %27 = tpu.matmul %25, %26, %cst_11 {dimension_numbers = #tpu.dot_dimension_numbers<[1], [0], [0], [1], [0, 0, 1, 1], [], []>} : vector<16x128xbf16>, vector<128x128xbf16>, vector<16x128xf32> -> vector<16x128xf32>
    %28 = arith.truncf %27 : vector<16x128xf32> to vector<16x128xbf16>
    %c0_12 = arith.constant 0 : index
    %c0_13 = arith.constant 0 : index
    %29 = vector.load %arg7[%c0_12, %c0_13] : memref<16x128xbf16, #tpu.memory_space<vmem>>, vector<16x128xbf16>
    tpu.vector_store %arg7[%c0_12, %c0_13], %28 {strides = array<i32>} : memref<16x128xbf16, #tpu.memory_space<vmem>>, vector<16x128xbf16>,
    %c0_14 = arith.constant 0 : index
    %c0_15 = arith.constant 0 : index
    %30 = vector.load %arg5[%c0_14, %c0_15] : memref<128x128xbf16, #tpu.memory_space<vmem>>, vector<128x128xbf16>
    %cst_16 = arith.constant dense<0.000000e+00> : vector<16x128xf32>
    %31 = tpu.matmul %25, %30, %cst_16 {dimension_numbers = #tpu.dot_dimension_numbers<[1], [0], [0], [1], [0, 0, 1, 1], [], []>} : vector<16x128xbf16>, vector<128x128xbf16>, vector<16x128xf32> -> vector<16x128xf32>
    %32 = arith.truncf %31 : vector<16x128xf32> to vector<16x128xbf16>
    %c0_17 = arith.constant 0 : index
    %c0_18 = arith.constant 0 : index
    %33 = vector.load %arg8[%c0_17, %c0_18] : memref<16x128xbf16, #tpu.memory_space<vmem>>, vector<16x128xbf16>
    tpu.vector_store %arg8[%c0_17, %c0_18], %32 {strides = array<i32>} : memref<16x128xbf16, #tpu.memory_space<vmem>>, vector<16x128xbf16>,
    %c0_19 = arith.constant 0 : index
    %c0_20 = arith.constant 0 : index
    %34 = vector.load %arg6[%c0_19, %c0_20] : memref<128x128xbf16, #tpu.memory_space<vmem>>, vector<128x128xbf16>
    %cst_21 = arith.constant dense<0.000000e+00> : vector<16x128xf32>
    %35 = tpu.matmul %25, %34, %cst_21 {dimension_numbers = #tpu.dot_dimension_numbers<[1], [0], [0], [1], [0, 0, 1, 1], [], []>} : vector<16x128xbf16>, vector<128x128xbf16>, vector<16x128xf32> -> vector<16x128xf32>
    %36 = arith.truncf %35 : vector<16x128xf32> to vector<16x128xbf16>
    %c0_22 = arith.constant 0 : index
    %c0_23 = arith.constant 0 : index
    %37 = vector.load %arg9[%c0_22, %c0_23] : memref<16x128xbf16, #tpu.memory_space<vmem>>, vector<16x128xbf16>
    tpu.vector_store %arg9[%c0_22, %c0_23], %36 {strides = array<i32>} : memref<16x128xbf16, #tpu.memory_space<vmem>>, vector<16x128xbf16>,
    return
  }
  func.func @transform_0(%arg0: i32) -> (i32, i32) {
    %c0_i32 = arith.constant 0 : i32
    %c0_i32_0 = arith.constant 0 : i32
    return %arg0, %c0_i32 : i32, i32
  }
  func.func @transform_1(%arg0: i32) -> (i32, i32) {
    %c0_i32 = arith.constant 0 : i32
    %c0_i32_0 = arith.constant 0 : i32
    %c0_i32_1 = arith.constant 0 : i32
    return %c0_i32, %c0_i32_0 : i32, i32
  }
  func.func @transform_2(%arg0: i32) -> (i32, i32) {
    %c0_i32 = arith.constant 0 : i32
    %c0_i32_0 = arith.constant 0 : i32
    %c0_i32_1 = arith.constant 0 : i32
    return %c0_i32, %c0_i32_0 : i32, i32
  }
  func.func @transform_3(%arg0: i32) -> (i32, i32) {
    %c0_i32 = arith.constant 0 : i32
    %c0_i32_0 = arith.constant 0 : i32
    %c0_i32_1 = arith.constant 0 : i32
    return %c0_i32, %c0_i32_0 : i32, i32
  }
  func.func @transform_4(%arg0: i32) -> (i32, i32) {
    %c0_i32 = arith.constant 0 : i32
    %c0_i32_0 = arith.constant 0 : i32
    %c0_i32_1 = arith.constant 0 : i32
    return %c0_i32, %c0_i32_0 : i32, i32
  }
  func.func @transform_5(%arg0: i32) -> (i32, i32) {
    %c0_i32 = arith.constant 0 : i32
    %c0_i32_0 = arith.constant 0 : i32
    %c0_i32_1 = arith.constant 0 : i32
    return %c0_i32, %c0_i32_0 : i32, i32
  }
  func.func @transform_6(%arg0: i32) -> (i32, i32) {
    %c0_i32 = arith.constant 0 : i32
    %c0_i32_0 = arith.constant 0 : i32
    return %arg0, %c0_i32 : i32, i32
  }
  func.func @transform_7(%arg0: i32) -> (i32, i32) {
    %c0_i32 = arith.constant 0 : i32
    %c0_i32_0 = arith.constant 0 : i32
    return %arg0, %c0_i32 : i32, i32
  }
  func.func @transform_8(%arg0: i32) -> (i32, i32) {
    %c0_i32 = arith.constant 0 : i32
    %c0_i32_0 = arith.constant 0 : i32
    return %arg0, %c0_i32 : i32, i32
  }
}

module attributes {stable_mosaic.version = 11 : i64} {
  func.func @_attention_kernel(%arg0: i32, %arg1: i32, %arg2: memref<1x16x128xbf16, #tpu.memory_space<vmem>>, %arg3: memref<1x16x128xbf16, #tpu.memory_space<vmem>>, %arg4: memref<1x16x128xbf16, #tpu.memory_space<vmem>>, %arg5: memref<128x128xbf16, #tpu.memory_space<vmem>>, %arg6: memref<1x16x128xf32, #tpu.memory_space<vmem>>, %arg7: memref<1x16x128xf32, #tpu.memory_space<vmem>>) attributes {dimension_semantics = [#tpu.dimension_semantics<parallel>, #tpu.dimension_semantics<parallel>], iteration_bounds = array<i64: 2, 1>, scalar_prefetch = 0 : i64, scratch_operands = 0 : i64, tpu.core_type = #tpu.core_type<tc>, window_params = [{transform_indices = @transform_0, window_bounds = array<i64: 1, 16, 128>}, {transform_indices = @transform_1, window_bounds = array<i64: 1, 16, 128>}, {transform_indices = @transform_2, window_bounds = array<i64: 1, 16, 128>}, {pipeline_mode = #tpu.pipeline_mode<synchronous>, transform_indices = @transform_3, window_bounds = array<i64: 128, 128>}, {transform_indices = @transform_4, window_bounds = array<i64: 1, 16, 128>}, {transform_indices = @transform_5, window_bounds = array<i64: 1, 16, 128>}]} {
    %c0 = arith.constant 0 : index
    %c0_0 = arith.constant 0 : index
    %c0_1 = arith.constant 0 : index
    %0 = vector.load %arg2[%c0, %c0_0, %c0_1] : memref<1x16x128xbf16, #tpu.memory_space<vmem>>, vector<1x16x128xbf16>
    %1 = vector.shape_cast %0 : vector<1x16x128xbf16> to vector<16x128xbf16>
    %c0_2 = arith.constant 0 : index
    %c0_3 = arith.constant 0 : index
    %c0_4 = arith.constant 0 : index
    %2 = vector.load %arg3[%c0_2, %c0_3, %c0_4] : memref<1x16x128xbf16, #tpu.memory_space<vmem>>, vector<1x16x128xbf16>
    %3 = vector.shape_cast %2 : vector<1x16x128xbf16> to vector<16x128xbf16>
    %c0_5 = arith.constant 0 : index
    %c0_6 = arith.constant 0 : index
    %c0_7 = arith.constant 0 : index
    %4 = vector.load %arg4[%c0_5, %c0_6, %c0_7] : memref<1x16x128xbf16, #tpu.memory_space<vmem>>, vector<1x16x128xbf16>
    %5 = vector.shape_cast %4 : vector<1x16x128xbf16> to vector<16x128xbf16>
    %cst = arith.constant 1.767580e-01 : bf16
    %6 = vector.broadcast %cst : bf16 to vector<16x128xbf16>
    %7 = arith.mulf %1, %6 : vector<16x128xbf16>
    %8 = vector.extract_strided_slice %7 {offsets = [0, 0], sizes = [16, 32], strides = [1, 1]} : vector<16x128xbf16> to vector<16x32xbf16>
    %9 = vector.extract_strided_slice %3 {offsets = [0, 0], sizes = [16, 32], strides = [1, 1]} : vector<16x128xbf16> to vector<16x32xbf16>
    %10 = vector.extract_strided_slice %5 {offsets = [0, 0], sizes = [16, 32], strides = [1, 1]} : vector<16x128xbf16> to vector<16x32xbf16>
    %cst_8 = arith.constant dense<0.000000e+00> : vector<16x16xf32>
    %11 = tpu.matmul %8, %9, %cst_8 {dimension_numbers = #tpu.dot_dimension_numbers<[1], [1], [0], [0], [0, 0, 1, 0], [], []>} : vector<16x32xbf16>, vector<16x32xbf16>, vector<16x16xf32> -> vector<16x16xf32>
    %cst_9 = arith.constant dense<0xFF800000> : vector<16xf32>
    %12 = vector.multi_reduction <maximumf>, %11, %cst_9 [1] : vector<16x16xf32> to vector<16xf32>
    %13 = vector.shape_cast %12 : vector<16xf32> to vector<16x1xf32>
    %14 = vector.broadcast %13 : vector<16x1xf32> to vector<16x16xf32>
    %15 = arith.subf %11, %14 : vector<16x16xf32>
    %16 = math.exp %15 : vector<16x16xf32>
    %cst_10 = arith.constant dense<0.000000e+00> : vector<16xf32>
    %17 = vector.multi_reduction <add>, %16, %cst_10 [1] : vector<16x16xf32> to vector<16xf32>
    %18 = vector.shape_cast %17 : vector<16xf32> to vector<16x1xf32>
    %19 = arith.truncf %16 : vector<16x16xf32> to vector<16x16xbf16>
    %cst_11 = arith.constant dense<0.000000e+00> : vector<16x32xf32>
    %20 = tpu.matmul %19, %10, %cst_11 {dimension_numbers = #tpu.dot_dimension_numbers<[1], [0], [0], [1], [0, 0, 1, 1], [], []>} : vector<16x16xbf16>, vector<16x32xbf16>, vector<16x32xf32> -> vector<16x32xf32>
    %21 = tpu.reciprocal %18 {approx = true} : vector<16x1xf32> -> vector<16x1xf32>
    %22 = vector.broadcast %21 : vector<16x1xf32> to vector<16x32xf32>
    %23 = arith.mulf %20, %22 : vector<16x32xf32>
    %24 = vector.extract_strided_slice %7 {offsets = [0, 32], sizes = [16, 32], strides = [1, 1]} : vector<16x128xbf16> to vector<16x32xbf16>
    %25 = vector.extract_strided_slice %3 {offsets = [0, 32], sizes = [16, 32], strides = [1, 1]} : vector<16x128xbf16> to vector<16x32xbf16>
    %26 = vector.extract_strided_slice %5 {offsets = [0, 32], sizes = [16, 32], strides = [1, 1]} : vector<16x128xbf16> to vector<16x32xbf16>
    %cst_12 = arith.constant dense<0.000000e+00> : vector<16x16xf32>
    %27 = tpu.matmul %24, %25, %cst_12 {dimension_numbers = #tpu.dot_dimension_numbers<[1], [1], [0], [0], [0, 0, 1, 0], [], []>} : vector<16x32xbf16>, vector<16x32xbf16>, vector<16x16xf32> -> vector<16x16xf32>
    %cst_13 = arith.constant dense<0xFF800000> : vector<16xf32>
    %28 = vector.multi_reduction <maximumf>, %27, %cst_13 [1] : vector<16x16xf32> to vector<16xf32>
    %29 = vector.shape_cast %28 : vector<16xf32> to vector<16x1xf32>
    %30 = vector.broadcast %29 : vector<16x1xf32> to vector<16x16xf32>
    %31 = arith.subf %27, %30 : vector<16x16xf32>
    %32 = math.exp %31 : vector<16x16xf32>
    %cst_14 = arith.constant dense<0.000000e+00> : vector<16xf32>
    %33 = vector.multi_reduction <add>, %32, %cst_14 [1] : vector<16x16xf32> to vector<16xf32>
    %34 = vector.shape_cast %33 : vector<16xf32> to vector<16x1xf32>
    %35 = arith.truncf %32 : vector<16x16xf32> to vector<16x16xbf16>
    %cst_15 = arith.constant dense<0.000000e+00> : vector<16x32xf32>
    %36 = tpu.matmul %35, %26, %cst_15 {dimension_numbers = #tpu.dot_dimension_numbers<[1], [0], [0], [1], [0, 0, 1, 1], [], []>} : vector<16x16xbf16>, vector<16x32xbf16>, vector<16x32xf32> -> vector<16x32xf32>
    %37 = tpu.reciprocal %34 {approx = true} : vector<16x1xf32> -> vector<16x1xf32>
    %38 = vector.broadcast %37 : vector<16x1xf32> to vector<16x32xf32>
    %39 = arith.mulf %36, %38 : vector<16x32xf32>
    %40 = vector.extract_strided_slice %7 {offsets = [0, 64], sizes = [16, 32], strides = [1, 1]} : vector<16x128xbf16> to vector<16x32xbf16>
    %41 = vector.extract_strided_slice %3 {offsets = [0, 64], sizes = [16, 32], strides = [1, 1]} : vector<16x128xbf16> to vector<16x32xbf16>
    %42 = vector.extract_strided_slice %5 {offsets = [0, 64], sizes = [16, 32], strides = [1, 1]} : vector<16x128xbf16> to vector<16x32xbf16>
    %cst_16 = arith.constant dense<0.000000e+00> : vector<16x16xf32>
    %43 = tpu.matmul %40, %41, %cst_16 {dimension_numbers = #tpu.dot_dimension_numbers<[1], [1], [0], [0], [0, 0, 1, 0], [], []>} : vector<16x32xbf16>, vector<16x32xbf16>, vector<16x16xf32> -> vector<16x16xf32>
    %cst_17 = arith.constant dense<0xFF800000> : vector<16xf32>
    %44 = vector.multi_reduction <maximumf>, %43, %cst_17 [1] : vector<16x16xf32> to vector<16xf32>
    %45 = vector.shape_cast %44 : vector<16xf32> to vector<16x1xf32>
    %46 = vector.broadcast %45 : vector<16x1xf32> to vector<16x16xf32>
    %47 = arith.subf %43, %46 : vector<16x16xf32>
    %48 = math.exp %47 : vector<16x16xf32>
    %cst_18 = arith.constant dense<0.000000e+00> : vector<16xf32>
    %49 = vector.multi_reduction <add>, %48, %cst_18 [1] : vector<16x16xf32> to vector<16xf32>
    %50 = vector.shape_cast %49 : vector<16xf32> to vector<16x1xf32>
    %51 = arith.truncf %48 : vector<16x16xf32> to vector<16x16xbf16>
    %cst_19 = arith.constant dense<0.000000e+00> : vector<16x32xf32>
    %52 = tpu.matmul %51, %42, %cst_19 {dimension_numbers = #tpu.dot_dimension_numbers<[1], [0], [0], [1], [0, 0, 1, 1], [], []>} : vector<16x16xbf16>, vector<16x32xbf16>, vector<16x32xf32> -> vector<16x32xf32>
    %53 = tpu.reciprocal %50 {approx = true} : vector<16x1xf32> -> vector<16x1xf32>
    %54 = vector.broadcast %53 : vector<16x1xf32> to vector<16x32xf32>
    %55 = arith.mulf %52, %54 : vector<16x32xf32>
    %56 = vector.extract_strided_slice %7 {offsets = [0, 96], sizes = [16, 32], strides = [1, 1]} : vector<16x128xbf16> to vector<16x32xbf16>
    %57 = vector.extract_strided_slice %3 {offsets = [0, 96], sizes = [16, 32], strides = [1, 1]} : vector<16x128xbf16> to vector<16x32xbf16>
    %58 = vector.extract_strided_slice %5 {offsets = [0, 96], sizes = [16, 32], strides = [1, 1]} : vector<16x128xbf16> to vector<16x32xbf16>
    %cst_20 = arith.constant dense<0.000000e+00> : vector<16x16xf32>
    %59 = tpu.matmul %56, %57, %cst_20 {dimension_numbers = #tpu.dot_dimension_numbers<[1], [1], [0], [0], [0, 0, 1, 0], [], []>} : vector<16x32xbf16>, vector<16x32xbf16>, vector<16x16xf32> -> vector<16x16xf32>
    %cst_21 = arith.constant dense<0xFF800000> : vector<16xf32>
    %60 = vector.multi_reduction <maximumf>, %59, %cst_21 [1] : vector<16x16xf32> to vector<16xf32>
    %61 = vector.shape_cast %60 : vector<16xf32> to vector<16x1xf32>
    %62 = vector.broadcast %61 : vector<16x1xf32> to vector<16x16xf32>
    %63 = arith.subf %59, %62 : vector<16x16xf32>
    %64 = math.exp %63 : vector<16x16xf32>
    %cst_22 = arith.constant dense<0.000000e+00> : vector<16xf32>
    %65 = vector.multi_reduction <add>, %64, %cst_22 [1] : vector<16x16xf32> to vector<16xf32>
    %66 = vector.shape_cast %65 : vector<16xf32> to vector<16x1xf32>
    %67 = arith.truncf %64 : vector<16x16xf32> to vector<16x16xbf16>
    %cst_23 = arith.constant dense<0.000000e+00> : vector<16x32xf32>
    %68 = tpu.matmul %67, %58, %cst_23 {dimension_numbers = #tpu.dot_dimension_numbers<[1], [0], [0], [1], [0, 0, 1, 1], [], []>} : vector<16x16xbf16>, vector<16x32xbf16>, vector<16x32xf32> -> vector<16x32xf32>
    %69 = tpu.reciprocal %66 {approx = true} : vector<16x1xf32> -> vector<16x1xf32>
    %70 = vector.broadcast %69 : vector<16x1xf32> to vector<16x32xf32>
    %71 = arith.mulf %68, %70 : vector<16x32xf32>
    %72 = tpu.concatenate %23, %39, %55, %71 in 1 : vector<16x32xf32>, vector<16x32xf32>, vector<16x32xf32>, vector<16x32xf32> -> vector<16x128xf32>
    %c0_24 = arith.constant 0 : index
    %c0_25 = arith.constant 0 : index
    %c0_26 = arith.constant 0 : index
    %73 = vector.load %arg6[%c0_24, %c0_25, %c0_26] : memref<1x16x128xf32, #tpu.memory_space<vmem>>, vector<1x16x128xf32>
    %74 = vector.shape_cast %73 : vector<1x16x128xf32> to vector<16x128xf32>
    %75 = arith.truncf %72 : vector<16x128xf32> to vector<16x128xbf16>
    %c0_27 = arith.constant 0 : index
    %c0_28 = arith.constant 0 : index
    %76 = vector.load %arg5[%c0_27, %c0_28] : memref<128x128xbf16, #tpu.memory_space<vmem>>, vector<128x128xbf16>
    %cst_29 = arith.constant dense<0.000000e+00> : vector<16x128xf32>
    %77 = tpu.matmul %75, %76, %cst_29 {dimension_numbers = #tpu.dot_dimension_numbers<[1], [0], [0], [1], [0, 0, 1, 1], [], []>} : vector<16x128xbf16>, vector<128x128xbf16>, vector<16x128xf32> -> vector<16x128xf32>
    %78 = arith.addf %74, %77 : vector<16x128xf32>
    %c0_30 = arith.constant 0 : index
    %c0_31 = arith.constant 0 : index
    %c0_32 = arith.constant 0 : index
    %79 = vector.load %arg7[%c0_30, %c0_31, %c0_32] : memref<1x16x128xf32, #tpu.memory_space<vmem>>, vector<1x16x128xf32>
    %80 = vector.shape_cast %79 : vector<1x16x128xf32> to vector<16x128xf32>
    %81 = vector.shape_cast %78 : vector<16x128xf32> to vector<1x16x128xf32>
    tpu.vector_store %arg7[%c0_30, %c0_31, %c0_32], %81 {strides = array<i32>} : memref<1x16x128xf32, #tpu.memory_space<vmem>>, vector<1x16x128xf32>,
    return
  }
  func.func @transform_0(%arg0: i32, %arg1: i32) -> (i32, i32, i32) {
    %c0_i32 = arith.constant 0 : i32
    %c0_i32_0 = arith.constant 0 : i32
    return %arg0, %arg1, %c0_i32 : i32, i32, i32
  }
  func.func @transform_1(%arg0: i32, %arg1: i32) -> (i32, i32, i32) {
    %c0_i32 = arith.constant 0 : i32
    %c0_i32_0 = arith.constant 0 : i32
    %c0_i32_1 = arith.constant 0 : i32
    return %arg0, %c0_i32, %c0_i32_0 : i32, i32, i32
  }
  func.func @transform_2(%arg0: i32, %arg1: i32) -> (i32, i32, i32) {
    %c0_i32 = arith.constant 0 : i32
    %c0_i32_0 = arith.constant 0 : i32
    %c0_i32_1 = arith.constant 0 : i32
    return %arg0, %c0_i32, %c0_i32_0 : i32, i32, i32
  }
  func.func @transform_3(%arg0: i32, %arg1: i32) -> (i32, i32) {
    %c0_i32 = arith.constant 0 : i32
    %c0_i32_0 = arith.constant 0 : i32
    %c0_i32_1 = arith.constant 0 : i32
    return %c0_i32, %c0_i32_0 : i32, i32
  }
  func.func @transform_4(%arg0: i32, %arg1: i32) -> (i32, i32, i32) {
    %c0_i32 = arith.constant 0 : i32
    %c0_i32_0 = arith.constant 0 : i32
    return %arg0, %arg1, %c0_i32 : i32, i32, i32
  }
  func.func @transform_5(%arg0: i32, %arg1: i32) -> (i32, i32, i32) {
    %c0_i32 = arith.constant 0 : i32
    %c0_i32_0 = arith.constant 0 : i32
    return %arg0, %arg1, %c0_i32 : i32, i32, i32
  }
}

module attributes {stable_mosaic.version = 11 : i64} {
  func.func @_ln_ffn_single_kernel(%arg0: i32, %arg1: memref<16x128xf32, #tpu.memory_space<vmem>>, %arg2: memref<1x128xf32, #tpu.memory_space<vmem>>, %arg3: memref<1x128xf32, #tpu.memory_space<vmem>>, %arg4: memref<128x256xbf16, #tpu.memory_space<vmem>>, %arg5: memref<1x256xf32, #tpu.memory_space<vmem>>, %arg6: memref<256x128xbf16, #tpu.memory_space<vmem>>, %arg7: memref<1x128xf32, #tpu.memory_space<vmem>>, %arg8: memref<16x128xf32, #tpu.memory_space<vmem>>) attributes {dimension_semantics = [#tpu.dimension_semantics<parallel>], iteration_bounds = array<i64: 2>, scalar_prefetch = 0 : i64, scratch_operands = 0 : i64, tpu.core_type = #tpu.core_type<tc>, window_params = [{transform_indices = @transform_0, window_bounds = array<i64: 16, 128>}, {pipeline_mode = #tpu.pipeline_mode<synchronous>, transform_indices = @transform_1, window_bounds = array<i64: 1, 128>}, {pipeline_mode = #tpu.pipeline_mode<synchronous>, transform_indices = @transform_2, window_bounds = array<i64: 1, 128>}, {pipeline_mode = #tpu.pipeline_mode<synchronous>, transform_indices = @transform_3, window_bounds = array<i64: 128, 256>}, {pipeline_mode = #tpu.pipeline_mode<synchronous>, transform_indices = @transform_4, window_bounds = array<i64: 1, 256>}, {pipeline_mode = #tpu.pipeline_mode<synchronous>, transform_indices = @transform_5, window_bounds = array<i64: 256, 128>}, {pipeline_mode = #tpu.pipeline_mode<synchronous>, transform_indices = @transform_6, window_bounds = array<i64: 1, 128>}, {transform_indices = @transform_7, window_bounds = array<i64: 16, 128>}]} {
    %c0 = arith.constant 0 : index
    %c0_0 = arith.constant 0 : index
    %0 = vector.load %arg1[%c0, %c0_0] : memref<16x128xf32, #tpu.memory_space<vmem>>, vector<16x128xf32>
    %cst = arith.constant dense<0.000000e+00> : vector<16xf32>
    %1 = vector.multi_reduction <add>, %0, %cst [1] : vector<16x128xf32> to vector<16xf32>
    %2 = vector.shape_cast %1 : vector<16xf32> to vector<16x1xf32>
    %cst_1 = arith.constant 1.280000e+02 : f32
    %3 = vector.broadcast %cst_1 : f32 to vector<16x1xf32>
    %4 = arith.divf %2, %3 : vector<16x1xf32>
    %5 = vector.broadcast %4 : vector<16x1xf32> to vector<16x128xf32>
    %6 = arith.subf %0, %5 : vector<16x128xf32>
    %7 = arith.mulf %6, %6 : vector<16x128xf32>
    %cst_2 = arith.constant dense<0.000000e+00> : vector<16xf32>
    %8 = vector.multi_reduction <add>, %7, %cst_2 [1] : vector<16x128xf32> to vector<16xf32>
    %9 = vector.shape_cast %8 : vector<16xf32> to vector<16x1xf32>
    %cst_3 = arith.constant 1.280000e+02 : f32
    %10 = vector.broadcast %cst_3 : f32 to vector<16x1xf32>
    %11 = arith.divf %9, %10 : vector<16x1xf32>
    %12 = vector.broadcast %4 : vector<16x1xf32> to vector<16x128xf32>
    %13 = arith.subf %0, %12 : vector<16x128xf32>
    %cst_4 = arith.constant 9.99999997E-7 : f32
    %14 = vector.broadcast %cst_4 : f32 to vector<16x1xf32>
    %15 = arith.addf %11, %14 : vector<16x1xf32>
    %16 = math.rsqrt %15 : vector<16x1xf32>
    %17 = vector.broadcast %16 : vector<16x1xf32> to vector<16x128xf32>
    %18 = arith.mulf %13, %17 : vector<16x128xf32>
    %c0_5 = arith.constant 0 : index
    %c0_6 = arith.constant 0 : index
    %19 = vector.load %arg2[%c0_5, %c0_6] : memref<1x128xf32, #tpu.memory_space<vmem>>, vector<1x128xf32>
    %20 = vector.broadcast %19 : vector<1x128xf32> to vector<16x128xf32>
    %21 = arith.mulf %18, %20 : vector<16x128xf32>
    %c0_7 = arith.constant 0 : index
    %c0_8 = arith.constant 0 : index
    %22 = vector.load %arg3[%c0_7, %c0_8] : memref<1x128xf32, #tpu.memory_space<vmem>>, vector<1x128xf32>
    %23 = vector.broadcast %22 : vector<1x128xf32> to vector<16x128xf32>
    %24 = arith.addf %21, %23 : vector<16x128xf32>
    %25 = arith.truncf %24 : vector<16x128xf32> to vector<16x128xbf16>
    %c0_9 = arith.constant 0 : index
    %c0_10 = arith.constant 0 : index
    %26 = vector.load %arg4[%c0_9, %c0_10] : memref<128x256xbf16, #tpu.memory_space<vmem>>, vector<128x256xbf16>
    %cst_11 = arith.constant dense<0.000000e+00> : vector<16x256xf32>
    %27 = tpu.matmul %25, %26, %cst_11 {dimension_numbers = #tpu.dot_dimension_numbers<[1], [0], [0], [1], [0, 0, 1, 1], [], []>} : vector<16x128xbf16>, vector<128x256xbf16>, vector<16x256xf32> -> vector<16x256xf32>
    %c0_12 = arith.constant 0 : index
    %c0_13 = arith.constant 0 : index
    %28 = vector.load %arg5[%c0_12, %c0_13] : memref<1x256xf32, #tpu.memory_space<vmem>>, vector<1x256xf32>
    %29 = vector.broadcast %28 : vector<1x256xf32> to vector<16x256xf32>
    %30 = arith.addf %27, %29 : vector<16x256xf32>
    %cst_14 = arith.constant 0.000000e+00 : f32
    %31 = vector.broadcast %cst_14 : f32 to vector<16x256xf32>
    %32 = arith.maximumf %30, %31 : vector<16x256xf32>
    %33 = arith.truncf %32 : vector<16x256xf32> to vector<16x256xbf16>
    %c0_15 = arith.constant 0 : index
    %c0_16 = arith.constant 0 : index
    %34 = vector.load %arg6[%c0_15, %c0_16] : memref<256x128xbf16, #tpu.memory_space<vmem>>, vector<256x128xbf16>
    %cst_17 = arith.constant dense<0.000000e+00> : vector<16x128xf32>
    %35 = tpu.matmul %33, %34, %cst_17 {dimension_numbers = #tpu.dot_dimension_numbers<[1], [0], [0], [1], [0, 0, 1, 1], [], []>} : vector<16x256xbf16>, vector<256x128xbf16>, vector<16x128xf32> -> vector<16x128xf32>
    %c0_18 = arith.constant 0 : index
    %c0_19 = arith.constant 0 : index
    %36 = vector.load %arg7[%c0_18, %c0_19] : memref<1x128xf32, #tpu.memory_space<vmem>>, vector<1x128xf32>
    %37 = vector.broadcast %36 : vector<1x128xf32> to vector<16x128xf32>
    %38 = arith.addf %35, %37 : vector<16x128xf32>
    %39 = arith.addf %38, %0 : vector<16x128xf32>
    %c0_20 = arith.constant 0 : index
    %c0_21 = arith.constant 0 : index
    %40 = vector.load %arg8[%c0_20, %c0_21] : memref<16x128xf32, #tpu.memory_space<vmem>>, vector<16x128xf32>
    tpu.vector_store %arg8[%c0_20, %c0_21], %39 {strides = array<i32>} : memref<16x128xf32, #tpu.memory_space<vmem>>, vector<16x128xf32>,
    return
  }
  func.func @transform_0(%arg0: i32) -> (i32, i32) {
    %c0_i32 = arith.constant 0 : i32
    %c0_i32_0 = arith.constant 0 : i32
    return %arg0, %c0_i32 : i32, i32
  }
  func.func @transform_1(%arg0: i32) -> (i32, i32) {
    %c0_i32 = arith.constant 0 : i32
    %c0_i32_0 = arith.constant 0 : i32
    %c0_i32_1 = arith.constant 0 : i32
    return %c0_i32, %c0_i32_0 : i32, i32
  }
  func.func @transform_2(%arg0: i32) -> (i32, i32) {
    %c0_i32 = arith.constant 0 : i32
    %c0_i32_0 = arith.constant 0 : i32
    %c0_i32_1 = arith.constant 0 : i32
    return %c0_i32, %c0_i32_0 : i32, i32
  }
  func.func @transform_3(%arg0: i32) -> (i32, i32) {
    %c0_i32 = arith.constant 0 : i32
    %c0_i32_0 = arith.constant 0 : i32
    %c0_i32_1 = arith.constant 0 : i32
    return %c0_i32, %c0_i32_0 : i32, i32
  }
  func.func @transform_4(%arg0: i32) -> (i32, i32) {
    %c0_i32 = arith.constant 0 : i32
    %c0_i32_0 = arith.constant 0 : i32
    %c0_i32_1 = arith.constant 0 : i32
    return %c0_i32, %c0_i32_0 : i32, i32
  }
  func.func @transform_5(%arg0: i32) -> (i32, i32) {
    %c0_i32 = arith.constant 0 : i32
    %c0_i32_0 = arith.constant 0 : i32
    %c0_i32_1 = arith.constant 0 : i32
    return %c0_i32, %c0_i32_0 : i32, i32
  }
  func.func @transform_6(%arg0: i32) -> (i32, i32) {
    %c0_i32 = arith.constant 0 : i32
    %c0_i32_0 = arith.constant 0 : i32
    %c0_i32_1 = arith.constant 0 : i32
    return %c0_i32, %c0_i32_0 : i32, i32
  }
  func.func @transform_7(%arg0: i32) -> (i32, i32) {
    %c0_i32 = arith.constant 0 : i32
    %c0_i32_0 = arith.constant 0 : i32
    return %arg0, %c0_i32 : i32, i32
  }
}

module attributes {stable_mosaic.version = 11 : i64} {
  func.func @_proj_kernel(%arg0: i32, %arg1: memref<16x128xf32, #tpu.memory_space<vmem>>, %arg2: memref<128x128xbf16, #tpu.memory_space<vmem>>, %arg3: memref<128x128xbf16, #tpu.memory_space<vmem>>, %arg4: memref<16x128xbf16, #tpu.memory_space<vmem>>, %arg5: memref<16x128xbf16, #tpu.memory_space<vmem>>) attributes {dimension_semantics = [#tpu.dimension_semantics<parallel>], iteration_bounds = array<i64: 2>, scalar_prefetch = 0 : i64, scratch_operands = 0 : i64, tpu.core_type = #tpu.core_type<tc>, window_params = [{transform_indices = @transform_0, window_bounds = array<i64: 16, 128>}, {pipeline_mode = #tpu.pipeline_mode<synchronous>, transform_indices = @transform_1, window_bounds = array<i64: 128, 128>}, {pipeline_mode = #tpu.pipeline_mode<synchronous>, transform_indices = @transform_2, window_bounds = array<i64: 128, 128>}, {transform_indices = @transform_3, window_bounds = array<i64: 16, 128>}, {transform_indices = @transform_4, window_bounds = array<i64: 16, 128>}]} {
    %c0 = arith.constant 0 : index
    %c0_0 = arith.constant 0 : index
    %0 = vector.load %arg1[%c0, %c0_0] : memref<16x128xf32, #tpu.memory_space<vmem>>, vector<16x128xf32>
    %1 = arith.truncf %0 : vector<16x128xf32> to vector<16x128xbf16>
    %c0_1 = arith.constant 0 : index
    %c0_2 = arith.constant 0 : index
    %2 = vector.load %arg2[%c0_1, %c0_2] : memref<128x128xbf16, #tpu.memory_space<vmem>>, vector<128x128xbf16>
    %cst = arith.constant dense<0.000000e+00> : vector<16x128xf32>
    %3 = tpu.matmul %1, %2, %cst {dimension_numbers = #tpu.dot_dimension_numbers<[1], [0], [0], [1], [0, 0, 1, 1], [], []>} : vector<16x128xbf16>, vector<128x128xbf16>, vector<16x128xf32> -> vector<16x128xf32>
    %4 = arith.truncf %3 : vector<16x128xf32> to vector<16x128xbf16>
    %c0_3 = arith.constant 0 : index
    %c0_4 = arith.constant 0 : index
    %5 = vector.load %arg4[%c0_3, %c0_4] : memref<16x128xbf16, #tpu.memory_space<vmem>>, vector<16x128xbf16>
    tpu.vector_store %arg4[%c0_3, %c0_4], %4 {strides = array<i32>} : memref<16x128xbf16, #tpu.memory_space<vmem>>, vector<16x128xbf16>,
    %c0_5 = arith.constant 0 : index
    %c0_6 = arith.constant 0 : index
    %6 = vector.load %arg3[%c0_5, %c0_6] : memref<128x128xbf16, #tpu.memory_space<vmem>>, vector<128x128xbf16>
    %cst_7 = arith.constant dense<0.000000e+00> : vector<16x128xf32>
    %7 = tpu.matmul %1, %6, %cst_7 {dimension_numbers = #tpu.dot_dimension_numbers<[1], [0], [0], [1], [0, 0, 1, 1], [], []>} : vector<16x128xbf16>, vector<128x128xbf16>, vector<16x128xf32> -> vector<16x128xf32>
    %8 = arith.truncf %7 : vector<16x128xf32> to vector<16x128xbf16>
    %c0_8 = arith.constant 0 : index
    %c0_9 = arith.constant 0 : index
    %9 = vector.load %arg5[%c0_8, %c0_9] : memref<16x128xbf16, #tpu.memory_space<vmem>>, vector<16x128xbf16>
    tpu.vector_store %arg5[%c0_8, %c0_9], %8 {strides = array<i32>} : memref<16x128xbf16, #tpu.memory_space<vmem>>, vector<16x128xbf16>,
    return
  }
  func.func @transform_0(%arg0: i32) -> (i32, i32) {
    %c0_i32 = arith.constant 0 : i32
    %c0_i32_0 = arith.constant 0 : i32
    return %arg0, %c0_i32 : i32, i32
  }
  func.func @transform_1(%arg0: i32) -> (i32, i32) {
    %c0_i32 = arith.constant 0 : i32
    %c0_i32_0 = arith.constant 0 : i32
    %c0_i32_1 = arith.constant 0 : i32
    return %c0_i32, %c0_i32_0 : i32, i32
  }
  func.func @transform_2(%arg0: i32) -> (i32, i32) {
    %c0_i32 = arith.constant 0 : i32
    %c0_i32_0 = arith.constant 0 : i32
    %c0_i32_1 = arith.constant 0 : i32
    return %c0_i32, %c0_i32_0 : i32, i32
  }
  func.func @transform_3(%arg0: i32) -> (i32, i32) {
    %c0_i32 = arith.constant 0 : i32
    %c0_i32_0 = arith.constant 0 : i32
    return %arg0, %c0_i32 : i32, i32
  }
  func.func @transform_4(%arg0: i32) -> (i32, i32) {
    %c0_i32 = arith.constant 0 : i32
    %c0_i32_0 = arith.constant 0 : i32
    return %arg0, %c0_i32 : i32, i32
  }
}

module attributes {stable_mosaic.version = 11 : i64} {
  func.func @_proj_kernel(%arg0: i32, %arg1: memref<16x128xf32, #tpu.memory_space<vmem>>, %arg2: memref<1x128xf32, #tpu.memory_space<vmem>>, %arg3: memref<1x128xf32, #tpu.memory_space<vmem>>, %arg4: memref<128x128xbf16, #tpu.memory_space<vmem>>, %arg5: memref<16x128xbf16, #tpu.memory_space<vmem>>) attributes {dimension_semantics = [#tpu.dimension_semantics<parallel>], iteration_bounds = array<i64: 2>, scalar_prefetch = 0 : i64, scratch_operands = 0 : i64, tpu.core_type = #tpu.core_type<tc>, window_params = [{transform_indices = @transform_0, window_bounds = array<i64: 16, 128>}, {pipeline_mode = #tpu.pipeline_mode<synchronous>, transform_indices = @transform_1, window_bounds = array<i64: 1, 128>}, {pipeline_mode = #tpu.pipeline_mode<synchronous>, transform_indices = @transform_2, window_bounds = array<i64: 1, 128>}, {pipeline_mode = #tpu.pipeline_mode<synchronous>, transform_indices = @transform_3, window_bounds = array<i64: 128, 128>}, {transform_indices = @transform_4, window_bounds = array<i64: 16, 128>}]} {
    %c0 = arith.constant 0 : index
    %c0_0 = arith.constant 0 : index
    %0 = vector.load %arg1[%c0, %c0_0] : memref<16x128xf32, #tpu.memory_space<vmem>>, vector<16x128xf32>
    %cst = arith.constant dense<0.000000e+00> : vector<16xf32>
    %1 = vector.multi_reduction <add>, %0, %cst [1] : vector<16x128xf32> to vector<16xf32>
    %2 = vector.shape_cast %1 : vector<16xf32> to vector<16x1xf32>
    %cst_1 = arith.constant 1.280000e+02 : f32
    %3 = vector.broadcast %cst_1 : f32 to vector<16x1xf32>
    %4 = arith.divf %2, %3 : vector<16x1xf32>
    %5 = vector.broadcast %4 : vector<16x1xf32> to vector<16x128xf32>
    %6 = arith.subf %0, %5 : vector<16x128xf32>
    %7 = arith.mulf %6, %6 : vector<16x128xf32>
    %cst_2 = arith.constant dense<0.000000e+00> : vector<16xf32>
    %8 = vector.multi_reduction <add>, %7, %cst_2 [1] : vector<16x128xf32> to vector<16xf32>
    %9 = vector.shape_cast %8 : vector<16xf32> to vector<16x1xf32>
    %cst_3 = arith.constant 1.280000e+02 : f32
    %10 = vector.broadcast %cst_3 : f32 to vector<16x1xf32>
    %11 = arith.divf %9, %10 : vector<16x1xf32>
    %12 = vector.broadcast %4 : vector<16x1xf32> to vector<16x128xf32>
    %13 = arith.subf %0, %12 : vector<16x128xf32>
    %cst_4 = arith.constant 9.99999997E-7 : f32
    %14 = vector.broadcast %cst_4 : f32 to vector<16x1xf32>
    %15 = arith.addf %11, %14 : vector<16x1xf32>
    %16 = math.rsqrt %15 : vector<16x1xf32>
    %17 = vector.broadcast %16 : vector<16x1xf32> to vector<16x128xf32>
    %18 = arith.mulf %13, %17 : vector<16x128xf32>
    %c0_5 = arith.constant 0 : index
    %c0_6 = arith.constant 0 : index
    %19 = vector.load %arg2[%c0_5, %c0_6] : memref<1x128xf32, #tpu.memory_space<vmem>>, vector<1x128xf32>
    %20 = vector.broadcast %19 : vector<1x128xf32> to vector<16x128xf32>
    %21 = arith.mulf %18, %20 : vector<16x128xf32>
    %c0_7 = arith.constant 0 : index
    %c0_8 = arith.constant 0 : index
    %22 = vector.load %arg3[%c0_7, %c0_8] : memref<1x128xf32, #tpu.memory_space<vmem>>, vector<1x128xf32>
    %23 = vector.broadcast %22 : vector<1x128xf32> to vector<16x128xf32>
    %24 = arith.addf %21, %23 : vector<16x128xf32>
    %25 = arith.truncf %24 : vector<16x128xf32> to vector<16x128xbf16>
    %c0_9 = arith.constant 0 : index
    %c0_10 = arith.constant 0 : index
    %26 = vector.load %arg4[%c0_9, %c0_10] : memref<128x128xbf16, #tpu.memory_space<vmem>>, vector<128x128xbf16>
    %cst_11 = arith.constant dense<0.000000e+00> : vector<16x128xf32>
    %27 = tpu.matmul %25, %26, %cst_11 {dimension_numbers = #tpu.dot_dimension_numbers<[1], [0], [0], [1], [0, 0, 1, 1], [], []>} : vector<16x128xbf16>, vector<128x128xbf16>, vector<16x128xf32> -> vector<16x128xf32>
    %28 = arith.truncf %27 : vector<16x128xf32> to vector<16x128xbf16>
    %c0_12 = arith.constant 0 : index
    %c0_13 = arith.constant 0 : index
    %29 = vector.load %arg5[%c0_12, %c0_13] : memref<16x128xbf16, #tpu.memory_space<vmem>>, vector<16x128xbf16>
    tpu.vector_store %arg5[%c0_12, %c0_13], %28 {strides = array<i32>} : memref<16x128xbf16, #tpu.memory_space<vmem>>, vector<16x128xbf16>,
    return
  }
  func.func @transform_0(%arg0: i32) -> (i32, i32) {
    %c0_i32 = arith.constant 0 : i32
    %c0_i32_0 = arith.constant 0 : i32
    return %arg0, %c0_i32 : i32, i32
  }
  func.func @transform_1(%arg0: i32) -> (i32, i32) {
    %c0_i32 = arith.constant 0 : i32
    %c0_i32_0 = arith.constant 0 : i32
    %c0_i32_1 = arith.constant 0 : i32
    return %c0_i32, %c0_i32_0 : i32, i32
  }
  func.func @transform_2(%arg0: i32) -> (i32, i32) {
    %c0_i32 = arith.constant 0 : i32
    %c0_i32_0 = arith.constant 0 : i32
    %c0_i32_1 = arith.constant 0 : i32
    return %c0_i32, %c0_i32_0 : i32, i32
  }
  func.func @transform_3(%arg0: i32) -> (i32, i32) {
    %c0_i32 = arith.constant 0 : i32
    %c0_i32_0 = arith.constant 0 : i32
    %c0_i32_1 = arith.constant 0 : i32
    return %c0_i32, %c0_i32_0 : i32, i32
  }
  func.func @transform_4(%arg0: i32) -> (i32, i32) {
    %c0_i32 = arith.constant 0 : i32
    %c0_i32_0 = arith.constant 0 : i32
    return %arg0, %c0_i32 : i32, i32
  }
}

module attributes {stable_mosaic.version = 11 : i64} {
  func.func @_attention_kernel(%arg0: i32, %arg1: i32, %arg2: memref<1x16x128xbf16, #tpu.memory_space<vmem>>, %arg3: memref<1x16x128xbf16, #tpu.memory_space<vmem>>, %arg4: memref<1x16x128xbf16, #tpu.memory_space<vmem>>, %arg5: memref<128x128xbf16, #tpu.memory_space<vmem>>, %arg6: memref<1x16x128xf32, #tpu.memory_space<vmem>>, %arg7: memref<1x16x128xf32, #tpu.memory_space<vmem>>) attributes {dimension_semantics = [#tpu.dimension_semantics<parallel>, #tpu.dimension_semantics<parallel>], iteration_bounds = array<i64: 2, 1>, scalar_prefetch = 0 : i64, scratch_operands = 0 : i64, tpu.core_type = #tpu.core_type<tc>, window_params = [{transform_indices = @transform_0, window_bounds = array<i64: 1, 16, 128>}, {transform_indices = @transform_1, window_bounds = array<i64: 1, 16, 128>}, {transform_indices = @transform_2, window_bounds = array<i64: 1, 16, 128>}, {pipeline_mode = #tpu.pipeline_mode<synchronous>, transform_indices = @transform_3, window_bounds = array<i64: 128, 128>}, {transform_indices = @transform_4, window_bounds = array<i64: 1, 16, 128>}, {transform_indices = @transform_5, window_bounds = array<i64: 1, 16, 128>}]} {
    %c0 = arith.constant 0 : index
    %c0_0 = arith.constant 0 : index
    %c0_1 = arith.constant 0 : index
    %0 = vector.load %arg2[%c0, %c0_0, %c0_1] : memref<1x16x128xbf16, #tpu.memory_space<vmem>>, vector<1x16x128xbf16>
    %1 = vector.shape_cast %0 : vector<1x16x128xbf16> to vector<16x128xbf16>
    %c0_2 = arith.constant 0 : index
    %c0_3 = arith.constant 0 : index
    %c0_4 = arith.constant 0 : index
    %2 = vector.load %arg3[%c0_2, %c0_3, %c0_4] : memref<1x16x128xbf16, #tpu.memory_space<vmem>>, vector<1x16x128xbf16>
    %3 = vector.shape_cast %2 : vector<1x16x128xbf16> to vector<16x128xbf16>
    %c0_5 = arith.constant 0 : index
    %c0_6 = arith.constant 0 : index
    %c0_7 = arith.constant 0 : index
    %4 = vector.load %arg4[%c0_5, %c0_6, %c0_7] : memref<1x16x128xbf16, #tpu.memory_space<vmem>>, vector<1x16x128xbf16>
    %5 = vector.shape_cast %4 : vector<1x16x128xbf16> to vector<16x128xbf16>
    %cst = arith.constant 1.767580e-01 : bf16
    %6 = vector.broadcast %cst : bf16 to vector<16x128xbf16>
    %7 = arith.mulf %1, %6 : vector<16x128xbf16>
    %c16_i32 = arith.constant 16 : i32
    %8 = arith.muli %arg1, %c16_i32 : i32
    %9 = tpu.iota {dimensions = array<i32: 0>} : vector<16x16xi32>
    %10 = vector.broadcast %8 : i32 to vector<16x16xi32>
    %11 = arith.addi %10, %9 : vector<16x16xi32>
    %12 = tpu.iota {dimensions = array<i32: 1>} : vector<16x16xi32>
    %13 = arith.cmpi sgt, %12, %11 : vector<16x16xi32>
    %cst_8 = arith.constant -1.000000e+09 : f32
    %cst_9 = arith.constant 0.000000e+00 : f32
    %14 = vector.broadcast %cst_8 : f32 to vector<16x16xf32>
    %15 = vector.broadcast %cst_9 : f32 to vector<16x16xf32>
    %16 = arith.select %13, %14, %15 : vector<16x16xi1>, vector<16x16xf32>
    %17 = vector.extract_strided_slice %7 {offsets = [0, 0], sizes = [16, 32], strides = [1, 1]} : vector<16x128xbf16> to vector<16x32xbf16>
    %18 = vector.extract_strided_slice %3 {offsets = [0, 0], sizes = [16, 32], strides = [1, 1]} : vector<16x128xbf16> to vector<16x32xbf16>
    %19 = vector.extract_strided_slice %5 {offsets = [0, 0], sizes = [16, 32], strides = [1, 1]} : vector<16x128xbf16> to vector<16x32xbf16>
    %cst_10 = arith.constant dense<0.000000e+00> : vector<16x16xf32>
    %20 = tpu.matmul %17, %18, %cst_10 {dimension_numbers = #tpu.dot_dimension_numbers<[1], [1], [0], [0], [0, 0, 1, 0], [], []>} : vector<16x32xbf16>, vector<16x32xbf16>, vector<16x16xf32> -> vector<16x16xf32>
    %21 = arith.addf %20, %16 : vector<16x16xf32>
    %cst_11 = arith.constant dense<0xFF800000> : vector<16xf32>
    %22 = vector.multi_reduction <maximumf>, %21, %cst_11 [1] : vector<16x16xf32> to vector<16xf32>
    %23 = vector.shape_cast %22 : vector<16xf32> to vector<16x1xf32>
    %24 = vector.broadcast %23 : vector<16x1xf32> to vector<16x16xf32>
    %25 = arith.subf %21, %24 : vector<16x16xf32>
    %26 = math.exp %25 : vector<16x16xf32>
    %cst_12 = arith.constant dense<0.000000e+00> : vector<16xf32>
    %27 = vector.multi_reduction <add>, %26, %cst_12 [1] : vector<16x16xf32> to vector<16xf32>
    %28 = vector.shape_cast %27 : vector<16xf32> to vector<16x1xf32>
    %29 = arith.truncf %26 : vector<16x16xf32> to vector<16x16xbf16>
    %cst_13 = arith.constant dense<0.000000e+00> : vector<16x32xf32>
    %30 = tpu.matmul %29, %19, %cst_13 {dimension_numbers = #tpu.dot_dimension_numbers<[1], [0], [0], [1], [0, 0, 1, 1], [], []>} : vector<16x16xbf16>, vector<16x32xbf16>, vector<16x32xf32> -> vector<16x32xf32>
    %31 = tpu.reciprocal %28 {approx = true} : vector<16x1xf32> -> vector<16x1xf32>
    %32 = vector.broadcast %31 : vector<16x1xf32> to vector<16x32xf32>
    %33 = arith.mulf %30, %32 : vector<16x32xf32>
    %34 = vector.extract_strided_slice %7 {offsets = [0, 32], sizes = [16, 32], strides = [1, 1]} : vector<16x128xbf16> to vector<16x32xbf16>
    %35 = vector.extract_strided_slice %3 {offsets = [0, 32], sizes = [16, 32], strides = [1, 1]} : vector<16x128xbf16> to vector<16x32xbf16>
    %36 = vector.extract_strided_slice %5 {offsets = [0, 32], sizes = [16, 32], strides = [1, 1]} : vector<16x128xbf16> to vector<16x32xbf16>
    %cst_14 = arith.constant dense<0.000000e+00> : vector<16x16xf32>
    %37 = tpu.matmul %34, %35, %cst_14 {dimension_numbers = #tpu.dot_dimension_numbers<[1], [1], [0], [0], [0, 0, 1, 0], [], []>} : vector<16x32xbf16>, vector<16x32xbf16>, vector<16x16xf32> -> vector<16x16xf32>
    %38 = arith.addf %37, %16 : vector<16x16xf32>
    %cst_15 = arith.constant dense<0xFF800000> : vector<16xf32>
    %39 = vector.multi_reduction <maximumf>, %38, %cst_15 [1] : vector<16x16xf32> to vector<16xf32>
    %40 = vector.shape_cast %39 : vector<16xf32> to vector<16x1xf32>
    %41 = vector.broadcast %40 : vector<16x1xf32> to vector<16x16xf32>
    %42 = arith.subf %38, %41 : vector<16x16xf32>
    %43 = math.exp %42 : vector<16x16xf32>
    %cst_16 = arith.constant dense<0.000000e+00> : vector<16xf32>
    %44 = vector.multi_reduction <add>, %43, %cst_16 [1] : vector<16x16xf32> to vector<16xf32>
    %45 = vector.shape_cast %44 : vector<16xf32> to vector<16x1xf32>
    %46 = arith.truncf %43 : vector<16x16xf32> to vector<16x16xbf16>
    %cst_17 = arith.constant dense<0.000000e+00> : vector<16x32xf32>
    %47 = tpu.matmul %46, %36, %cst_17 {dimension_numbers = #tpu.dot_dimension_numbers<[1], [0], [0], [1], [0, 0, 1, 1], [], []>} : vector<16x16xbf16>, vector<16x32xbf16>, vector<16x32xf32> -> vector<16x32xf32>
    %48 = tpu.reciprocal %45 {approx = true} : vector<16x1xf32> -> vector<16x1xf32>
    %49 = vector.broadcast %48 : vector<16x1xf32> to vector<16x32xf32>
    %50 = arith.mulf %47, %49 : vector<16x32xf32>
    %51 = vector.extract_strided_slice %7 {offsets = [0, 64], sizes = [16, 32], strides = [1, 1]} : vector<16x128xbf16> to vector<16x32xbf16>
    %52 = vector.extract_strided_slice %3 {offsets = [0, 64], sizes = [16, 32], strides = [1, 1]} : vector<16x128xbf16> to vector<16x32xbf16>
    %53 = vector.extract_strided_slice %5 {offsets = [0, 64], sizes = [16, 32], strides = [1, 1]} : vector<16x128xbf16> to vector<16x32xbf16>
    %cst_18 = arith.constant dense<0.000000e+00> : vector<16x16xf32>
    %54 = tpu.matmul %51, %52, %cst_18 {dimension_numbers = #tpu.dot_dimension_numbers<[1], [1], [0], [0], [0, 0, 1, 0], [], []>} : vector<16x32xbf16>, vector<16x32xbf16>, vector<16x16xf32> -> vector<16x16xf32>
    %55 = arith.addf %54, %16 : vector<16x16xf32>
    %cst_19 = arith.constant dense<0xFF800000> : vector<16xf32>
    %56 = vector.multi_reduction <maximumf>, %55, %cst_19 [1] : vector<16x16xf32> to vector<16xf32>
    %57 = vector.shape_cast %56 : vector<16xf32> to vector<16x1xf32>
    %58 = vector.broadcast %57 : vector<16x1xf32> to vector<16x16xf32>
    %59 = arith.subf %55, %58 : vector<16x16xf32>
    %60 = math.exp %59 : vector<16x16xf32>
    %cst_20 = arith.constant dense<0.000000e+00> : vector<16xf32>
    %61 = vector.multi_reduction <add>, %60, %cst_20 [1] : vector<16x16xf32> to vector<16xf32>
    %62 = vector.shape_cast %61 : vector<16xf32> to vector<16x1xf32>
    %63 = arith.truncf %60 : vector<16x16xf32> to vector<16x16xbf16>
    %cst_21 = arith.constant dense<0.000000e+00> : vector<16x32xf32>
    %64 = tpu.matmul %63, %53, %cst_21 {dimension_numbers = #tpu.dot_dimension_numbers<[1], [0], [0], [1], [0, 0, 1, 1], [], []>} : vector<16x16xbf16>, vector<16x32xbf16>, vector<16x32xf32> -> vector<16x32xf32>
    %65 = tpu.reciprocal %62 {approx = true} : vector<16x1xf32> -> vector<16x1xf32>
    %66 = vector.broadcast %65 : vector<16x1xf32> to vector<16x32xf32>
    %67 = arith.mulf %64, %66 : vector<16x32xf32>
    %68 = vector.extract_strided_slice %7 {offsets = [0, 96], sizes = [16, 32], strides = [1, 1]} : vector<16x128xbf16> to vector<16x32xbf16>
    %69 = vector.extract_strided_slice %3 {offsets = [0, 96], sizes = [16, 32], strides = [1, 1]} : vector<16x128xbf16> to vector<16x32xbf16>
    %70 = vector.extract_strided_slice %5 {offsets = [0, 96], sizes = [16, 32], strides = [1, 1]} : vector<16x128xbf16> to vector<16x32xbf16>
    %cst_22 = arith.constant dense<0.000000e+00> : vector<16x16xf32>
    %71 = tpu.matmul %68, %69, %cst_22 {dimension_numbers = #tpu.dot_dimension_numbers<[1], [1], [0], [0], [0, 0, 1, 0], [], []>} : vector<16x32xbf16>, vector<16x32xbf16>, vector<16x16xf32> -> vector<16x16xf32>
    %72 = arith.addf %71, %16 : vector<16x16xf32>
    %cst_23 = arith.constant dense<0xFF800000> : vector<16xf32>
    %73 = vector.multi_reduction <maximumf>, %72, %cst_23 [1] : vector<16x16xf32> to vector<16xf32>
    %74 = vector.shape_cast %73 : vector<16xf32> to vector<16x1xf32>
    %75 = vector.broadcast %74 : vector<16x1xf32> to vector<16x16xf32>
    %76 = arith.subf %72, %75 : vector<16x16xf32>
    %77 = math.exp %76 : vector<16x16xf32>
    %cst_24 = arith.constant dense<0.000000e+00> : vector<16xf32>
    %78 = vector.multi_reduction <add>, %77, %cst_24 [1] : vector<16x16xf32> to vector<16xf32>
    %79 = vector.shape_cast %78 : vector<16xf32> to vector<16x1xf32>
    %80 = arith.truncf %77 : vector<16x16xf32> to vector<16x16xbf16>
    %cst_25 = arith.constant dense<0.000000e+00> : vector<16x32xf32>
    %81 = tpu.matmul %80, %70, %cst_25 {dimension_numbers = #tpu.dot_dimension_numbers<[1], [0], [0], [1], [0, 0, 1, 1], [], []>} : vector<16x16xbf16>, vector<16x32xbf16>, vector<16x32xf32> -> vector<16x32xf32>
    %82 = tpu.reciprocal %79 {approx = true} : vector<16x1xf32> -> vector<16x1xf32>
    %83 = vector.broadcast %82 : vector<16x1xf32> to vector<16x32xf32>
    %84 = arith.mulf %81, %83 : vector<16x32xf32>
    %85 = tpu.concatenate %33, %50, %67, %84 in 1 : vector<16x32xf32>, vector<16x32xf32>, vector<16x32xf32>, vector<16x32xf32> -> vector<16x128xf32>
    %c0_26 = arith.constant 0 : index
    %c0_27 = arith.constant 0 : index
    %c0_28 = arith.constant 0 : index
    %86 = vector.load %arg6[%c0_26, %c0_27, %c0_28] : memref<1x16x128xf32, #tpu.memory_space<vmem>>, vector<1x16x128xf32>
    %87 = vector.shape_cast %86 : vector<1x16x128xf32> to vector<16x128xf32>
    %88 = arith.truncf %85 : vector<16x128xf32> to vector<16x128xbf16>
    %c0_29 = arith.constant 0 : index
    %c0_30 = arith.constant 0 : index
    %89 = vector.load %arg5[%c0_29, %c0_30] : memref<128x128xbf16, #tpu.memory_space<vmem>>, vector<128x128xbf16>
    %cst_31 = arith.constant dense<0.000000e+00> : vector<16x128xf32>
    %90 = tpu.matmul %88, %89, %cst_31 {dimension_numbers = #tpu.dot_dimension_numbers<[1], [0], [0], [1], [0, 0, 1, 1], [], []>} : vector<16x128xbf16>, vector<128x128xbf16>, vector<16x128xf32> -> vector<16x128xf32>
    %91 = arith.addf %87, %90 : vector<16x128xf32>
    %c0_32 = arith.constant 0 : index
    %c0_33 = arith.constant 0 : index
    %c0_34 = arith.constant 0 : index
    %92 = vector.load %arg7[%c0_32, %c0_33, %c0_34] : memref<1x16x128xf32, #tpu.memory_space<vmem>>, vector<1x16x128xf32>
    %93 = vector.shape_cast %92 : vector<1x16x128xf32> to vector<16x128xf32>
    %94 = vector.shape_cast %91 : vector<16x128xf32> to vector<1x16x128xf32>
    tpu.vector_store %arg7[%c0_32, %c0_33, %c0_34], %94 {strides = array<i32>} : memref<1x16x128xf32, #tpu.memory_space<vmem>>, vector<1x16x128xf32>,
    return
  }
  func.func @transform_0(%arg0: i32, %arg1: i32) -> (i32, i32, i32) {
    %c0_i32 = arith.constant 0 : i32
    %c0_i32_0 = arith.constant 0 : i32
    return %arg0, %arg1, %c0_i32 : i32, i32, i32
  }
  func.func @transform_1(%arg0: i32, %arg1: i32) -> (i32, i32, i32) {
    %c0_i32 = arith.constant 0 : i32
    %c0_i32_0 = arith.constant 0 : i32
    %c0_i32_1 = arith.constant 0 : i32
    return %arg0, %c0_i32, %c0_i32_0 : i32, i32, i32
  }
  func.func @transform_2(%arg0: i32, %arg1: i32) -> (i32, i32, i32) {
    %c0_i32 = arith.constant 0 : i32
    %c0_i32_0 = arith.constant 0 : i32
    %c0_i32_1 = arith.constant 0 : i32
    return %arg0, %c0_i32, %c0_i32_0 : i32, i32, i32
  }
  func.func @transform_3(%arg0: i32, %arg1: i32) -> (i32, i32) {
    %c0_i32 = arith.constant 0 : i32
    %c0_i32_0 = arith.constant 0 : i32
    %c0_i32_1 = arith.constant 0 : i32
    return %c0_i32, %c0_i32_0 : i32, i32
  }
  func.func @transform_4(%arg0: i32, %arg1: i32) -> (i32, i32, i32) {
    %c0_i32 = arith.constant 0 : i32
    %c0_i32_0 = arith.constant 0 : i32
    return %arg0, %arg1, %c0_i32 : i32, i32, i32
  }
  func.func @transform_5(%arg0: i32, %arg1: i32) -> (i32, i32, i32) {
    %c0_i32 = arith.constant 0 : i32
    %c0_i32_0 = arith.constant 0 : i32
    return %arg0, %arg1, %c0_i32 : i32, i32, i32
  }
}

module attributes {stable_mosaic.version = 11 : i64} {
  func.func @_logits_kernel(%arg0: i32, %arg1: i32, %arg2: memref<16x128xbf16, #tpu.memory_space<vmem>>, %arg3: memref<64x128xbf16, #tpu.memory_space<vmem>>, %arg4: memref<16x64xf32, #tpu.memory_space<vmem>>) attributes {dimension_semantics = [#tpu.dimension_semantics<parallel>, #tpu.dimension_semantics<parallel>], iteration_bounds = array<i64: 2, 1>, scalar_prefetch = 0 : i64, scratch_operands = 0 : i64, tpu.core_type = #tpu.core_type<tc>, window_params = [{transform_indices = @transform_0, window_bounds = array<i64: 16, 128>}, {transform_indices = @transform_1, window_bounds = array<i64: 64, 128>}, {transform_indices = @transform_2, window_bounds = array<i64: 16, 64>}]} {
    %c0 = arith.constant 0 : index
    %c0_0 = arith.constant 0 : index
    %0 = vector.load %arg2[%c0, %c0_0] : memref<16x128xbf16, #tpu.memory_space<vmem>>, vector<16x128xbf16>
    %c0_1 = arith.constant 0 : index
    %c0_2 = arith.constant 0 : index
    %1 = vector.load %arg3[%c0_1, %c0_2] : memref<64x128xbf16, #tpu.memory_space<vmem>>, vector<64x128xbf16>
    %cst = arith.constant dense<0.000000e+00> : vector<16x64xf32>
    %2 = tpu.matmul %0, %1, %cst {dimension_numbers = #tpu.dot_dimension_numbers<[1], [1], [0], [0], [0, 0, 1, 0], [], []>} : vector<16x128xbf16>, vector<64x128xbf16>, vector<16x64xf32> -> vector<16x64xf32>
    %c0_3 = arith.constant 0 : index
    %c0_4 = arith.constant 0 : index
    %3 = vector.load %arg4[%c0_3, %c0_4] : memref<16x64xf32, #tpu.memory_space<vmem>>, vector<16x64xf32>
    tpu.vector_store %arg4[%c0_3, %c0_4], %2 {strides = array<i32>} : memref<16x64xf32, #tpu.memory_space<vmem>>, vector<16x64xf32>,
    return
  }
  func.func @transform_0(%arg0: i32, %arg1: i32) -> (i32, i32) {
    %c0_i32 = arith.constant 0 : i32
    %c0_i32_0 = arith.constant 0 : i32
    return %arg0, %c0_i32 : i32, i32
  }
  func.func @transform_1(%arg0: i32, %arg1: i32) -> (i32, i32) {
    %c0_i32 = arith.constant 0 : i32
    %c0_i32_0 = arith.constant 0 : i32
    return %arg1, %c0_i32 : i32, i32
  }
  func.func @transform_2(%arg0: i32, %arg1: i32) -> (i32, i32) {
    %c0_i32 = arith.constant 0 : i32
    return %arg0, %arg1 : i32, i32
  }
}

</mosaic_0001>

<llo_original>
// kernel: transformer_forward.21
$region0: #{transformer_forward.21}
  #allocation0 [shape = 'u32[]', space=smem, size = 0x4, offset = 0x4, fixed_abs, tag = 'smem constant byte address 0x4 - core index']
  #allocation1 [shape = 'u32[144,128]{1,0:T(1,128)}', space=vmem, size = 0x12000, scoped, tag = 'internal scratch']
  %s0 = inlined_call_operand.vmem [shape: f32[32,128], index: 0, kind: input, shape index: {}]
  %s1 = inlined_call_operand.vmem [shape: f32[1,128], index: 1, kind: input, shape index: {}]
  %s2 = inlined_call_operand.vmem [shape: f32[1,128], index: 2, kind: input, shape index: {}]
  %s3 = inlined_call_operand.vmem [shape: bf16[128,128], index: 3, kind: input, shape index: {}]
  %s4 = inlined_call_operand.vmem [shape: bf16[128,128], index: 4, kind: input, shape index: {}]
  %s5 = inlined_call_operand.vmem [shape: bf16[128,128], index: 5, kind: input, shape index: {}]
  %s6 = inlined_call_operand.vmem [shape: bf16[32,128], index: 6, kind: output, shape index: {0}]
  %s7 = inlined_call_operand.vmem [shape: bf16[32,128], index: 7, kind: output, shape index: {1}]
  %s8 = inlined_call_operand.vmem [shape: bf16[32,128], index: 8, kind: output, shape index: {2}]
  %9 = xla_tuple %s6, %s7, %s8
  %s10 = sld [smem:[#allocation0]]
  $region73: #{transformer_forward.21} parent=0
    _
  %s12 = ssub.s32 1, %s10
  %s13 = scalar_select 0, %s12, %s10
  loop: start=0, step=1, limit=4
  $region2: #{transformer_forward.21} parent=0 // loop_pre_header
    _
  $region3: #{transformer_forward.21} parent=0 // loop_header
    %s15 = sphi 0, %s19
    %p16 = scmp.ge.s32.totalorder %s15, 4
    %s25 = sphi 0, %s27
    %s28 = sphi 0, %s25
    %s29 = sphi 0, %s28
    %s45 = sphi 0, %s29
    %s49 = sphi 0, %s49
    %s51 = sphi 0, %s49
    %s52 = sphi 0, %s51
    %s66 = sphi 0, %s52
    %s70 = sphi 0, %s70
    %s72 = sphi 0, %s70
    %s73 = sphi 0, %s72
    %s87 = sphi 0, %s73
    %s91 = sphi 0, %s91
    %s93 = sphi 0, %s91
    %s94 = sphi 0, %s93
    %s108 = sphi 0, %s94
    %s112 = sphi 0, %s112
    %s114 = sphi 0, %s112
    %s115 = sphi 0, %s114
    %s129 = sphi 0, %s115
    %s133 = sphi 0, %s133
    %s135 = sphi 0, %s133
    %s136 = sphi 0, %s135
    %s150 = sphi 0, %s136
    %s156 = sphi 0, %s158
    %s159 = sphi 0, %s156
    %s160 = sphi 0, %s159
    %s176 = sphi 0, %s160
    %s182 = sphi 0, %s184
    %s185 = sphi 0, %s182
    %s186 = sphi 0, %s185
    %s202 = sphi 0, %s186
    %s208 = sphi 0, %s210
    %s211 = sphi 0, %s208
    %s212 = sphi 0, %s211
    %s228 = sphi 0, %s212
  $region4: #{transformer_forward.21} parent=0 // loop_header_branch
    %18 = sbr.rel (%p16) target = $region8
  $region5: #{transformer_forward.21} parent=0 // loop_body
    %s20 = ssub.s32 %s15, 1
    %s21 = ssub.s32 %s15, 2
    %s22 = sadd.s32 %s15, 1
    %s23 = ssub.s32 %s15, %s22
    %p24 = scmp.eq.s32.totalorder %s23, 0
    %s26 = sadd.s32 %s25, 1
    %s27 = scalar_select %p24, %s25, %s26
    %p30 = pneg %p24
    %p31 = scmp.eq.s32.totalorder %s15, 1
    %p32 = por %p30, %p31
    %p33 = scmp.ne.s32.totalorder %s25, %s28
    %p34 = scmp.eq.s32.totalorder %s15, 0
    %p35 = por %p33, %p34
    %p36 = scmp.ne.s32.totalorder %s25, %s28
    %p37 = scmp.eq.s32.totalorder %s20, 1
    %p38 = por %p36, %p37
    %p39 = scmp.ne.s32.totalorder %s28, %s29
    %p40 = scmp.eq.s32.totalorder %s20, 0
    %p41 = por %p39, %p40
    %p42 = scmp.ne.s32.totalorder %s28, %s29
    %p43 = scmp.eq.s32.totalorder %s21, 1
    %p44 = por %p42, %p43
    %p46 = scmp.ne.s32.totalorder %s29, %s45
    %p47 = scmp.eq.s32.totalorder %s21, 0
    %p48 = por %p46, %p47
    %s50 = sadd.s32 %s49, 1
    %p53 = scmp.eq.s32.totalorder %s15, 1
    %p54 = scmp.ne.s32.totalorder %s49, %s51
    %p55 = scmp.eq.s32.totalorder %s15, 0
    %p56 = por %p54, %p55
    %p57 = scmp.ne.s32.totalorder %s49, %s51
    %p58 = scmp.eq.s32.totalorder %s20, 1
    %p59 = por %p57, %p58
    %p60 = scmp.ne.s32.totalorder %s51, %s52
    %p61 = scmp.eq.s32.totalorder %s20, 0
    %p62 = por %p60, %p61
    %p63 = scmp.ne.s32.totalorder %s51, %s52
    %p64 = scmp.eq.s32.totalorder %s21, 1
    %p65 = por %p63, %p64
    %p67 = scmp.ne.s32.totalorder %s52, %s66
    %p68 = scmp.eq.s32.totalorder %s21, 0
    %p69 = por %p67, %p68
    %s71 = sadd.s32 %s70, 1
    %p74 = scmp.eq.s32.totalorder %s15, 1
    %p75 = scmp.ne.s32.totalorder %s70, %s72
    %p76 = scmp.eq.s32.totalorder %s15, 0
    %p77 = por %p75, %p76
    %p78 = scmp.ne.s32.totalorder %s70, %s72
    %p79 = scmp.eq.s32.totalorder %s20, 1
    %p80 = por %p78, %p79
    %p81 = scmp.ne.s32.totalorder %s72, %s73
    %p82 = scmp.eq.s32.totalorder %s20, 0
    %p83 = por %p81, %p82
    %p84 = scmp.ne.s32.totalorder %s72, %s73
    %p85 = scmp.eq.s32.totalorder %s21, 1
    %p86 = por %p84, %p85
    %p88 = scmp.ne.s32.totalorder %s73, %s87
    %p89 = scmp.eq.s32.totalorder %s21, 0
    %p90 = por %p88, %p89
    %s92 = sadd.s32 %s91, 1
    %p95 = scmp.eq.s32.totalorder %s15, 1
    %p96 = scmp.ne.s32.totalorder %s91, %s93
    %p97 = scmp.eq.s32.totalorder %s15, 0
    %p98 = por %p96, %p97
    %p99 = scmp.ne.s32.totalorder %s91, %s93
    %p100 = scmp.eq.s32.totalorder %s20, 1
    %p101 = por %p99, %p100
    %p102 = scmp.ne.s32.totalorder %s93, %s94
    %p103 = scmp.eq.s32.totalorder %s20, 0
    %p104 = por %p102, %p103
    %p105 = scmp.ne.s32.totalorder %s93, %s94
    %p106 = scmp.eq.s32.totalorder %s21, 1
    %p107 = por %p105, %p106
    %p109 = scmp.ne.s32.totalorder %s94, %s108
    %p110 = scmp.eq.s32.totalorder %s21, 0
    %p111 = por %p109, %p110
    %s113 = sadd.s32 %s112, 1
    %p116 = scmp.eq.s32.totalorder %s15, 1
    %p117 = scmp.ne.s32.totalorder %s112, %s114
    %p118 = scmp.eq.s32.totalorder %s15, 0
    %p119 = por %p117, %p118
    %p120 = scmp.ne.s32.totalorder %s112, %s114
    %p121 = scmp.eq.s32.totalorder %s20, 1
    %p122 = por %p120, %p121
    %p123 = scmp.ne.s32.totalorder %s114, %s115
    %p124 = scmp.eq.s32.totalorder %s20, 0
    %p125 = por %p123, %p124
    %p126 = scmp.ne.s32.totalorder %s114, %s115
    %p127 = scmp.eq.s32.totalorder %s21, 1
    %p128 = por %p126, %p127
    %p130 = scmp.ne.s32.totalorder %s115, %s129
    %p131 = scmp.eq.s32.totalorder %s21, 0
    %p132 = por %p130, %p131
    %s134 = sadd.s32 %s133, 1
    %p137 = scmp.eq.s32.totalorder %s15, 1
    %p138 = scmp.ne.s32.totalorder %s133, %s135
    %p139 = scmp.eq.s32.totalorder %s15, 0
    %p140 = por %p138, %p139
    %p141 = scmp.ne.s32.totalorder %s133, %s135
    %p142 = scmp.eq.s32.totalorder %s20, 1
    %p143 = por %p141, %p142
    %p144 = scmp.ne.s32.totalorder %s135, %s136
    %p145 = scmp.eq.s32.totalorder %s20, 0
    %p146 = por %p144, %p145
    %p147 = scmp.ne.s32.totalorder %s135, %s136
    %p148 = scmp.eq.s32.totalorder %s21, 1
    %p149 = por %p147, %p148
    %p151 = scmp.ne.s32.totalorder %s136, %s150
    %p152 = scmp.eq.s32.totalorder %s21, 0
    %p153 = por %p151, %p152
    %s154 = ssub.s32 %s15, %s22
    %p155 = scmp.eq.s32.totalorder %s154, 0
    %s157 = sadd.s32 %s156, 1
    %s158 = scalar_select %p155, %s156, %s157
    %p161 = pneg %p155
    %p162 = scmp.eq.s32.totalorder %s15, 1
    %p163 = por %p161, %p162
    %p164 = scmp.ne.s32.totalorder %s156, %s159
    %p165 = scmp.eq.s32.totalorder %s15, 0
    %p166 = por %p164, %p165
    %p167 = scmp.ne.s32.totalorder %s156, %s159
    %p168 = scmp.eq.s32.totalorder %s20, 1
    %p169 = por %p167, %p168
    %p170 = scmp.ne.s32.totalorder %s159, %s160
    %p171 = scmp.eq.s32.totalorder %s20, 0
    %p172 = por %p170, %p171
    %p173 = scmp.ne.s32.totalorder %s159, %s160
    %p174 = scmp.eq.s32.totalorder %s21, 1
    %p175 = por %p173, %p174
    %p177 = scmp.ne.s32.totalorder %s160, %s176
    %p178 = scmp.eq.s32.totalorder %s21, 0
    %p179 = por %p177, %p178
    %s180 = ssub.s32 %s15, %s22
    %p181 = scmp.eq.s32.totalorder %s180, 0
    %s183 = sadd.s32 %s182, 1
    %s184 = scalar_select %p181, %s182, %s183
    %p187 = pneg %p181
    %p188 = scmp.eq.s32.totalorder %s15, 1
    %p189 = por %p187, %p188
    %p190 = scmp.ne.s32.totalorder %s182, %s185
    %p191 = scmp.eq.s32.totalorder %s15, 0
    %p192 = por %p190, %p191
    %p193 = scmp.ne.s32.totalorder %s182, %s185
    %p194 = scmp.eq.s32.totalorder %s20, 1
    %p195 = por %p193, %p194
    %p196 = scmp.ne.s32.totalorder %s185, %s186
    %p197 = scmp.eq.s32.totalorder %s20, 0
    %p198 = por %p196, %p197
    %p199 = scmp.ne.s32.totalorder %s185, %s186
    %p200 = scmp.eq.s32.totalorder %s21, 1
    %p201 = por %p199, %p200
    %p203 = scmp.ne.s32.totalorder %s186, %s202
    %p204 = scmp.eq.s32.totalorder %s21, 0
    %p205 = por %p203, %p204
    %s206 = ssub.s32 %s15, %s22
    %p207 = scmp.eq.s32.totalorder %s206, 0
    %s209 = sadd.s32 %s208, 1
    %s210 = scalar_select %p207, %s208, %s209
    %p213 = pneg %p207
    %p214 = scmp.eq.s32.totalorder %s15, 1
    %p215 = por %p213, %p214
    %p216 = scmp.ne.s32.totalorder %s208, %s211
    %p217 = scmp.eq.s32.totalorder %s15, 0
    %p218 = por %p216, %p217
    %p219 = scmp.ne.s32.totalorder %s208, %s211
    %p220 = scmp.eq.s32.totalorder %s20, 1
    %p221 = por %p219, %p220
    %p222 = scmp.ne.s32.totalorder %s211, %s212
    %p223 = scmp.eq.s32.totalorder %s20, 0
    %p224 = por %p222, %p223
    %p225 = scmp.ne.s32.totalorder %s211, %s212
    %p226 = scmp.eq.s32.totalorder %s21, 1
    %p227 = por %p225, %p226
    %p229 = scmp.ne.s32.totalorder %s212, %s228
    %p230 = scmp.eq.s32.totalorder %s21, 0
    %p231 = por %p229, %p230
    %p232 = scmp.le.s32.totalorder 1, %s15
    %p233 = scmp.lt.s32.totalorder %s15, 3
    %p234 = pnand %p232, %p233
    %p235 = pneg %p234
    // Predicated region
    $region9: #{transformer_forward.21} parent=5 // pred_check
      _
    $region10: #{transformer_forward.21} parent=5 // pred_check_branch
      %237 = sbr.rel (%p234) target = $region12
    $region11: #{transformer_forward.21} parent=5 // pred_region
      %s238 = ssub.s32 %s15, 1
      // Predicated region
      $region13: #{transformer_forward.21} parent=11 // pred_check
        %p239 = pneg %p62
      $region14: #{transformer_forward.21} parent=11 // pred_check_branch
        %241 = sbr.rel (%p239) target = $region16
      $region15: #{transformer_forward.21} parent=11 // pred_region
        _
      $region16: #{transformer_forward.21} parent=11 // pred_fallthru
        _
      // Predicated region
      $region17: #{transformer_forward.21} parent=11 // pred_check
        %p242 = pneg %p83
      $region18: #{transformer_forward.21} parent=11 // pred_check_branch
        %244 = sbr.rel (%p242) target = $region20
      $region19: #{transformer_forward.21} parent=11 // pred_region
        _
      $region20: #{transformer_forward.21} parent=11 // pred_fallthru
        _
      // Predicated region
      $region21: #{transformer_forward.21} parent=11 // pred_check
        %p245 = pneg %p104
      $region22: #{transformer_forward.21} parent=11 // pred_check_branch
        %247 = sbr.rel (%p245) target = $region24
      $region23: #{transformer_forward.21} parent=11 // pred_region
        _
      $region24: #{transformer_forward.21} parent=11 // pred_fallthru
        _
      // Predicated region
      $region25: #{transformer_forward.21} parent=11 // pred_check
        %p248 = pneg %p125
      $region26: #{transformer_forward.21} parent=11 // pred_check_branch
        %250 = sbr.rel (%p248) target = $region28
      $region27: #{transformer_forward.21} parent=11 // pred_region
        _
      $region28: #{transformer_forward.21} parent=11 // pred_fallthru
        _
      // Predicated region
      $region29: #{transformer_forward.21} parent=11 // pred_check
        %p251 = pneg %p146
      $region30: #{transformer_forward.21} parent=11 // pred_check_branch
        %253 = sbr.rel (%p251) target = $region32
      $region31: #{transformer_forward.21} parent=11 // pred_region
        _
      $region32: #{transformer_forward.21} parent=11 // pred_fallthru
        _
    $region12: #{transformer_forward.21} parent=5 // pred_fallthru
      _
    %p254 = scmp.lt.s32.totalorder %s15, 2
    // Predicated region
    $region33: #{transformer_forward.21} parent=5 // pred_check
      %p255 = pneg %p254
    $region34: #{transformer_forward.21} parent=5 // pred_check_branch
      %257 = sbr.rel (%p255) target = $region36
    $region35: #{transformer_forward.21} parent=5 // pred_region
      // Predicated region
      $region37: #{transformer_forward.21} parent=35 // pred_check
        %p258 = pneg %p35
      $region38: #{transformer_forward.21} parent=35 // pred_check_branch
        %260 = sbr.rel (%p258) target = $region40
      $region39: #{transformer_forward.21} parent=35 // pred_region
        %s261 = smul.u32 2, %s15
        %p262 = scmp.lt.s32.totalorder %s261, 3
        %s263 = scalar_select %p262, %s261, 3
        %s264 = smul.addr %s263, 8
        %s265 = scalar_lea.vmem %s0, %s264
        %s266 = smul.u32 2, %s15
      $region40: #{transformer_forward.21} parent=35 // pred_fallthru
        _
    $region36: #{transformer_forward.21} parent=5 // pred_fallthru
      _
    %p267 = scmp.le.s32.totalorder 1, %s15
    %p268 = scmp.lt.s32.totalorder %s15, 3
    %p269 = pnand %p267, %p268
    %p270 = pneg %p269
    // Predicated region
    $region41: #{transformer_forward.21} parent=5 // pred_check
      _
    $region42: #{transformer_forward.21} parent=5 // pred_check_branch
      %272 = sbr.rel (%p269) target = $region44
    $region43: #{transformer_forward.21} parent=5 // pred_region
      %s273 = ssub.s32 %s15, 1
      %s274 = smul.u32 2, %s20
      %p275 = scmp.lt.s32.totalorder %s274, 3
      %s276 = scalar_select %p275, %s274, 3
      %s277 = smul.addr %s276, 8
      %s278 = scalar_lea.vmem %s0, %s277
      %p279 = pneg %p41
      %p280 = pneg %p38
      %p281 = pneg %p62
      %p282 = pneg %p59
      %p283 = pneg %p83
      %p284 = pneg %p80
      %p285 = pneg %p104
      %p286 = pneg %p101
      %p287 = pneg %p125
      %p288 = pneg %p122
      %p289 = pneg %p146
      %p290 = pneg %p143
      %p291 = pneg %p172
      %p292 = pneg %p169
      %s293 = smul.u32 2, %s20
      %p294 = scmp.lt.s32.totalorder %s293, 3
      %s295 = scalar_select %p294, %s293, 3
      %s296 = smul.addr %s295, 4
      %s297 = scalar_lea.vmem %s6, %s296
      %p298 = pneg %p198
      %p299 = pneg %p195
      %s300 = smul.u32 2, %s20
      %p301 = scmp.lt.s32.totalorder %s300, 3
      %s302 = scalar_select %p301, %s300, 3
      %s303 = smul.addr %s302, 4
      %s304 = scalar_lea.vmem %s7, %s303
      %p305 = pneg %p224
      %p306 = pneg %p221
      %s307 = smul.u32 2, %s20
      %p308 = scmp.lt.s32.totalorder %s307, 3
      %s309 = scalar_select %p308, %s307, 3
      %s310 = smul.addr %s309, 4
      %s311 = scalar_lea.vmem %s8, %s310
      %s312 = smul.u32 2, %s20
      %p313 = scmp.lt.s32.totalorder %s312, 3
      %s314 = scalar_select %p313, %s312, 3
      %s315 = smul.addr %s314, 8
      %s316 = scalar_lea.vmem %s0, %s315
      %s317 = smul.u32 2, %s20
      %s318 = smul.u32 2, %s20
      %p319 = scmp.lt.s32.totalorder %s318, 3
      %s320 = scalar_select %p319, %s318, 3
      %s321 = smul.addr %s320, 4
      %s322 = scalar_lea.vmem %s6, %s321
      %s323 = smul.u32 2, %s20
      %s324 = smul.u32 2, %s20
      %p325 = scmp.lt.s32.totalorder %s324, 3
      %s326 = scalar_select %p325, %s324, 3
      %s327 = smul.addr %s326, 4
      %s328 = scalar_lea.vmem %s7, %s327
      %s329 = smul.u32 2, %s20
      %s330 = smul.u32 2, %s20
      %p331 = scmp.lt.s32.totalorder %s330, 3
      %s332 = scalar_select %p331, %s330, 3
      %s333 = smul.addr %s332, 4
      %s334 = scalar_lea.vmem %s8, %s333
      %s335 = smul.u32 2, %s20
      %v337 = vld [vmem:[%s316] sm:$0xff]
      %v338 = vld [vmem:[%s316 + $0x8] sm:$0xff]
      %339 = vadd.xlane.f32.xlu0 %v337
      %v340 = vpop.xlane.xlu0 %339
      %341 = vadd.xlane.f32.xlu0 %v338
      %v342 = vpop.xlane.xlu0 %341
      %v343 = vrcp.pop 128.0
      %v344 = vmul.f32 %v340, %v343
      %v345 = vmul.f32 %v342, %v343
      %v346 = vsub.f32 %v337, %v344
      %v347 = vsub.f32 %v338, %v345
      %v348 = vmul.f32 %v346, %v346
      %v349 = vmul.f32 %v347, %v347
      %350 = vadd.xlane.f32.xlu0 %v348
      %v351 = vpop.xlane.xlu0 %350
      %352 = vadd.xlane.f32.xlu0 %v349
      %v353 = vpop.xlane.xlu0 %352
      %v354 = vmul.f32 %v351, %v343
      %v355 = vmul.f32 %v353, %v343
      %v356 = vadd.f32 %v354, 1e-06
      %v357 = vadd.f32 %v355, 1e-06
      %v358 = vrsqrt.pop %v356
      %v359 = vrsqrt.pop %v357
      %v360 = vmul.f32 %v346, %v358
      %v361 = vmul.f32 %v347, %v359
      %v362 = vld [vmem:[%s1] sm:$0x1]
      %v364 = vlaneseq
      %v365 = vshrl.u32 %v364, 7
      %v366 = vsub.s32 0, %v365
      %v367 = vrot.slane %v362, %v366
      %v369 = vmul.f32 %v360, %v367
      %v370 = vmul.f32 %v361, %v367
      %v371 = vld [vmem:[%s2] sm:$0x1]
      %v373 = vlaneseq
      %v374 = vshrl.u32 %v373, 7
      %v375 = vsub.s32 0, %v374
      %v376 = vrot.slane %v371, %v375
      %v378 = vadd.f32 %v369, %v376
      %v379 = vadd.f32 %v370, %v376
      %v380 = vpack.c.bf16 %v379, %v378
      %v381 = vld [vmem:[%s3] sm:$0xf]
      %v382 = vld [vmem:[%s3 + $0x4] sm:$0xf]
      %v383 = vld [vmem:[%s3 + $0x8] sm:$0xf]
      %v384 = vld [vmem:[%s3 + $0xc] sm:$0xf]
      %v385 = vld [vmem:[%s3 + $0x10] sm:$0xf]
      %v386 = vld [vmem:[%s3 + $0x14] sm:$0xf]
      %v387 = vld [vmem:[%s3 + $0x18] sm:$0xf]
      %v388 = vld [vmem:[%s3 + $0x1c] sm:$0xf]
      %v389 = vld [vmem:[%s3 + $0x20] sm:$0xf]
      %v390 = vld [vmem:[%s3 + $0x24] sm:$0xf]
      %v391 = vld [vmem:[%s3 + $0x28] sm:$0xf]
      %v392 = vld [vmem:[%s3 + $0x2c] sm:$0xf]
      %v393 = vld [vmem:[%s3 + $0x30] sm:$0xf]
      %v394 = vld [vmem:[%s3 + $0x34] sm:$0xf]
      %v395 = vld [vmem:[%s3 + $0x38] sm:$0xf]
      %v396 = vld [vmem:[%s3 + $0x3c] sm:$0xf]
      %v413 = vunpack.c.l.b16 %v381
      %v414 = vunpack.c.l.b16 %v382
      %v415 = vunpack.c.l.b16 %v383
      %v416 = vunpack.c.l.b16 %v384
      %v417 = vunpack.c.l.b16 %v385
      %v418 = vunpack.c.l.b16 %v386
      %v419 = vunpack.c.l.b16 %v387
      %v420 = vunpack.c.l.b16 %v388
      %v421 = vunpack.c.l.b16 %v389
      %v422 = vunpack.c.l.b16 %v390
      %v423 = vunpack.c.l.b16 %v391
      %v424 = vunpack.c.l.b16 %v392
      %v425 = vunpack.c.l.b16 %v393
      %v426 = vunpack.c.l.b16 %v394
      %v427 = vunpack.c.l.b16 %v395
      %v428 = vunpack.c.l.b16 %v396
      %v429 = vpack.c.b16 %v414, %v413
      %v430 = vpack.c.b16 %v416, %v415
      %v431 = vpack.c.b16 %v418, %v417
      %v432 = vpack.c.b16 %v420, %v419
      %v433 = vpack.c.b16 %v422, %v421
      %v434 = vpack.c.b16 %v424, %v423
      %v435 = vpack.c.b16 %v426, %v425
      %v436 = vpack.c.b16 %v428, %v427
      %445 = vmatprep.subr.bf16.mxu0 0
      %446 = vmatpush1.bf16.msra.mxu0 %v436
      %447 = vmatprep.subr.bf16.mxu0 0
      %448 = vmatpush1.bf16.msra.mxu0 %v435
      %449 = vmatprep.subr.bf16.mxu0 0
      %450 = vmatpush1.bf16.msra.mxu0 %v434
      %451 = vmatprep.subr.bf16.mxu0 0
      %452 = vmatpush1.bf16.msra.mxu0 %v433
      %453 = vmatprep.subr.bf16.mxu0 0
      %454 = vmatpush1.bf16.msra.mxu0 %v432
      %455 = vmatprep.subr.bf16.mxu0 0
      %456 = vmatpush1.bf16.msra.mxu0 %v431
      %457 = vmatprep.subr.bf16.mxu0 0
      %458 = vmatpush1.bf16.msra.mxu0 %v430
      %459 = vmatprep.subr.bf16.mxu0 0
      %460 = vmatpush1.bf16.msra.mxu0 %v429
      %461 = vmatprep.subr.bf16.mxu0 0
      %462 = vmatpush2.bf16.msra.mxu0 0
      %463 = vmatprep.subr.bf16.mxu0 0
      %464 = vmatpush2.bf16.msra.mxu0 0
      %465 = vmatprep.subr.bf16.mxu0 0
      %466 = vmatpush2.bf16.msra.mxu0 0
      %467 = vmatprep.subr.bf16.mxu0 0
      %468 = vmatpush2.bf16.msra.mxu0 0
      %469 = vmatprep.subr.bf16.mxu0 0
      %470 = vmatpush2.bf16.msra.mxu0 0
      %471 = vmatprep.subr.bf16.mxu0 0
      %472 = vmatpush2.bf16.msra.mxu0 0
      %473 = vmatprep.subr.bf16.mxu0 0
      %474 = vmatpush2.bf16.msra.mxu0 0
      %475 = vmatprep.subr.bf16.mxu0 0
      %476 = vmatpush2.bf16.msra.mxu0 0
      %477 = vmatprep.mubr.bf16.mxu0 0
      %478 = vmatmul.mubr.bf16.gmra.mxu0 %v380
      %v479 = vpop.f32.mrf.mxu0
      %v480 = vadd.f32 0.0, %v479
      %v481 = vpop.f32.mrf.mxu0
      %v482 = vpop.f32.mrf.mxu0
      %v483 = vadd.f32 0.0, %v482
      %v484 = vpop.f32.mrf.mxu0
      %485 = vdwg.mxu0
      %v486 = vpack.c.bf16 %v483, %v480
      %v488 = vunpack.c.l.b16 %v486
      %v489 = vunpack.c.h.b16 %v486
      %v490 = vpack.c.b16 %v488, %v488
      %v491 = vpack.c.b16 %v489, %v489
      %494 = vst [vmem:[%s322] sm:$0xf] %v490
      %495 = vst [vmem:[%s322 + $0x4] sm:$0xf] %v491
      %v496 = vld [vmem:[%s4] sm:$0xf]
      %v497 = vld [vmem:[%s4 + $0x4] sm:$0xf]
      %v498 = vld [vmem:[%s4 + $0x8] sm:$0xf]
      %v499 = vld [vmem:[%s4 + $0xc] sm:$0xf]
      %v500 = vld [vmem:[%s4 + $0x10] sm:$0xf]
      %v501 = vld [vmem:[%s4 + $0x14] sm:$0xf]
      %v502 = vld [vmem:[%s4 + $0x18] sm:$0xf]
      %v503 = vld [vmem:[%s4 + $0x1c] sm:$0xf]
      %v504 = vld [vmem:[%s4 + $0x20] sm:$0xf]
      %v505 = vld [vmem:[%s4 + $0x24] sm:$0xf]
      %v506 = vld [vmem:[%s4 + $0x28] sm:$0xf]
      %v507 = vld [vmem:[%s4 + $0x2c] sm:$0xf]
      %v508 = vld [vmem:[%s4 + $0x30] sm:$0xf]
      %v509 = vld [vmem:[%s4 + $0x34] sm:$0xf]
      %v510 = vld [vmem:[%s4 + $0x38] sm:$0xf]
      %v511 = vld [vmem:[%s4 + $0x3c] sm:$0xf]
      %v528 = vunpack.c.l.b16 %v496
      %v529 = vunpack.c.l.b16 %v497
      %v530 = vunpack.c.l.b16 %v498
      %v531 = vunpack.c.l.b16 %v499
      %v532 = vunpack.c.l.b16 %v500
      %v533 = vunpack.c.l.b16 %v501
      %v534 = vunpack.c.l.b16 %v502
      %v535 = vunpack.c.l.b16 %v503
      %v536 = vunpack.c.l.b16 %v504
      %v537 = vunpack.c.l.b16 %v505
      %v538 = vunpack.c.l.b16 %v506
      %v539 = vunpack.c.l.b16 %v507
      %v540 = vunpack.c.l.b16 %v508
      %v541 = vunpack.c.l.b16 %v509
      %v542 = vunpack.c.l.b16 %v510
      %v543 = vunpack.c.l.b16 %v511
      %v544 = vpack.c.b16 %v529, %v528
      %v545 = vpack.c.b16 %v531, %v530
      %v546 = vpack.c.b16 %v533, %v532
      %v547 = vpack.c.b16 %v535, %v534
      %v548 = vpack.c.b16 %v537, %v536
      %v549 = vpack.c.b16 %v539, %v538
      %v550 = vpack.c.b16 %v541, %v540
      %v551 = vpack.c.b16 %v543, %v542
      %560 = vmatprep.subr.bf16.mxu0 0
      %561 = vmatpush1.bf16.msra.mxu0 %v551
      %562 = vmatprep.subr.bf16.mxu0 0
      %563 = vmatpush1.bf16.msra.mxu0 %v550
      %564 = vmatprep.subr.bf16.mxu0 0
      %565 = vmatpush1.bf16.msra.mxu0 %v549
      %566 = vmatprep.subr.bf16.mxu0 0
      %567 = vmatpush1.bf16.msra.mxu0 %v548
      %568 = vmatprep.subr.bf16.mxu0 0
      %569 = vmatpush1.bf16.msra.mxu0 %v547
      %570 = vmatprep.subr.bf16.mxu0 0
      %571 = vmatpush1.bf16.msra.mxu0 %v546
      %572 = vmatprep.subr.bf16.mxu0 0
      %573 = vmatpush1.bf16.msra.mxu0 %v545
      %574 = vmatprep.subr.bf16.mxu0 0
      %575 = vmatpush1.bf16.msra.mxu0 %v544
      %576 = vmatprep.subr.bf16.mxu0 0
      %577 = vmatpush2.bf16.msra.mxu0 0
      %578 = vmatprep.subr.bf16.mxu0 0
      %579 = vmatpush2.bf16.msra.mxu0 0
      %580 = vmatprep.subr.bf16.mxu0 0
      %581 = vmatpush2.bf16.msra.mxu0 0
      %582 = vmatprep.subr.bf16.mxu0 0
      %583 = vmatpush2.bf16.msra.mxu0 0
      %584 = vmatprep.subr.bf16.mxu0 0
      %585 = vmatpush2.bf16.msra.mxu0 0
      %586 = vmatprep.subr.bf16.mxu0 0
      %587 = vmatpush2.bf16.msra.mxu0 0
      %588 = vmatprep.subr.bf16.mxu0 0
      %589 = vmatpush2.bf16.msra.mxu0 0
      %590 = vmatprep.subr.bf16.mxu0 0
      %591 = vmatpush2.bf16.msra.mxu0 0
      %592 = vmatprep.mubr.bf16.mxu0 0
      %593 = vmatmul.mubr.bf16.gmra.mxu0 %v380
      %v594 = vpop.f32.mrf.mxu0
      %v595 = vadd.f32 0.0, %v594
      %v596 = vpop.f32.mrf.mxu0
      %v597 = vpop.f32.mrf.mxu0
      %v598 = vadd.f32 0.0, %v597
      %v599 = vpop.f32.mrf.mxu0
      %600 = vdwg.mxu0
      %v601 = vpack.c.bf16 %v598, %v595
      %v603 = vunpack.c.l.b16 %v601
      %v604 = vunpack.c.h.b16 %v601
      %v605 = vpack.c.b16 %v603, %v603
      %v606 = vpack.c.b16 %v604, %v604
      %609 = vst [vmem:[%s328] sm:$0xf] %v605
      %610 = vst [vmem:[%s328 + $0x4] sm:$0xf] %v606
      %v611 = vld [vmem:[%s5] sm:$0xf]
      %v612 = vld [vmem:[%s5 + $0x4] sm:$0xf]
      %v613 = vld [vmem:[%s5 + $0x8] sm:$0xf]
      %v614 = vld [vmem:[%s5 + $0xc] sm:$0xf]
      %v615 = vld [vmem:[%s5 + $0x10] sm:$0xf]
      %v616 = vld [vmem:[%s5 + $0x14] sm:$0xf]
      %v617 = vld [vmem:[%s5 + $0x18] sm:$0xf]
      %v618 = vld [vmem:[%s5 + $0x1c] sm:$0xf]
      %v619 = vld [vmem:[%s5 + $0x20] sm:$0xf]
      %v620 = vld [vmem:[%s5 + $0x24] sm:$0xf]
      %v621 = vld [vmem:[%s5 + $0x28] sm:$0xf]
      %v622 = vld [vmem:[%s5 + $0x2c] sm:$0xf]
      %v623 = vld [vmem:[%s5 + $0x30] sm:$0xf]
      %v624 = vld [vmem:[%s5 + $0x34] sm:$0xf]
      %v625 = vld [vmem:[%s5 + $0x38] sm:$0xf]
      %v626 = vld [vmem:[%s5 + $0x3c] sm:$0xf]
      %v643 = vunpack.c.l.b16 %v611
      %v644 = vunpack.c.l.b16 %v612
      %v645 = vunpack.c.l.b16 %v613
      %v646 = vunpack.c.l.b16 %v614
      %v647 = vunpack.c.l.b16 %v615
      %v648 = vunpack.c.l.b16 %v616
      %v649 = vunpack.c.l.b16 %v617
      %v650 = vunpack.c.l.b16 %v618
      %v651 = vunpack.c.l.b16 %v619
      %v652 = vunpack.c.l.b16 %v620
      %v653 = vunpack.c.l.b16 %v621
      %v654 = vunpack.c.l.b16 %v622
      %v655 = vunpack.c.l.b16 %v623
      %v656 = vunpack.c.l.b16 %v624
      %v657 = vunpack.c.l.b16 %v625
      %v658 = vunpack.c.l.b16 %v626
      %v659 = vpack.c.b16 %v644, %v643
      %v660 = vpack.c.b16 %v646, %v645
      %v661 = vpack.c.b16 %v648, %v647
      %v662 = vpack.c.b16 %v650, %v649
      %v663 = vpack.c.b16 %v652, %v651
      %v664 = vpack.c.b16 %v654, %v653
      %v665 = vpack.c.b16 %v656, %v655
      %v666 = vpack.c.b16 %v658, %v657
      %675 = vmatprep.subr.bf16.mxu0 0
      %676 = vmatpush1.bf16.msra.mxu0 %v666
      %677 = vmatprep.subr.bf16.mxu0 0
      %678 = vmatpush1.bf16.msra.mxu0 %v665
      %679 = vmatprep.subr.bf16.mxu0 0
      %680 = vmatpush1.bf16.msra.mxu0 %v664
      %681 = vmatprep.subr.bf16.mxu0 0
      %682 = vmatpush1.bf16.msra.mxu0 %v663
      %683 = vmatprep.subr.bf16.mxu0 0
      %684 = vmatpush1.bf16.msra.mxu0 %v662
      %685 = vmatprep.subr.bf16.mxu0 0
      %686 = vmatpush1.bf16.msra.mxu0 %v661
      %687 = vmatprep.subr.bf16.mxu0 0
      %688 = vmatpush1.bf16.msra.mxu0 %v660
      %689 = vmatprep.subr.bf16.mxu0 0
      %690 = vmatpush1.bf16.msra.mxu0 %v659
      %691 = vmatprep.subr.bf16.mxu0 0
      %692 = vmatpush2.bf16.msra.mxu0 0
      %693 = vmatprep.subr.bf16.mxu0 0
      %694 = vmatpush2.bf16.msra.mxu0 0
      %695 = vmatprep.subr.bf16.mxu0 0
      %696 = vmatpush2.bf16.msra.mxu0 0
      %697 = vmatprep.subr.bf16.mxu0 0
      %698 = vmatpush2.bf16.msra.mxu0 0
      %699 = vmatprep.subr.bf16.mxu0 0
      %700 = vmatpush2.bf16.msra.mxu0 0
      %701 = vmatprep.subr.bf16.mxu0 0
      %702 = vmatpush2.bf16.msra.mxu0 0
      %703 = vmatprep.subr.bf16.mxu0 0
      %704 = vmatpush2.bf16.msra.mxu0 0
      %705 = vmatprep.subr.bf16.mxu0 0
      %706 = vmatpush2.bf16.msra.mxu0 0
      %707 = vmatprep.mubr.bf16.mxu0 0
      %708 = vmatmul.mubr.bf16.gmra.mxu0 %v380
      %v709 = vpop.f32.mrf.mxu0
      %v710 = vadd.f32 0.0, %v709
      %v711 = vpop.f32.mrf.mxu0
      %v712 = vpop.f32.mrf.mxu0
      %v713 = vadd.f32 0.0, %v712
      %v714 = vpop.f32.mrf.mxu0
      %715 = vdwg.mxu0
      %v716 = vpack.c.bf16 %v713, %v710
      %v718 = vunpack.c.l.b16 %v716
      %v719 = vunpack.c.h.b16 %v716
      %v720 = vpack.c.b16 %v718, %v718
      %v721 = vpack.c.b16 %v719, %v719
      %724 = vst [vmem:[%s334] sm:$0xf] %v720
      %725 = vst [vmem:[%s334 + $0x4] sm:$0xf] %v721
      %s726 = smul.u32 2, %s20
      %p727 = scmp.lt.s32.totalorder %s726, 3
      %s728 = scalar_select %p727, %s726, 3
      %s729 = smul.addr %s728, 4
      %s730 = scalar_lea.vmem %s6, %s729
      %s731 = smul.u32 2, %s20
      %p732 = scmp.lt.s32.totalorder %s731, 3
      %s733 = scalar_select %p732, %s731, 3
      %s734 = smul.addr %s733, 4
      %s735 = scalar_lea.vmem %s7, %s734
      %s736 = smul.u32 2, %s20
      %p737 = scmp.lt.s32.totalorder %s736, 3
      %s738 = scalar_select %p737, %s736, 3
      %s739 = smul.addr %s738, 4
      %s740 = scalar_lea.vmem %s8, %s739
      // Predicated region
      $region45: #{transformer_forward.21} parent=43 // pred_check
        %p741 = pneg %p169
      $region46: #{transformer_forward.21} parent=43 // pred_check_branch
        %743 = sbr.rel (%p741) target = $region48
      $region47: #{transformer_forward.21} parent=43 // pred_region
        %s744 = smul.u32 2, %s20
      $region48: #{transformer_forward.21} parent=43 // pred_fallthru
        _
      // Predicated region
      $region49: #{transformer_forward.21} parent=43 // pred_check
        %p745 = pneg %p195
      $region50: #{transformer_forward.21} parent=43 // pred_check_branch
        %747 = sbr.rel (%p745) target = $region52
      $region51: #{transformer_forward.21} parent=43 // pred_region
        %s748 = smul.u32 2, %s20
      $region52: #{transformer_forward.21} parent=43 // pred_fallthru
        _
      // Predicated region
      $region53: #{transformer_forward.21} parent=43 // pred_check
        %p749 = pneg %p221
      $region54: #{transformer_forward.21} parent=43 // pred_check_branch
        %751 = sbr.rel (%p749) target = $region56
      $region55: #{transformer_forward.21} parent=43 // pred_region
        %s752 = smul.u32 2, %s20
      $region56: #{transformer_forward.21} parent=43 // pred_fallthru
        _
    $region44: #{transformer_forward.21} parent=5 // pred_fallthru
      _
    %p753 = scmp.le.s32.totalorder 2, %s15
    // Predicated region
    $region57: #{transformer_forward.21} parent=5 // pred_check
      %p754 = pneg %p753
    $region58: #{transformer_forward.21} parent=5 // pred_check_branch
      %756 = sbr.rel (%p754) target = $region60
    $region59: #{transformer_forward.21} parent=5 // pred_region
      %s757 = ssub.s32 %s15, 2
      // Predicated region
      $region61: #{transformer_forward.21} parent=59 // pred_check
        %p758 = pneg %p175
      $region62: #{transformer_forward.21} parent=59 // pred_check_branch
        %760 = sbr.rel (%p758) target = $region64
      $region63: #{transformer_forward.21} parent=59 // pred_region
        %s761 = smul.u32 2, %s21
        %p762 = scmp.lt.s32.totalorder %s761, 3
        %s763 = scalar_select %p762, %s761, 3
        %s764 = smul.addr %s763, 4
        %s765 = scalar_lea.vmem %s6, %s764
      $region64: #{transformer_forward.21} parent=59 // pred_fallthru
        _
      // Predicated region
      $region65: #{transformer_forward.21} parent=59 // pred_check
        %p766 = pneg %p201
      $region66: #{transformer_forward.21} parent=59 // pred_check_branch
        %768 = sbr.rel (%p766) target = $region68
      $region67: #{transformer_forward.21} parent=59 // pred_region
        %s769 = smul.u32 2, %s21
        %p770 = scmp.lt.s32.totalorder %s769, 3
        %s771 = scalar_select %p770, %s769, 3
        %s772 = smul.addr %s771, 4
        %s773 = scalar_lea.vmem %s7, %s772
      $region68: #{transformer_forward.21} parent=59 // pred_fallthru
        _
      // Predicated region
      $region69: #{transformer_forward.21} parent=59 // pred_check
        %p774 = pneg %p227
      $region70: #{transformer_forward.21} parent=59 // pred_check_branch
        %776 = sbr.rel (%p774) target = $region72
      $region71: #{transformer_forward.21} parent=59 // pred_region
        %s777 = smul.u32 2, %s21
        %p778 = scmp.lt.s32.totalorder %s777, 3
        %s779 = scalar_select %p778, %s777, 3
        %s780 = smul.addr %s779, 4
        %s781 = scalar_lea.vmem %s8, %s780
      $region72: #{transformer_forward.21} parent=59 // pred_fallthru
        _
    $region60: #{transformer_forward.21} parent=5 // pred_fallthru
      _
  $region6: #{transformer_forward.21} parent=0 // loop_footer
    %s19 = sadd.s32 1, %s15
  $region7: #{transformer_forward.21} parent=0 // loop_footer_branch
    %14 = sbr.rel target = $region3
  $region8: #{transformer_forward.21} parent=0 // loop_exit
    _

// kernel: transformer_forward.23
$region0: #{transformer_forward.23}
  #allocation0 [shape = 'u32[]', space=smem, size = 0x4, offset = 0x4, fixed_abs, tag = 'smem constant byte address 0x4 - core index']
  #allocation1 [shape = 'u32[144,128]{1,0:T(1,128)}', space=vmem, size = 0x12000, scoped, tag = 'internal scratch']
  %s0 = inlined_call_operand.vmem [shape: f32[32,128], index: 0, kind: input, shape index: {}]
  %s1 = inlined_call_operand.vmem [shape: f32[1,128], index: 1, kind: input, shape index: {}]
  %s2 = inlined_call_operand.vmem [shape: f32[1,128], index: 2, kind: input, shape index: {}]
  %s3 = inlined_call_operand.vmem [shape: bf16[128,256], index: 3, kind: input, shape index: {}]
  %s4 = inlined_call_operand.vmem [shape: f32[1,256], index: 4, kind: input, shape index: {}]
  %s5 = inlined_call_operand.vmem [shape: bf16[256,128], index: 5, kind: input, shape index: {}]
  %s6 = inlined_call_operand.vmem [shape: f32[1,128], index: 6, kind: input, shape index: {}]
  %s7 = inlined_call_operand.vmem [shape: f32[32,128], index: 7, kind: output, shape index: {}]
  %s8 = sld [smem:[#allocation0]]
  $region61: #{transformer_forward.23} parent=0
    _
  %s10 = ssub.s32 1, %s8
  %s11 = scalar_select 0, %s10, %s8
  loop: start=0, step=1, limit=4
  $region2: #{transformer_forward.23} parent=0 // loop_pre_header
    _
  $region3: #{transformer_forward.23} parent=0 // loop_header
    %s13 = sphi 0, %s17
    %p14 = scmp.ge.s32.totalorder %s13, 4
    %s23 = sphi 0, %s25
    %s26 = sphi 0, %s23
    %s27 = sphi 0, %s26
    %s43 = sphi 0, %s27
    %s47 = sphi 0, %s47
    %s49 = sphi 0, %s47
    %s50 = sphi 0, %s49
    %s64 = sphi 0, %s50
    %s68 = sphi 0, %s68
    %s70 = sphi 0, %s68
    %s71 = sphi 0, %s70
    %s85 = sphi 0, %s71
    %s89 = sphi 0, %s89
    %s91 = sphi 0, %s89
    %s92 = sphi 0, %s91
    %s106 = sphi 0, %s92
    %s110 = sphi 0, %s110
    %s112 = sphi 0, %s110
    %s113 = sphi 0, %s112
    %s127 = sphi 0, %s113
    %s131 = sphi 0, %s131
    %s133 = sphi 0, %s131
    %s134 = sphi 0, %s133
    %s148 = sphi 0, %s134
    %s152 = sphi 0, %s152
    %s154 = sphi 0, %s152
    %s155 = sphi 0, %s154
    %s169 = sphi 0, %s155
    %s175 = sphi 0, %s177
    %s178 = sphi 0, %s175
    %s179 = sphi 0, %s178
    %s195 = sphi 0, %s179
  $region4: #{transformer_forward.23} parent=0 // loop_header_branch
    %16 = sbr.rel (%p14) target = $region8
  $region5: #{transformer_forward.23} parent=0 // loop_body
    %s18 = ssub.s32 %s13, 1
    %s19 = ssub.s32 %s13, 2
    %s20 = sadd.s32 %s13, 1
    %s21 = ssub.s32 %s13, %s20
    %p22 = scmp.eq.s32.totalorder %s21, 0
    %s24 = sadd.s32 %s23, 1
    %s25 = scalar_select %p22, %s23, %s24
    %p28 = pneg %p22
    %p29 = scmp.eq.s32.totalorder %s13, 1
    %p30 = por %p28, %p29
    %p31 = scmp.ne.s32.totalorder %s23, %s26
    %p32 = scmp.eq.s32.totalorder %s13, 0
    %p33 = por %p31, %p32
    %p34 = scmp.ne.s32.totalorder %s23, %s26
    %p35 = scmp.eq.s32.totalorder %s18, 1
    %p36 = por %p34, %p35
    %p37 = scmp.ne.s32.totalorder %s26, %s27
    %p38 = scmp.eq.s32.totalorder %s18, 0
    %p39 = por %p37, %p38
    %p40 = scmp.ne.s32.totalorder %s26, %s27
    %p41 = scmp.eq.s32.totalorder %s19, 1
    %p42 = por %p40, %p41
    %p44 = scmp.ne.s32.totalorder %s27, %s43
    %p45 = scmp.eq.s32.totalorder %s19, 0
    %p46 = por %p44, %p45
    %s48 = sadd.s32 %s47, 1
    %p51 = scmp.eq.s32.totalorder %s13, 1
    %p52 = scmp.ne.s32.totalorder %s47, %s49
    %p53 = scmp.eq.s32.totalorder %s13, 0
    %p54 = por %p52, %p53
    %p55 = scmp.ne.s32.totalorder %s47, %s49
    %p56 = scmp.eq.s32.totalorder %s18, 1
    %p57 = por %p55, %p56
    %p58 = scmp.ne.s32.totalorder %s49, %s50
    %p59 = scmp.eq.s32.totalorder %s18, 0
    %p60 = por %p58, %p59
    %p61 = scmp.ne.s32.totalorder %s49, %s50
    %p62 = scmp.eq.s32.totalorder %s19, 1
    %p63 = por %p61, %p62
    %p65 = scmp.ne.s32.totalorder %s50, %s64
    %p66 = scmp.eq.s32.totalorder %s19, 0
    %p67 = por %p65, %p66
    %s69 = sadd.s32 %s68, 1
    %p72 = scmp.eq.s32.totalorder %s13, 1
    %p73 = scmp.ne.s32.totalorder %s68, %s70
    %p74 = scmp.eq.s32.totalorder %s13, 0
    %p75 = por %p73, %p74
    %p76 = scmp.ne.s32.totalorder %s68, %s70
    %p77 = scmp.eq.s32.totalorder %s18, 1
    %p78 = por %p76, %p77
    %p79 = scmp.ne.s32.totalorder %s70, %s71
    %p80 = scmp.eq.s32.totalorder %s18, 0
    %p81 = por %p79, %p80
    %p82 = scmp.ne.s32.totalorder %s70, %s71
    %p83 = scmp.eq.s32.totalorder %s19, 1
    %p84 = por %p82, %p83
    %p86 = scmp.ne.s32.totalorder %s71, %s85
    %p87 = scmp.eq.s32.totalorder %s19, 0
    %p88 = por %p86, %p87
    %s90 = sadd.s32 %s89, 1
    %p93 = scmp.eq.s32.totalorder %s13, 1
    %p94 = scmp.ne.s32.totalorder %s89, %s91
    %p95 = scmp.eq.s32.totalorder %s13, 0
    %p96 = por %p94, %p95
    %p97 = scmp.ne.s32.totalorder %s89, %s91
    %p98 = scmp.eq.s32.totalorder %s18, 1
    %p99 = por %p97, %p98
    %p100 = scmp.ne.s32.totalorder %s91, %s92
    %p101 = scmp.eq.s32.totalorder %s18, 0
    %p102 = por %p100, %p101
    %p103 = scmp.ne.s32.totalorder %s91, %s92
    %p104 = scmp.eq.s32.totalorder %s19, 1
    %p105 = por %p103, %p104
    %p107 = scmp.ne.s32.totalorder %s92, %s106
    %p108 = scmp.eq.s32.totalorder %s19, 0
    %p109 = por %p107, %p108
    %s111 = sadd.s32 %s110, 1
    %p114 = scmp.eq.s32.totalorder %s13, 1
    %p115 = scmp.ne.s32.totalorder %s110, %s112
    %p116 = scmp.eq.s32.totalorder %s13, 0
    %p117 = por %p115, %p116
    %p118 = scmp.ne.s32.totalorder %s110, %s112
    %p119 = scmp.eq.s32.totalorder %s18, 1
    %p120 = por %p118, %p119
    %p121 = scmp.ne.s32.totalorder %s112, %s113
    %p122 = scmp.eq.s32.totalorder %s18, 0
    %p123 = por %p121, %p122
    %p124 = scmp.ne.s32.totalorder %s112, %s113
    %p125 = scmp.eq.s32.totalorder %s19, 1
    %p126 = por %p124, %p125
    %p128 = scmp.ne.s32.totalorder %s113, %s127
    %p129 = scmp.eq.s32.totalorder %s19, 0
    %p130 = por %p128, %p129
    %s132 = sadd.s32 %s131, 1
    %p135 = scmp.eq.s32.totalorder %s13, 1
    %p136 = scmp.ne.s32.totalorder %s131, %s133
    %p137 = scmp.eq.s32.totalorder %s13, 0
    %p138 = por %p136, %p137
    %p139 = scmp.ne.s32.totalorder %s131, %s133
    %p140 = scmp.eq.s32.totalorder %s18, 1
    %p141 = por %p139, %p140
    %p142 = scmp.ne.s32.totalorder %s133, %s134
    %p143 = scmp.eq.s32.totalorder %s18, 0
    %p144 = por %p142, %p143
    %p145 = scmp.ne.s32.totalorder %s133, %s134
    %p146 = scmp.eq.s32.totalorder %s19, 1
    %p147 = por %p145, %p146
    %p149 = scmp.ne.s32.totalorder %s134, %s148
    %p150 = scmp.eq.s32.totalorder %s19, 0
    %p151 = por %p149, %p150
    %s153 = sadd.s32 %s152, 1
    %p156 = scmp.eq.s32.totalorder %s13, 1
    %p157 = scmp.ne.s32.totalorder %s152, %s154
    %p158 = scmp.eq.s32.totalorder %s13, 0
    %p159 = por %p157, %p158
    %p160 = scmp.ne.s32.totalorder %s152, %s154
    %p161 = scmp.eq.s32.totalorder %s18, 1
    %p162 = por %p160, %p161
    %p163 = scmp.ne.s32.totalorder %s154, %s155
    %p164 = scmp.eq.s32.totalorder %s18, 0
    %p165 = por %p163, %p164
    %p166 = scmp.ne.s32.totalorder %s154, %s155
    %p167 = scmp.eq.s32.totalorder %s19, 1
    %p168 = por %p166, %p167
    %p170 = scmp.ne.s32.totalorder %s155, %s169
    %p171 = scmp.eq.s32.totalorder %s19, 0
    %p172 = por %p170, %p171
    %s173 = ssub.s32 %s13, %s20
    %p174 = scmp.eq.s32.totalorder %s173, 0
    %s176 = sadd.s32 %s175, 1
    %s177 = scalar_select %p174, %s175, %s176
    %p180 = pneg %p174
    %p181 = scmp.eq.s32.totalorder %s13, 1
    %p182 = por %p180, %p181
    %p183 = scmp.ne.s32.totalorder %s175, %s178
    %p184 = scmp.eq.s32.totalorder %s13, 0
    %p185 = por %p183, %p184
    %p186 = scmp.ne.s32.totalorder %s175, %s178
    %p187 = scmp.eq.s32.totalorder %s18, 1
    %p188 = por %p186, %p187
    %p189 = scmp.ne.s32.totalorder %s178, %s179
    %p190 = scmp.eq.s32.totalorder %s18, 0
    %p191 = por %p189, %p190
    %p192 = scmp.ne.s32.totalorder %s178, %s179
    %p193 = scmp.eq.s32.totalorder %s19, 1
    %p194 = por %p192, %p193
    %p196 = scmp.ne.s32.totalorder %s179, %s195
    %p197 = scmp.eq.s32.totalorder %s19, 0
    %p198 = por %p196, %p197
    %p199 = scmp.le.s32.totalorder 1, %s13
    %p200 = scmp.lt.s32.totalorder %s13, 3
    %p201 = pnand %p199, %p200
    %p202 = pneg %p201
    // Predicated region
    $region9: #{transformer_forward.23} parent=5 // pred_check
      _
    $region10: #{transformer_forward.23} parent=5 // pred_check_branch
      %204 = sbr.rel (%p201) target = $region12
    $region11: #{transformer_forward.23} parent=5 // pred_region
      %s205 = ssub.s32 %s13, 1
      // Predicated region
      $region13: #{transformer_forward.23} parent=11 // pred_check
        %p206 = pneg %p60
      $region14: #{transformer_forward.23} parent=11 // pred_check_branch
        %208 = sbr.rel (%p206) target = $region16
      $region15: #{transformer_forward.23} parent=11 // pred_region
        _
      $region16: #{transformer_forward.23} parent=11 // pred_fallthru
        _
      // Predicated region
      $region17: #{transformer_forward.23} parent=11 // pred_check
        %p209 = pneg %p81
      $region18: #{transformer_forward.23} parent=11 // pred_check_branch
        %211 = sbr.rel (%p209) target = $region20
      $region19: #{transformer_forward.23} parent=11 // pred_region
        _
      $region20: #{transformer_forward.23} parent=11 // pred_fallthru
        _
      // Predicated region
      $region21: #{transformer_forward.23} parent=11 // pred_check
        %p212 = pneg %p102
      $region22: #{transformer_forward.23} parent=11 // pred_check_branch
        %214 = sbr.rel (%p212) target = $region24
      $region23: #{transformer_forward.23} parent=11 // pred_region
        _
      $region24: #{transformer_forward.23} parent=11 // pred_fallthru
        _
      // Predicated region
      $region25: #{transformer_forward.23} parent=11 // pred_check
        %p215 = pneg %p123
      $region26: #{transformer_forward.23} parent=11 // pred_check_branch
        %217 = sbr.rel (%p215) target = $region28
      $region27: #{transformer_forward.23} parent=11 // pred_region
        _
      $region28: #{transformer_forward.23} parent=11 // pred_fallthru
        _
      // Predicated region
      $region29: #{transformer_forward.23} parent=11 // pred_check
        %p218 = pneg %p144
      $region30: #{transformer_forward.23} parent=11 // pred_check_branch
        %220 = sbr.rel (%p218) target = $region32
      $region31: #{transformer_forward.23} parent=11 // pred_region
        _
      $region32: #{transformer_forward.23} parent=11 // pred_fallthru
        _
      // Predicated region
      $region33: #{transformer_forward.23} parent=11 // pred_check
        %p221 = pneg %p165
      $region34: #{transformer_forward.23} parent=11 // pred_check_branch
        %223 = sbr.rel (%p221) target = $region36
      $region35: #{transformer_forward.23} parent=11 // pred_region
        _
      $region36: #{transformer_forward.23} parent=11 // pred_fallthru
        _
    $region12: #{transformer_forward.23} parent=5 // pred_fallthru
      _
    %p224 = scmp.lt.s32.totalorder %s13, 2
    // Predicated region
    $region37: #{transformer_forward.23} parent=5 // pred_check
      %p225 = pneg %p224
    $region38: #{transformer_forward.23} parent=5 // pred_check_branch
      %227 = sbr.rel (%p225) target = $region40
    $region39: #{transformer_forward.23} parent=5 // pred_region
      // Predicated region
      $region41: #{transformer_forward.23} parent=39 // pred_check
        %p228 = pneg %p33
      $region42: #{transformer_forward.23} parent=39 // pred_check_branch
        %230 = sbr.rel (%p228) target = $region44
      $region43: #{transformer_forward.23} parent=39 // pred_region
        %s231 = smul.u32 2, %s13
        %p232 = scmp.lt.s32.totalorder %s231, 3
        %s233 = scalar_select %p232, %s231, 3
        %s234 = smul.addr %s233, 8
        %s235 = scalar_lea.vmem %s0, %s234
        %s236 = smul.u32 2, %s13
      $region44: #{transformer_forward.23} parent=39 // pred_fallthru
        _
    $region40: #{transformer_forward.23} parent=5 // pred_fallthru
      _
    %p237 = scmp.le.s32.totalorder 1, %s13
    %p238 = scmp.lt.s32.totalorder %s13, 3
    %p239 = pnand %p237, %p238
    %p240 = pneg %p239
    // Predicated region
    $region45: #{transformer_forward.23} parent=5 // pred_check
      _
    $region46: #{transformer_forward.23} parent=5 // pred_check_branch
      %242 = sbr.rel (%p239) target = $region48
    $region47: #{transformer_forward.23} parent=5 // pred_region
      %s243 = ssub.s32 %s13, 1
      %s244 = smul.u32 2, %s18
      %p245 = scmp.lt.s32.totalorder %s244, 3
      %s246 = scalar_select %p245, %s244, 3
      %s247 = smul.addr %s246, 8
      %s248 = scalar_lea.vmem %s0, %s247
      %p249 = pneg %p39
      %p250 = pneg %p36
      %p251 = pneg %p60
      %p252 = pneg %p57
      %p253 = pneg %p81
      %p254 = pneg %p78
      %p255 = pneg %p102
      %p256 = pneg %p99
      %p257 = pneg %p123
      %p258 = pneg %p120
      %p259 = pneg %p144
      %p260 = pneg %p141
      %p261 = pneg %p165
      %p262 = pneg %p162
      %p263 = pneg %p191
      %p264 = pneg %p188
      %s265 = smul.u32 2, %s18
      %p266 = scmp.lt.s32.totalorder %s265, 3
      %s267 = scalar_select %p266, %s265, 3
      %s268 = smul.addr %s267, 8
      %s269 = scalar_lea.vmem %s7, %s268
      %s270 = smul.u32 2, %s18
      %p271 = scmp.lt.s32.totalorder %s270, 3
      %s272 = scalar_select %p271, %s270, 3
      %s273 = smul.addr %s272, 8
      %s274 = scalar_lea.vmem %s0, %s273
      %s275 = smul.u32 2, %s18
      %s276 = smul.u32 2, %s18
      %p277 = scmp.lt.s32.totalorder %s276, 3
      %s278 = scalar_select %p277, %s276, 3
      %s279 = smul.addr %s278, 8
      %s280 = scalar_lea.vmem %s7, %s279
      %s281 = smul.u32 2, %s18
      %v283 = vld [vmem:[%s274] sm:$0xff]
      %v284 = vld [vmem:[%s274 + $0x8] sm:$0xff]
      %285 = vadd.xlane.f32.xlu0 %v283
      %v286 = vpop.xlane.xlu0 %285
      %287 = vadd.xlane.f32.xlu0 %v284
      %v288 = vpop.xlane.xlu0 %287
      %v289 = vrcp.pop 128.0
      %v290 = vmul.f32 %v286, %v289
      %v291 = vmul.f32 %v288, %v289
      %v292 = vsub.f32 %v283, %v290
      %v293 = vsub.f32 %v284, %v291
      %v294 = vmul.f32 %v292, %v292
      %v295 = vmul.f32 %v293, %v293
      %296 = vadd.xlane.f32.xlu0 %v294
      %v297 = vpop.xlane.xlu0 %296
      %298 = vadd.xlane.f32.xlu0 %v295
      %v299 = vpop.xlane.xlu0 %298
      %v300 = vmul.f32 %v297, %v289
      %v301 = vmul.f32 %v299, %v289
      %v302 = vadd.f32 %v300, 1e-06
      %v303 = vadd.f32 %v301, 1e-06
      %v304 = vrsqrt.pop %v302
      %v305 = vrsqrt.pop %v303
      %v306 = vmul.f32 %v292, %v304
      %v307 = vmul.f32 %v293, %v305
      %v308 = vld [vmem:[%s1] sm:$0x1]
      %v310 = vlaneseq
      %v311 = vshrl.u32 %v310, 7
      %v312 = vsub.s32 0, %v311
      %v313 = vrot.slane %v308, %v312
      %v315 = vmul.f32 %v306, %v313
      %v316 = vmul.f32 %v307, %v313
      %v317 = vld [vmem:[%s2] sm:$0x1]
      %v319 = vlaneseq
      %v320 = vshrl.u32 %v319, 7
      %v321 = vsub.s32 0, %v320
      %v322 = vrot.slane %v317, %v321
      %v324 = vadd.f32 %v315, %v322
      %v325 = vadd.f32 %v316, %v322
      %v326 = vpack.c.bf16 %v325, %v324
      %v327 = vld [vmem:[%s3] sm:$0xff]
      %v328 = vld [vmem:[%s3 + $0x8] sm:$0xff]
      %v329 = vld [vmem:[%s3 + $0x10] sm:$0xff]
      %v330 = vld [vmem:[%s3 + $0x18] sm:$0xff]
      %v331 = vld [vmem:[%s3 + $0x20] sm:$0xff]
      %v332 = vld [vmem:[%s3 + $0x28] sm:$0xff]
      %v333 = vld [vmem:[%s3 + $0x30] sm:$0xff]
      %v334 = vld [vmem:[%s3 + $0x38] sm:$0xff]
      %v335 = vld [vmem:[%s3 + $0x40] sm:$0xff]
      %v336 = vld [vmem:[%s3 + $0x48] sm:$0xff]
      %v337 = vld [vmem:[%s3 + $0x50] sm:$0xff]
      %v338 = vld [vmem:[%s3 + $0x58] sm:$0xff]
      %v339 = vld [vmem:[%s3 + $0x60] sm:$0xff]
      %v340 = vld [vmem:[%s3 + $0x68] sm:$0xff]
      %v341 = vld [vmem:[%s3 + $0x70] sm:$0xff]
      %v342 = vld [vmem:[%s3 + $0x78] sm:$0xff]
      %v343 = vld [vmem:[%s4] sm:$0x3]
      %v345 = vlaneseq
      %v346 = vshrl.u32 %v345, 7
      %v347 = vsub.s32 0, %v346
      %v348 = vrot.slane %v343, %v347
      %v349 = vlaneseq
      %v350 = vshrl.u32 %v349, 7
      %v351 = vsub.s32 1, %v350
      %v352 = vrot.slane %v343, %v351
      %v371 = vunpack.c.l.b16 %v327
      %v372 = vunpack.c.h.b16 %v327
      %v373 = vunpack.c.l.b16 %v328
      %v374 = vunpack.c.h.b16 %v328
      %v375 = vunpack.c.l.b16 %v329
      %v376 = vunpack.c.h.b16 %v329
      %v377 = vunpack.c.l.b16 %v330
      %v378 = vunpack.c.h.b16 %v330
      %v379 = vunpack.c.l.b16 %v331
      %v380 = vunpack.c.h.b16 %v331
      %v381 = vunpack.c.l.b16 %v332
      %v382 = vunpack.c.h.b16 %v332
      %v383 = vunpack.c.l.b16 %v333
      %v384 = vunpack.c.h.b16 %v333
      %v385 = vunpack.c.l.b16 %v334
      %v386 = vunpack.c.h.b16 %v334
      %v387 = vunpack.c.l.b16 %v335
      %v388 = vunpack.c.h.b16 %v335
      %v389 = vunpack.c.l.b16 %v336
      %v390 = vunpack.c.h.b16 %v336
      %v391 = vunpack.c.l.b16 %v337
      %v392 = vunpack.c.h.b16 %v337
      %v393 = vunpack.c.l.b16 %v338
      %v394 = vunpack.c.h.b16 %v338
      %v395 = vunpack.c.l.b16 %v339
      %v396 = vunpack.c.h.b16 %v339
      %v397 = vunpack.c.l.b16 %v340
      %v398 = vunpack.c.h.b16 %v340
      %v399 = vunpack.c.l.b16 %v341
      %v400 = vunpack.c.h.b16 %v341
      %v401 = vunpack.c.l.b16 %v342
      %v402 = vunpack.c.h.b16 %v342
      %v403 = vpack.c.b16 %v373, %v371
      %v404 = vpack.c.b16 %v374, %v372
      %v405 = vpack.c.b16 %v377, %v375
      %v406 = vpack.c.b16 %v378, %v376
      %v407 = vpack.c.b16 %v381, %v379
      %v408 = vpack.c.b16 %v382, %v380
      %v409 = vpack.c.b16 %v385, %v383
      %v410 = vpack.c.b16 %v386, %v384
      %v411 = vpack.c.b16 %v389, %v387
      %v412 = vpack.c.b16 %v390, %v388
      %v413 = vpack.c.b16 %v393, %v391
      %v414 = vpack.c.b16 %v394, %v392
      %v415 = vpack.c.b16 %v397, %v395
      %v416 = vpack.c.b16 %v398, %v396
      %v417 = vpack.c.b16 %v401, %v399
      %v418 = vpack.c.b16 %v402, %v400
      %435 = vmatprep.subr.bf16.mxu0 %v418
      %436 = vmatpush1.bf16.msra.mxu0 %v417
      %437 = vmatprep.subr.bf16.mxu0 %v416
      %438 = vmatpush1.bf16.msra.mxu0 %v415
      %439 = vmatprep.subr.bf16.mxu0 %v414
      %440 = vmatpush1.bf16.msra.mxu0 %v413
      %441 = vmatprep.subr.bf16.mxu0 %v412
      %442 = vmatpush1.bf16.msra.mxu0 %v411
      %443 = vmatprep.subr.bf16.mxu0 %v410
      %444 = vmatpush1.bf16.msra.mxu0 %v409
      %445 = vmatprep.subr.bf16.mxu0 %v408
      %446 = vmatpush1.bf16.msra.mxu0 %v407
      %447 = vmatprep.subr.bf16.mxu0 %v406
      %448 = vmatpush1.bf16.msra.mxu0 %v405
      %449 = vmatprep.subr.bf16.mxu0 %v404
      %450 = vmatpush1.bf16.msra.mxu0 %v403
      %451 = vmatprep.subr.bf16.mxu0 0
      %452 = vmatpush2.bf16.msra.mxu0 0
      %453 = vmatprep.subr.bf16.mxu0 0
      %454 = vmatpush2.bf16.msra.mxu0 0
      %455 = vmatprep.subr.bf16.mxu0 0
      %456 = vmatpush2.bf16.msra.mxu0 0
      %457 = vmatprep.subr.bf16.mxu0 0
      %458 = vmatpush2.bf16.msra.mxu0 0
      %459 = vmatprep.subr.bf16.mxu0 0
      %460 = vmatpush2.bf16.msra.mxu0 0
      %461 = vmatprep.subr.bf16.mxu0 0
      %462 = vmatpush2.bf16.msra.mxu0 0
      %463 = vmatprep.subr.bf16.mxu0 0
      %464 = vmatpush2.bf16.msra.mxu0 0
      %465 = vmatprep.subr.bf16.mxu0 0
      %466 = vmatpush2.bf16.msra.mxu0 0
      %467 = vmatprep.mubr.bf16.mxu0 0
      %468 = vmatmul.mubr.bf16.gmra.mxu0 %v326
      %v469 = vpop.f32.mrf.mxu0
      %v470 = vadd.f32 %v348, %v469
      %v471 = vpop.f32.mrf.mxu0
      %v472 = vadd.f32 %v352, %v471
      %v473 = vpop.f32.mrf.mxu0
      %v474 = vadd.f32 %v348, %v473
      %v475 = vpop.f32.mrf.mxu0
      %v476 = vadd.f32 %v352, %v475
      %477 = vdwg.mxu0
      %v478 = vmax.f32 %v470, 0.0
      %v479 = vmax.f32 %v472, 0.0
      %v480 = vmax.f32 %v474, 0.0
      %v481 = vmax.f32 %v476, 0.0
      %v482 = vpack.c.bf16 %v480, %v478
      %v483 = vpack.c.bf16 %v481, %v479
      %v484 = vld [vmem:[%s5] sm:$0xf]
      %v485 = vld [vmem:[%s5 + $0x4] sm:$0xf]
      %v486 = vld [vmem:[%s5 + $0x8] sm:$0xf]
      %v487 = vld [vmem:[%s5 + $0xc] sm:$0xf]
      %v488 = vld [vmem:[%s5 + $0x10] sm:$0xf]
      %v489 = vld [vmem:[%s5 + $0x14] sm:$0xf]
      %v490 = vld [vmem:[%s5 + $0x18] sm:$0xf]
      %v491 = vld [vmem:[%s5 + $0x1c] sm:$0xf]
      %v492 = vld [vmem:[%s5 + $0x20] sm:$0xf]
      %v493 = vld [vmem:[%s5 + $0x24] sm:$0xf]
      %v494 = vld [vmem:[%s5 + $0x28] sm:$0xf]
      %v495 = vld [vmem:[%s5 + $0x2c] sm:$0xf]
      %v496 = vld [vmem:[%s5 + $0x30] sm:$0xf]
      %v497 = vld [vmem:[%s5 + $0x34] sm:$0xf]
      %v498 = vld [vmem:[%s5 + $0x38] sm:$0xf]
      %v499 = vld [vmem:[%s5 + $0x3c] sm:$0xf]
      %v500 = vld [vmem:[%s5 + $0x40] sm:$0xf]
      %v501 = vld [vmem:[%s5 + $0x44] sm:$0xf]
      %v502 = vld [vmem:[%s5 + $0x48] sm:$0xf]
      %v503 = vld [vmem:[%s5 + $0x4c] sm:$0xf]
      %v504 = vld [vmem:[%s5 + $0x50] sm:$0xf]
      %v505 = vld [vmem:[%s5 + $0x54] sm:$0xf]
      %v506 = vld [vmem:[%s5 + $0x58] sm:$0xf]
      %v507 = vld [vmem:[%s5 + $0x5c] sm:$0xf]
      %v508 = vld [vmem:[%s5 + $0x60] sm:$0xf]
      %v509 = vld [vmem:[%s5 + $0x64] sm:$0xf]
      %v510 = vld [vmem:[%s5 + $0x68] sm:$0xf]
      %v511 = vld [vmem:[%s5 + $0x6c] sm:$0xf]
      %v512 = vld [vmem:[%s5 + $0x70] sm:$0xf]
      %v513 = vld [vmem:[%s5 + $0x74] sm:$0xf]
      %v514 = vld [vmem:[%s5 + $0x78] sm:$0xf]
      %v515 = vld [vmem:[%s5 + $0x7c] sm:$0xf]
      %v516 = vld [vmem:[%s6] sm:$0x1]
      %v518 = vlaneseq
      %v519 = vshrl.u32 %v518, 7
      %v520 = vsub.s32 0, %v519
      %v521 = vrot.slane %v516, %v520
      %v555 = vunpack.c.l.b16 %v484
      %v556 = vunpack.c.l.b16 %v485
      %v557 = vunpack.c.l.b16 %v486
      %v558 = vunpack.c.l.b16 %v487
      %v559 = vunpack.c.l.b16 %v488
      %v560 = vunpack.c.l.b16 %v489
      %v561 = vunpack.c.l.b16 %v490
      %v562 = vunpack.c.l.b16 %v491
      %v563 = vunpack.c.l.b16 %v492
      %v564 = vunpack.c.l.b16 %v493
      %v565 = vunpack.c.l.b16 %v494
      %v566 = vunpack.c.l.b16 %v495
      %v567 = vunpack.c.l.b16 %v496
      %v568 = vunpack.c.l.b16 %v497
      %v569 = vunpack.c.l.b16 %v498
      %v570 = vunpack.c.l.b16 %v499
      %v571 = vunpack.c.l.b16 %v500
      %v572 = vunpack.c.l.b16 %v501
      %v573 = vunpack.c.l.b16 %v502
      %v574 = vunpack.c.l.b16 %v503
      %v575 = vunpack.c.l.b16 %v504
      %v576 = vunpack.c.l.b16 %v505
      %v577 = vunpack.c.l.b16 %v506
      %v578 = vunpack.c.l.b16 %v507
      %v579 = vunpack.c.l.b16 %v508
      %v580 = vunpack.c.l.b16 %v509
      %v581 = vunpack.c.l.b16 %v510
      %v582 = vunpack.c.l.b16 %v511
      %v583 = vunpack.c.l.b16 %v512
      %v584 = vunpack.c.l.b16 %v513
      %v585 = vunpack.c.l.b16 %v514
      %v586 = vunpack.c.l.b16 %v515
      %v587 = vpack.c.b16 %v556, %v555
      %v588 = vpack.c.b16 %v558, %v557
      %v589 = vpack.c.b16 %v560, %v559
      %v590 = vpack.c.b16 %v562, %v561
      %v591 = vpack.c.b16 %v564, %v563
      %v592 = vpack.c.b16 %v566, %v565
      %v593 = vpack.c.b16 %v568, %v567
      %v594 = vpack.c.b16 %v570, %v569
      %v595 = vpack.c.b16 %v572, %v571
      %v596 = vpack.c.b16 %v574, %v573
      %v597 = vpack.c.b16 %v576, %v575
      %v598 = vpack.c.b16 %v578, %v577
      %v599 = vpack.c.b16 %v580, %v579
      %v600 = vpack.c.b16 %v582, %v581
      %v601 = vpack.c.b16 %v584, %v583
      %v602 = vpack.c.b16 %v586, %v585
      %619 = vmatprep.subr.bf16.mxu0 0
      %620 = vmatpush1.bf16.msra.mxu0 %v594
      %621 = vmatprep.subr.bf16.mxu0 0
      %622 = vmatpush1.bf16.msra.mxu0 %v593
      %623 = vmatprep.subr.bf16.mxu0 0
      %624 = vmatpush1.bf16.msra.mxu0 %v592
      %625 = vmatprep.subr.bf16.mxu0 0
      %626 = vmatpush1.bf16.msra.mxu0 %v591
      %627 = vmatprep.subr.bf16.mxu0 0
      %628 = vmatpush1.bf16.msra.mxu0 %v590
      %629 = vmatprep.subr.bf16.mxu0 0
      %630 = vmatpush1.bf16.msra.mxu0 %v589
      %631 = vmatprep.subr.bf16.mxu0 0
      %632 = vmatpush1.bf16.msra.mxu0 %v588
      %633 = vmatprep.subr.bf16.mxu0 0
      %634 = vmatpush1.bf16.msra.mxu0 %v587
      %635 = vmatprep.subr.bf16.mxu0 0
      %636 = vmatpush2.bf16.msra.mxu0 %v602
      %637 = vmatprep.subr.bf16.mxu0 0
      %638 = vmatpush2.bf16.msra.mxu0 %v601
      %639 = vmatprep.subr.bf16.mxu0 0
      %640 = vmatpush2.bf16.msra.mxu0 %v600
      %641 = vmatprep.subr.bf16.mxu0 0
      %642 = vmatpush2.bf16.msra.mxu0 %v599
      %643 = vmatprep.subr.bf16.mxu0 0
      %644 = vmatpush2.bf16.msra.mxu0 %v598
      %645 = vmatprep.subr.bf16.mxu0 0
      %646 = vmatpush2.bf16.msra.mxu0 %v597
      %647 = vmatprep.subr.bf16.mxu0 0
      %648 = vmatpush2.bf16.msra.mxu0 %v596
      %649 = vmatprep.subr.bf16.mxu0 0
      %650 = vmatpush2.bf16.msra.mxu0 %v595
      %651 = vmatprep.mubr.bf16.mxu0 %v483
      %652 = vmatmul.mubr.bf16.gmra.mxu0 %v482
      %v653 = vpop.f32.mrf.mxu0
      %v654 = vadd.f32 %v521, %v653
      %v655 = vpop.f32.mrf.mxu0
      %v656 = vpop.f32.mrf.mxu0
      %v657 = vadd.f32 %v521, %v656
      %v658 = vpop.f32.mrf.mxu0
      %659 = vdwg.mxu0
      %v660 = vadd.f32 %v654, %v283
      %v661 = vadd.f32 %v657, %v284
      %662 = vst [vmem:[%s280] sm:$0xff] %v660
      %663 = vst [vmem:[%s280 + $0x8] sm:$0xff] %v661
      %s664 = smul.u32 2, %s18
      %p665 = scmp.lt.s32.totalorder %s664, 3
      %s666 = scalar_select %p665, %s664, 3
      %s667 = smul.addr %s666, 8
      %s668 = scalar_lea.vmem %s7, %s667
      // Predicated region
      $region49: #{transformer_forward.23} parent=47 // pred_check
        %p669 = pneg %p188
      $region50: #{transformer_forward.23} parent=47 // pred_check_branch
        %671 = sbr.rel (%p669) target = $region52
      $region51: #{transformer_forward.23} parent=47 // pred_region
        %s672 = smul.u32 2, %s18
      $region52: #{transformer_forward.23} parent=47 // pred_fallthru
        _
    $region48: #{transformer_forward.23} parent=5 // pred_fallthru
      _
    %p673 = scmp.le.s32.totalorder 2, %s13
    // Predicated region
    $region53: #{transformer_forward.23} parent=5 // pred_check
      %p674 = pneg %p673
    $region54: #{transformer_forward.23} parent=5 // pred_check_branch
      %676 = sbr.rel (%p674) target = $region56
    $region55: #{transformer_forward.23} parent=5 // pred_region
      %s677 = ssub.s32 %s13, 2
      // Predicated region
      $region57: #{transformer_forward.23} parent=55 // pred_check
        %p678 = pneg %p194
      $region58: #{transformer_forward.23} parent=55 // pred_check_branch
        %680 = sbr.rel (%p678) target = $region60
      $region59: #{transformer_forward.23} parent=55 // pred_region
        %s681 = smul.u32 2, %s19
        %p682 = scmp.lt.s32.totalorder %s681, 3
        %s683 = scalar_select %p682, %s681, 3
        %s684 = smul.addr %s683, 8
        %s685 = scalar_lea.vmem %s7, %s684
      $region60: #{transformer_forward.23} parent=55 // pred_fallthru
        _
    $region56: #{transformer_forward.23} parent=5 // pred_fallthru
      _
  $region6: #{transformer_forward.23} parent=0 // loop_footer
    %s17 = sadd.s32 1, %s13
  $region7: #{transformer_forward.23} parent=0 // loop_footer_branch
    %12 = sbr.rel target = $region3
  $region8: #{transformer_forward.23} parent=0 // loop_exit
    _

// kernel: transformer_forward.31
$region0: #{transformer_forward.31}
  #allocation0 [shape = 'u32[]', space=smem, size = 0x4, offset = 0x4, fixed_abs, tag = 'smem constant byte address 0x4 - core index']
  #allocation1 [shape = 'u32[144,128]{1,0:T(1,128)}', space=vmem, size = 0x12000, scoped, tag = 'internal scratch']
  %s0 = inlined_call_operand.vmem [shape: f32[32,128], index: 0, kind: input, shape index: {}]
  %s1 = inlined_call_operand.vmem [shape: bf16[128,128], index: 1, kind: input, shape index: {}]
  %s2 = inlined_call_operand.vmem [shape: bf16[128,128], index: 2, kind: input, shape index: {}]
  %s3 = inlined_call_operand.vmem [shape: bf16[32,128], index: 3, kind: output, shape index: {0}]
  %s4 = inlined_call_operand.vmem [shape: bf16[32,128], index: 4, kind: output, shape index: {1}]
  %5 = xla_tuple %s3, %s4
  %s6 = sld [smem:[#allocation0]]
  $region53: #{transformer_forward.31} parent=0
    _
  %s8 = ssub.s32 1, %s6
  %s9 = scalar_select 0, %s8, %s6
  loop: start=0, step=1, limit=4
  $region2: #{transformer_forward.31} parent=0 // loop_pre_header
    _
  $region3: #{transformer_forward.31} parent=0 // loop_header
    %s11 = sphi 0, %s15
    %p12 = scmp.ge.s32.totalorder %s11, 4
    %s21 = sphi 0, %s23
    %s24 = sphi 0, %s21
    %s25 = sphi 0, %s24
    %s41 = sphi 0, %s25
    %s45 = sphi 0, %s45
    %s47 = sphi 0, %s45
    %s48 = sphi 0, %s47
    %s62 = sphi 0, %s48
    %s66 = sphi 0, %s66
    %s68 = sphi 0, %s66
    %s69 = sphi 0, %s68
    %s83 = sphi 0, %s69
    %s89 = sphi 0, %s91
    %s92 = sphi 0, %s89
    %s93 = sphi 0, %s92
    %s109 = sphi 0, %s93
    %s115 = sphi 0, %s117
    %s118 = sphi 0, %s115
    %s119 = sphi 0, %s118
    %s135 = sphi 0, %s119
  $region4: #{transformer_forward.31} parent=0 // loop_header_branch
    %14 = sbr.rel (%p12) target = $region8
  $region5: #{transformer_forward.31} parent=0 // loop_body
    %s16 = ssub.s32 %s11, 1
    %s17 = ssub.s32 %s11, 2
    %s18 = sadd.s32 %s11, 1
    %s19 = ssub.s32 %s11, %s18
    %p20 = scmp.eq.s32.totalorder %s19, 0
    %s22 = sadd.s32 %s21, 1
    %s23 = scalar_select %p20, %s21, %s22
    %p26 = pneg %p20
    %p27 = scmp.eq.s32.totalorder %s11, 1
    %p28 = por %p26, %p27
    %p29 = scmp.ne.s32.totalorder %s21, %s24
    %p30 = scmp.eq.s32.totalorder %s11, 0
    %p31 = por %p29, %p30
    %p32 = scmp.ne.s32.totalorder %s21, %s24
    %p33 = scmp.eq.s32.totalorder %s16, 1
    %p34 = por %p32, %p33
    %p35 = scmp.ne.s32.totalorder %s24, %s25
    %p36 = scmp.eq.s32.totalorder %s16, 0
    %p37 = por %p35, %p36
    %p38 = scmp.ne.s32.totalorder %s24, %s25
    %p39 = scmp.eq.s32.totalorder %s17, 1
    %p40 = por %p38, %p39
    %p42 = scmp.ne.s32.totalorder %s25, %s41
    %p43 = scmp.eq.s32.totalorder %s17, 0
    %p44 = por %p42, %p43
    %s46 = sadd.s32 %s45, 1
    %p49 = scmp.eq.s32.totalorder %s11, 1
    %p50 = scmp.ne.s32.totalorder %s45, %s47
    %p51 = scmp.eq.s32.totalorder %s11, 0
    %p52 = por %p50, %p51
    %p53 = scmp.ne.s32.totalorder %s45, %s47
    %p54 = scmp.eq.s32.totalorder %s16, 1
    %p55 = por %p53, %p54
    %p56 = scmp.ne.s32.totalorder %s47, %s48
    %p57 = scmp.eq.s32.totalorder %s16, 0
    %p58 = por %p56, %p57
    %p59 = scmp.ne.s32.totalorder %s47, %s48
    %p60 = scmp.eq.s32.totalorder %s17, 1
    %p61 = por %p59, %p60
    %p63 = scmp.ne.s32.totalorder %s48, %s62
    %p64 = scmp.eq.s32.totalorder %s17, 0
    %p65 = por %p63, %p64
    %s67 = sadd.s32 %s66, 1
    %p70 = scmp.eq.s32.totalorder %s11, 1
    %p71 = scmp.ne.s32.totalorder %s66, %s68
    %p72 = scmp.eq.s32.totalorder %s11, 0
    %p73 = por %p71, %p72
    %p74 = scmp.ne.s32.totalorder %s66, %s68
    %p75 = scmp.eq.s32.totalorder %s16, 1
    %p76 = por %p74, %p75
    %p77 = scmp.ne.s32.totalorder %s68, %s69
    %p78 = scmp.eq.s32.totalorder %s16, 0
    %p79 = por %p77, %p78
    %p80 = scmp.ne.s32.totalorder %s68, %s69
    %p81 = scmp.eq.s32.totalorder %s17, 1
    %p82 = por %p80, %p81
    %p84 = scmp.ne.s32.totalorder %s69, %s83
    %p85 = scmp.eq.s32.totalorder %s17, 0
    %p86 = por %p84, %p85
    %s87 = ssub.s32 %s11, %s18
    %p88 = scmp.eq.s32.totalorder %s87, 0
    %s90 = sadd.s32 %s89, 1
    %s91 = scalar_select %p88, %s89, %s90
    %p94 = pneg %p88
    %p95 = scmp.eq.s32.totalorder %s11, 1
    %p96 = por %p94, %p95
    %p97 = scmp.ne.s32.totalorder %s89, %s92
    %p98 = scmp.eq.s32.totalorder %s11, 0
    %p99 = por %p97, %p98
    %p100 = scmp.ne.s32.totalorder %s89, %s92
    %p101 = scmp.eq.s32.totalorder %s16, 1
    %p102 = por %p100, %p101
    %p103 = scmp.ne.s32.totalorder %s92, %s93
    %p104 = scmp.eq.s32.totalorder %s16, 0
    %p105 = por %p103, %p104
    %p106 = scmp.ne.s32.totalorder %s92, %s93
    %p107 = scmp.eq.s32.totalorder %s17, 1
    %p108 = por %p106, %p107
    %p110 = scmp.ne.s32.totalorder %s93, %s109
    %p111 = scmp.eq.s32.totalorder %s17, 0
    %p112 = por %p110, %p111
    %s113 = ssub.s32 %s11, %s18
    %p114 = scmp.eq.s32.totalorder %s113, 0
    %s116 = sadd.s32 %s115, 1
    %s117 = scalar_select %p114, %s115, %s116
    %p120 = pneg %p114
    %p121 = scmp.eq.s32.totalorder %s11, 1
    %p122 = por %p120, %p121
    %p123 = scmp.ne.s32.totalorder %s115, %s118
    %p124 = scmp.eq.s32.totalorder %s11, 0
    %p125 = por %p123, %p124
    %p126 = scmp.ne.s32.totalorder %s115, %s118
    %p127 = scmp.eq.s32.totalorder %s16, 1
    %p128 = por %p126, %p127
    %p129 = scmp.ne.s32.totalorder %s118, %s119
    %p130 = scmp.eq.s32.totalorder %s16, 0
    %p131 = por %p129, %p130
    %p132 = scmp.ne.s32.totalorder %s118, %s119
    %p133 = scmp.eq.s32.totalorder %s17, 1
    %p134 = por %p132, %p133
    %p136 = scmp.ne.s32.totalorder %s119, %s135
    %p137 = scmp.eq.s32.totalorder %s17, 0
    %p138 = por %p136, %p137
    %p139 = scmp.le.s32.totalorder 1, %s11
    %p140 = scmp.lt.s32.totalorder %s11, 3
    %p141 = pnand %p139, %p140
    %p142 = pneg %p141
    // Predicated region
    $region9: #{transformer_forward.31} parent=5 // pred_check
      _
    $region10: #{transformer_forward.31} parent=5 // pred_check_branch
      %144 = sbr.rel (%p141) target = $region12
    $region11: #{transformer_forward.31} parent=5 // pred_region
      %s145 = ssub.s32 %s11, 1
      // Predicated region
      $region13: #{transformer_forward.31} parent=11 // pred_check
        %p146 = pneg %p58
      $region14: #{transformer_forward.31} parent=11 // pred_check_branch
        %148 = sbr.rel (%p146) target = $region16
      $region15: #{transformer_forward.31} parent=11 // pred_region
        _
      $region16: #{transformer_forward.31} parent=11 // pred_fallthru
        _
      // Predicated region
      $region17: #{transformer_forward.31} parent=11 // pred_check
        %p149 = pneg %p79
      $region18: #{transformer_forward.31} parent=11 // pred_check_branch
        %151 = sbr.rel (%p149) target = $region20
      $region19: #{transformer_forward.31} parent=11 // pred_region
        _
      $region20: #{transformer_forward.31} parent=11 // pred_fallthru
        _
    $region12: #{transformer_forward.31} parent=5 // pred_fallthru
      _
    %p152 = scmp.lt.s32.totalorder %s11, 2
    // Predicated region
    $region21: #{transformer_forward.31} parent=5 // pred_check
      %p153 = pneg %p152
    $region22: #{transformer_forward.31} parent=5 // pred_check_branch
      %155 = sbr.rel (%p153) target = $region24
    $region23: #{transformer_forward.31} parent=5 // pred_region
      // Predicated region
      $region25: #{transformer_forward.31} parent=23 // pred_check
        %p156 = pneg %p31
      $region26: #{transformer_forward.31} parent=23 // pred_check_branch
        %158 = sbr.rel (%p156) target = $region28
      $region27: #{transformer_forward.31} parent=23 // pred_region
        %s159 = smul.u32 2, %s11
        %p160 = scmp.lt.s32.totalorder %s159, 3
        %s161 = scalar_select %p160, %s159, 3
        %s162 = smul.addr %s161, 8
        %s163 = scalar_lea.vmem %s0, %s162
        %s164 = smul.u32 2, %s11
      $region28: #{transformer_forward.31} parent=23 // pred_fallthru
        _
    $region24: #{transformer_forward.31} parent=5 // pred_fallthru
      _
    %p165 = scmp.le.s32.totalorder 1, %s11
    %p166 = scmp.lt.s32.totalorder %s11, 3
    %p167 = pnand %p165, %p166
    %p168 = pneg %p167
    // Predicated region
    $region29: #{transformer_forward.31} parent=5 // pred_check
      _
    $region30: #{transformer_forward.31} parent=5 // pred_check_branch
      %170 = sbr.rel (%p167) target = $region32
    $region31: #{transformer_forward.31} parent=5 // pred_region
      %s171 = ssub.s32 %s11, 1
      %s172 = smul.u32 2, %s16
      %p173 = scmp.lt.s32.totalorder %s172, 3
      %s174 = scalar_select %p173, %s172, 3
      %s175 = smul.addr %s174, 8
      %s176 = scalar_lea.vmem %s0, %s175
      %p177 = pneg %p37
      %p178 = pneg %p34
      %p179 = pneg %p58
      %p180 = pneg %p55
      %p181 = pneg %p79
      %p182 = pneg %p76
      %p183 = pneg %p105
      %p184 = pneg %p102
      %s185 = smul.u32 2, %s16
      %p186 = scmp.lt.s32.totalorder %s185, 3
      %s187 = scalar_select %p186, %s185, 3
      %s188 = smul.addr %s187, 4
      %s189 = scalar_lea.vmem %s3, %s188
      %p190 = pneg %p131
      %p191 = pneg %p128
      %s192 = smul.u32 2, %s16
      %p193 = scmp.lt.s32.totalorder %s192, 3
      %s194 = scalar_select %p193, %s192, 3
      %s195 = smul.addr %s194, 4
      %s196 = scalar_lea.vmem %s4, %s195
      %s197 = smul.u32 2, %s16
      %p198 = scmp.lt.s32.totalorder %s197, 3
      %s199 = scalar_select %p198, %s197, 3
      %s200 = smul.addr %s199, 8
      %s201 = scalar_lea.vmem %s0, %s200
      %s202 = smul.u32 2, %s16
      %s203 = smul.u32 2, %s16
      %p204 = scmp.lt.s32.totalorder %s203, 3
      %s205 = scalar_select %p204, %s203, 3
      %s206 = smul.addr %s205, 4
      %s207 = scalar_lea.vmem %s3, %s206
      %s208 = smul.u32 2, %s16
      %s209 = smul.u32 2, %s16
      %p210 = scmp.lt.s32.totalorder %s209, 3
      %s211 = scalar_select %p210, %s209, 3
      %s212 = smul.addr %s211, 4
      %s213 = scalar_lea.vmem %s4, %s212
      %s214 = smul.u32 2, %s16
      %v216 = vld [vmem:[%s201] sm:$0xff]
      %v217 = vld [vmem:[%s201 + $0x8] sm:$0xff]
      %v218 = vpack.c.bf16 %v217, %v216
      %v219 = vld [vmem:[%s1] sm:$0xf]
      %v220 = vld [vmem:[%s1 + $0x4] sm:$0xf]
      %v221 = vld [vmem:[%s1 + $0x8] sm:$0xf]
      %v222 = vld [vmem:[%s1 + $0xc] sm:$0xf]
      %v223 = vld [vmem:[%s1 + $0x10] sm:$0xf]
      %v224 = vld [vmem:[%s1 + $0x14] sm:$0xf]
      %v225 = vld [vmem:[%s1 + $0x18] sm:$0xf]
      %v226 = vld [vmem:[%s1 + $0x1c] sm:$0xf]
      %v227 = vld [vmem:[%s1 + $0x20] sm:$0xf]
      %v228 = vld [vmem:[%s1 + $0x24] sm:$0xf]
      %v229 = vld [vmem:[%s1 + $0x28] sm:$0xf]
      %v230 = vld [vmem:[%s1 + $0x2c] sm:$0xf]
      %v231 = vld [vmem:[%s1 + $0x30] sm:$0xf]
      %v232 = vld [vmem:[%s1 + $0x34] sm:$0xf]
      %v233 = vld [vmem:[%s1 + $0x38] sm:$0xf]
      %v234 = vld [vmem:[%s1 + $0x3c] sm:$0xf]
      %v251 = vunpack.c.l.b16 %v219
      %v252 = vunpack.c.l.b16 %v220
      %v253 = vunpack.c.l.b16 %v221
      %v254 = vunpack.c.l.b16 %v222
      %v255 = vunpack.c.l.b16 %v223
      %v256 = vunpack.c.l.b16 %v224
      %v257 = vunpack.c.l.b16 %v225
      %v258 = vunpack.c.l.b16 %v226
      %v259 = vunpack.c.l.b16 %v227
      %v260 = vunpack.c.l.b16 %v228
      %v261 = vunpack.c.l.b16 %v229
      %v262 = vunpack.c.l.b16 %v230
      %v263 = vunpack.c.l.b16 %v231
      %v264 = vunpack.c.l.b16 %v232
      %v265 = vunpack.c.l.b16 %v233
      %v266 = vunpack.c.l.b16 %v234
      %v267 = vpack.c.b16 %v252, %v251
      %v268 = vpack.c.b16 %v254, %v253
      %v269 = vpack.c.b16 %v256, %v255
      %v270 = vpack.c.b16 %v258, %v257
      %v271 = vpack.c.b16 %v260, %v259
      %v272 = vpack.c.b16 %v262, %v261
      %v273 = vpack.c.b16 %v264, %v263
      %v274 = vpack.c.b16 %v266, %v265
      %283 = vmatprep.subr.bf16.mxu0 0
      %284 = vmatpush1.bf16.msra.mxu0 %v274
      %285 = vmatprep.subr.bf16.mxu0 0
      %286 = vmatpush1.bf16.msra.mxu0 %v273
      %287 = vmatprep.subr.bf16.mxu0 0
      %288 = vmatpush1.bf16.msra.mxu0 %v272
      %289 = vmatprep.subr.bf16.mxu0 0
      %290 = vmatpush1.bf16.msra.mxu0 %v271
      %291 = vmatprep.subr.bf16.mxu0 0
      %292 = vmatpush1.bf16.msra.mxu0 %v270
      %293 = vmatprep.subr.bf16.mxu0 0
      %294 = vmatpush1.bf16.msra.mxu0 %v269
      %295 = vmatprep.subr.bf16.mxu0 0
      %296 = vmatpush1.bf16.msra.mxu0 %v268
      %297 = vmatprep.subr.bf16.mxu0 0
      %298 = vmatpush1.bf16.msra.mxu0 %v267
      %299 = vmatprep.subr.bf16.mxu0 0
      %300 = vmatpush2.bf16.msra.mxu0 0
      %301 = vmatprep.subr.bf16.mxu0 0
      %302 = vmatpush2.bf16.msra.mxu0 0
      %303 = vmatprep.subr.bf16.mxu0 0
      %304 = vmatpush2.bf16.msra.mxu0 0
      %305 = vmatprep.subr.bf16.mxu0 0
      %306 = vmatpush2.bf16.msra.mxu0 0
      %307 = vmatprep.subr.bf16.mxu0 0
      %308 = vmatpush2.bf16.msra.mxu0 0
      %309 = vmatprep.subr.bf16.mxu0 0
      %310 = vmatpush2.bf16.msra.mxu0 0
      %311 = vmatprep.subr.bf16.mxu0 0
      %312 = vmatpush2.bf16.msra.mxu0 0
      %313 = vmatprep.subr.bf16.mxu0 0
      %314 = vmatpush2.bf16.msra.mxu0 0
      %315 = vmatprep.mubr.bf16.mxu0 0
      %316 = vmatmul.mubr.bf16.gmra.mxu0 %v218
      %v317 = vpop.f32.mrf.mxu0
      %v318 = vadd.f32 0.0, %v317
      %v319 = vpop.f32.mrf.mxu0
      %v320 = vpop.f32.mrf.mxu0
      %v321 = vadd.f32 0.0, %v320
      %v322 = vpop.f32.mrf.mxu0
      %323 = vdwg.mxu0
      %v324 = vpack.c.bf16 %v321, %v318
      %v326 = vunpack.c.l.b16 %v324
      %v327 = vunpack.c.h.b16 %v324
      %v328 = vpack.c.b16 %v326, %v326
      %v329 = vpack.c.b16 %v327, %v327
      %332 = vst [vmem:[%s207] sm:$0xf] %v328
      %333 = vst [vmem:[%s207 + $0x4] sm:$0xf] %v329
      %v334 = vld [vmem:[%s2] sm:$0xf]
      %v335 = vld [vmem:[%s2 + $0x4] sm:$0xf]
      %v336 = vld [vmem:[%s2 + $0x8] sm:$0xf]
      %v337 = vld [vmem:[%s2 + $0xc] sm:$0xf]
      %v338 = vld [vmem:[%s2 + $0x10] sm:$0xf]
      %v339 = vld [vmem:[%s2 + $0x14] sm:$0xf]
      %v340 = vld [vmem:[%s2 + $0x18] sm:$0xf]
      %v341 = vld [vmem:[%s2 + $0x1c] sm:$0xf]
      %v342 = vld [vmem:[%s2 + $0x20] sm:$0xf]
      %v343 = vld [vmem:[%s2 + $0x24] sm:$0xf]
      %v344 = vld [vmem:[%s2 + $0x28] sm:$0xf]
      %v345 = vld [vmem:[%s2 + $0x2c] sm:$0xf]
      %v346 = vld [vmem:[%s2 + $0x30] sm:$0xf]
      %v347 = vld [vmem:[%s2 + $0x34] sm:$0xf]
      %v348 = vld [vmem:[%s2 + $0x38] sm:$0xf]
      %v349 = vld [vmem:[%s2 + $0x3c] sm:$0xf]
      %v366 = vunpack.c.l.b16 %v334
      %v367 = vunpack.c.l.b16 %v335
      %v368 = vunpack.c.l.b16 %v336
      %v369 = vunpack.c.l.b16 %v337
      %v370 = vunpack.c.l.b16 %v338
      %v371 = vunpack.c.l.b16 %v339
      %v372 = vunpack.c.l.b16 %v340
      %v373 = vunpack.c.l.b16 %v341
      %v374 = vunpack.c.l.b16 %v342
      %v375 = vunpack.c.l.b16 %v343
      %v376 = vunpack.c.l.b16 %v344
      %v377 = vunpack.c.l.b16 %v345
      %v378 = vunpack.c.l.b16 %v346
      %v379 = vunpack.c.l.b16 %v347
      %v380 = vunpack.c.l.b16 %v348
      %v381 = vunpack.c.l.b16 %v349
      %v382 = vpack.c.b16 %v367, %v366
      %v383 = vpack.c.b16 %v369, %v368
      %v384 = vpack.c.b16 %v371, %v370
      %v385 = vpack.c.b16 %v373, %v372
      %v386 = vpack.c.b16 %v375, %v374
      %v387 = vpack.c.b16 %v377, %v376
      %v388 = vpack.c.b16 %v379, %v378
      %v389 = vpack.c.b16 %v381, %v380
      %398 = vmatprep.subr.bf16.mxu0 0
      %399 = vmatpush1.bf16.msra.mxu0 %v389
      %400 = vmatprep.subr.bf16.mxu0 0
      %401 = vmatpush1.bf16.msra.mxu0 %v388
      %402 = vmatprep.subr.bf16.mxu0 0
      %403 = vmatpush1.bf16.msra.mxu0 %v387
      %404 = vmatprep.subr.bf16.mxu0 0
      %405 = vmatpush1.bf16.msra.mxu0 %v386
      %406 = vmatprep.subr.bf16.mxu0 0
      %407 = vmatpush1.bf16.msra.mxu0 %v385
      %408 = vmatprep.subr.bf16.mxu0 0
      %409 = vmatpush1.bf16.msra.mxu0 %v384
      %410 = vmatprep.subr.bf16.mxu0 0
      %411 = vmatpush1.bf16.msra.mxu0 %v383
      %412 = vmatprep.subr.bf16.mxu0 0
      %413 = vmatpush1.bf16.msra.mxu0 %v382
      %414 = vmatprep.subr.bf16.mxu0 0
      %415 = vmatpush2.bf16.msra.mxu0 0
      %416 = vmatprep.subr.bf16.mxu0 0
      %417 = vmatpush2.bf16.msra.mxu0 0
      %418 = vmatprep.subr.bf16.mxu0 0
      %419 = vmatpush2.bf16.msra.mxu0 0
      %420 = vmatprep.subr.bf16.mxu0 0
      %421 = vmatpush2.bf16.msra.mxu0 0
      %422 = vmatprep.subr.bf16.mxu0 0
      %423 = vmatpush2.bf16.msra.mxu0 0
      %424 = vmatprep.subr.bf16.mxu0 0
      %425 = vmatpush2.bf16.msra.mxu0 0
      %426 = vmatprep.subr.bf16.mxu0 0
      %427 = vmatpush2.bf16.msra.mxu0 0
      %428 = vmatprep.subr.bf16.mxu0 0
      %429 = vmatpush2.bf16.msra.mxu0 0
      %430 = vmatprep.mubr.bf16.mxu0 0
      %431 = vmatmul.mubr.bf16.gmra.mxu0 %v218
      %v432 = vpop.f32.mrf.mxu0
      %v433 = vadd.f32 0.0, %v432
      %v434 = vpop.f32.mrf.mxu0
      %v435 = vpop.f32.mrf.mxu0
      %v436 = vadd.f32 0.0, %v435
      %v437 = vpop.f32.mrf.mxu0
      %438 = vdwg.mxu0
      %v439 = vpack.c.bf16 %v436, %v433
      %v441 = vunpack.c.l.b16 %v439
      %v442 = vunpack.c.h.b16 %v439
      %v443 = vpack.c.b16 %v441, %v441
      %v444 = vpack.c.b16 %v442, %v442
      %447 = vst [vmem:[%s213] sm:$0xf] %v443
      %448 = vst [vmem:[%s213 + $0x4] sm:$0xf] %v444
      %s449 = smul.u32 2, %s16
      %p450 = scmp.lt.s32.totalorder %s449, 3
      %s451 = scalar_select %p450, %s449, 3
      %s452 = smul.addr %s451, 4
      %s453 = scalar_lea.vmem %s3, %s452
      %s454 = smul.u32 2, %s16
      %p455 = scmp.lt.s32.totalorder %s454, 3
      %s456 = scalar_select %p455, %s454, 3
      %s457 = smul.addr %s456, 4
      %s458 = scalar_lea.vmem %s4, %s457
      // Predicated region
      $region33: #{transformer_forward.31} parent=31 // pred_check
        %p459 = pneg %p102
      $region34: #{transformer_forward.31} parent=31 // pred_check_branch
        %461 = sbr.rel (%p459) target = $region36
      $region35: #{transformer_forward.31} parent=31 // pred_region
        %s462 = smul.u32 2, %s16
      $region36: #{transformer_forward.31} parent=31 // pred_fallthru
        _
      // Predicated region
      $region37: #{transformer_forward.31} parent=31 // pred_check
        %p463 = pneg %p128
      $region38: #{transformer_forward.31} parent=31 // pred_check_branch
        %465 = sbr.rel (%p463) target = $region40
      $region39: #{transformer_forward.31} parent=31 // pred_region
        %s466 = smul.u32 2, %s16
      $region40: #{transformer_forward.31} parent=31 // pred_fallthru
        _
    $region32: #{transformer_forward.31} parent=5 // pred_fallthru
      _
    %p467 = scmp.le.s32.totalorder 2, %s11
    // Predicated region
    $region41: #{transformer_forward.31} parent=5 // pred_check
      %p468 = pneg %p467
    $region42: #{transformer_forward.31} parent=5 // pred_check_branch
      %470 = sbr.rel (%p468) target = $region44
    $region43: #{transformer_forward.31} parent=5 // pred_region
      %s471 = ssub.s32 %s11, 2
      // Predicated region
      $region45: #{transformer_forward.31} parent=43 // pred_check
        %p472 = pneg %p108
      $region46: #{transformer_forward.31} parent=43 // pred_check_branch
        %474 = sbr.rel (%p472) target = $region48
      $region47: #{transformer_forward.31} parent=43 // pred_region
        %s475 = smul.u32 2, %s17
        %p476 = scmp.lt.s32.totalorder %s475, 3
        %s477 = scalar_select %p476, %s475, 3
        %s478 = smul.addr %s477, 4
        %s479 = scalar_lea.vmem %s3, %s478
      $region48: #{transformer_forward.31} parent=43 // pred_fallthru
        _
      // Predicated region
      $region49: #{transformer_forward.31} parent=43 // pred_check
        %p480 = pneg %p134
      $region50: #{transformer_forward.31} parent=43 // pred_check_branch
        %482 = sbr.rel (%p480) target = $region52
      $region51: #{transformer_forward.31} parent=43 // pred_region
        %s483 = smul.u32 2, %s17
        %p484 = scmp.lt.s32.totalorder %s483, 3
        %s485 = scalar_select %p484, %s483, 3
        %s486 = smul.addr %s485, 4
        %s487 = scalar_lea.vmem %s4, %s486
      $region52: #{transformer_forward.31} parent=43 // pred_fallthru
        _
    $region44: #{transformer_forward.31} parent=5 // pred_fallthru
      _
  $region6: #{transformer_forward.31} parent=0 // loop_footer
    %s15 = sadd.s32 1, %s11
  $region7: #{transformer_forward.31} parent=0 // loop_footer_branch
    %10 = sbr.rel target = $region3
  $region8: #{transformer_forward.31} parent=0 // loop_exit
    _

// kernel: transformer_forward.22
$region0: #{transformer_forward.22}
  #allocation0 [shape = 'u32[]', space=smem, size = 0x4, offset = 0x4, fixed_abs, tag = 'smem constant byte address 0x4 - core index']
  #allocation1 [shape = 'u32[144,128]{1,0:T(1,128)}', space=vmem, size = 0x12000, scoped, tag = 'internal scratch']
  %s0 = inlined_call_operand.vmem [shape: bf16[2,16,128], index: 0, kind: input, shape index: {}]
  %s1 = inlined_call_operand.vmem [shape: bf16[2,16,128], index: 1, kind: input, shape index: {}]
  %s2 = inlined_call_operand.vmem [shape: bf16[2,16,128], index: 2, kind: input, shape index: {}]
  %s3 = inlined_call_operand.vmem [shape: bf16[128,128], index: 3, kind: input, shape index: {}]
  %s4 = inlined_call_operand.vmem [shape: f32[2,16,128], index: 4, kind: input, shape index: {}]
  %s5 = inlined_call_operand.vmem [shape: f32[2,16,128], index: 5, kind: output, shape index: {}]
  %s6 = sld [smem:[#allocation0]]
  $region53: #{transformer_forward.22} parent=0
    _
  %s8 = ssub.s32 1, %s6
  %s9 = scalar_select 0, %s8, %s6
  loop: start=0, step=1, limit=4
  $region2: #{transformer_forward.22} parent=0 // loop_pre_header
    _
  $region3: #{transformer_forward.22} parent=0 // loop_header
    %s11 = sphi 0, %s15
    %p12 = scmp.ge.s32.totalorder %s11, 4
    %s18 = sphi 0, %s30
    %s19 = sphi 0, %s26
    %s20 = sphi 0, %s18
    %s21 = sphi 0, %s19
    %s22 = sphi 0, %s20
    %s23 = sphi 0, %s21
    %s35 = sphi 0, %s37
    %s38 = sphi 0, %s35
    %s39 = sphi 0, %s38
    %s55 = sphi 0, %s39
    %s61 = sphi 0, %s63
    %s64 = sphi 0, %s61
    %s65 = sphi 0, %s64
    %s81 = sphi 0, %s65
    %s87 = sphi 0, %s89
    %s90 = sphi 0, %s87
    %s91 = sphi 0, %s90
    %s107 = sphi 0, %s91
    %s111 = sphi 0, %s111
    %s113 = sphi 0, %s111
    %s114 = sphi 0, %s113
    %s128 = sphi 0, %s114
    %s136 = sphi 0, %s138
    %s139 = sphi 0, %s136
    %s140 = sphi 0, %s139
    %s156 = sphi 0, %s140
    %s164 = sphi 0, %s166
    %s167 = sphi 0, %s164
    %s168 = sphi 0, %s167
    %s184 = sphi 0, %s168
  $region4: #{transformer_forward.22} parent=0 // loop_header_branch
    %14 = sbr.rel (%p12) target = $region8
  $region5: #{transformer_forward.22} parent=0 // loop_body
    %s16 = ssub.s32 %s11, 1
    %s17 = ssub.s32 %s11, 2
    %s24 = sadd.s32 1, %s19
    %p25 = scmp.ge.s32.totalorder %s24, 1
    %s26 = scalar_select %p25, 0, %s24
    %s27 = sadd.s32 1, %s18
    %s28 = scalar_select %p25, %s27, %s18
    %p29 = scmp.ge.s32.totalorder %s28, 2
    %s30 = scalar_select %p29, 0, %s28
    %s31 = ssub.s32 %s18, %s30
    %s32 = ssub.s32 %s19, %s26
    %s33 = sor.u32 %s31, %s32
    %p34 = scmp.eq.s32.totalorder %s33, 0
    %s36 = sadd.s32 %s35, 1
    %s37 = scalar_select %p34, %s35, %s36
    %p40 = pneg %p34
    %p41 = scmp.eq.s32.totalorder %s11, 1
    %p42 = por %p40, %p41
    %p43 = scmp.ne.s32.totalorder %s35, %s38
    %p44 = scmp.eq.s32.totalorder %s11, 0
    %p45 = por %p43, %p44
    %p46 = scmp.ne.s32.totalorder %s35, %s38
    %p47 = scmp.eq.s32.totalorder %s16, 1
    %p48 = por %p46, %p47
    %p49 = scmp.ne.s32.totalorder %s38, %s39
    %p50 = scmp.eq.s32.totalorder %s16, 0
    %p51 = por %p49, %p50
    %p52 = scmp.ne.s32.totalorder %s38, %s39
    %p53 = scmp.eq.s32.totalorder %s17, 1
    %p54 = por %p52, %p53
    %p56 = scmp.ne.s32.totalorder %s39, %s55
    %p57 = scmp.eq.s32.totalorder %s17, 0
    %p58 = por %p56, %p57
    %s59 = ssub.s32 %s18, %s30
    %p60 = scmp.eq.s32.totalorder %s59, 0
    %s62 = sadd.s32 %s61, 1
    %s63 = scalar_select %p60, %s61, %s62
    %p66 = pneg %p60
    %p67 = scmp.eq.s32.totalorder %s11, 1
    %p68 = por %p66, %p67
    %p69 = scmp.ne.s32.totalorder %s61, %s64
    %p70 = scmp.eq.s32.totalorder %s11, 0
    %p71 = por %p69, %p70
    %p72 = scmp.ne.s32.totalorder %s61, %s64
    %p73 = scmp.eq.s32.totalorder %s16, 1
    %p74 = por %p72, %p73
    %p75 = scmp.ne.s32.totalorder %s64, %s65
    %p76 = scmp.eq.s32.totalorder %s16, 0
    %p77 = por %p75, %p76
    %p78 = scmp.ne.s32.totalorder %s64, %s65
    %p79 = scmp.eq.s32.totalorder %s17, 1
    %p80 = por %p78, %p79
    %p82 = scmp.ne.s32.totalorder %s65, %s81
    %p83 = scmp.eq.s32.totalorder %s17, 0
    %p84 = por %p82, %p83
    %s85 = ssub.s32 %s18, %s30
    %p86 = scmp.eq.s32.totalorder %s85, 0
    %s88 = sadd.s32 %s87, 1
    %s89 = scalar_select %p86, %s87, %s88
    %p92 = pneg %p86
    %p93 = scmp.eq.s32.totalorder %s11, 1
    %p94 = por %p92, %p93
    %p95 = scmp.ne.s32.totalorder %s87, %s90
    %p96 = scmp.eq.s32.totalorder %s11, 0
    %p97 = por %p95, %p96
    %p98 = scmp.ne.s32.totalorder %s87, %s90
    %p99 = scmp.eq.s32.totalorder %s16, 1
    %p100 = por %p98, %p99
    %p101 = scmp.ne.s32.totalorder %s90, %s91
    %p102 = scmp.eq.s32.totalorder %s16, 0
    %p103 = por %p101, %p102
    %p104 = scmp.ne.s32.totalorder %s90, %s91
    %p105 = scmp.eq.s32.totalorder %s17, 1
    %p106 = por %p104, %p105
    %p108 = scmp.ne.s32.totalorder %s91, %s107
    %p109 = scmp.eq.s32.totalorder %s17, 0
    %p110 = por %p108, %p109
    %s112 = sadd.s32 %s111, 1
    %p115 = scmp.eq.s32.totalorder %s11, 1
    %p116 = scmp.ne.s32.totalorder %s111, %s113
    %p117 = scmp.eq.s32.totalorder %s11, 0
    %p118 = por %p116, %p117
    %p119 = scmp.ne.s32.totalorder %s111, %s113
    %p120 = scmp.eq.s32.totalorder %s16, 1
    %p121 = por %p119, %p120
    %p122 = scmp.ne.s32.totalorder %s113, %s114
    %p123 = scmp.eq.s32.totalorder %s16, 0
    %p124 = por %p122, %p123
    %p125 = scmp.ne.s32.totalorder %s113, %s114
    %p126 = scmp.eq.s32.totalorder %s17, 1
    %p127 = por %p125, %p126
    %p129 = scmp.ne.s32.totalorder %s114, %s128
    %p130 = scmp.eq.s32.totalorder %s17, 0
    %p131 = por %p129, %p130
    %s132 = ssub.s32 %s18, %s30
    %s133 = ssub.s32 %s19, %s26
    %s134 = sor.u32 %s132, %s133
    %p135 = scmp.eq.s32.totalorder %s134, 0
    %s137 = sadd.s32 %s136, 1
    %s138 = scalar_select %p135, %s136, %s137
    %p141 = pneg %p135
    %p142 = scmp.eq.s32.totalorder %s11, 1
    %p143 = por %p141, %p142
    %p144 = scmp.ne.s32.totalorder %s136, %s139
    %p145 = scmp.eq.s32.totalorder %s11, 0
    %p146 = por %p144, %p145
    %p147 = scmp.ne.s32.totalorder %s136, %s139
    %p148 = scmp.eq.s32.totalorder %s16, 1
    %p149 = por %p147, %p148
    %p150 = scmp.ne.s32.totalorder %s139, %s140
    %p151 = scmp.eq.s32.totalorder %s16, 0
    %p152 = por %p150, %p151
    %p153 = scmp.ne.s32.totalorder %s139, %s140
    %p154 = scmp.eq.s32.totalorder %s17, 1
    %p155 = por %p153, %p154
    %p157 = scmp.ne.s32.totalorder %s140, %s156
    %p158 = scmp.eq.s32.totalorder %s17, 0
    %p159 = por %p157, %p158
    %s160 = ssub.s32 %s18, %s30
    %s161 = ssub.s32 %s19, %s26
    %s162 = sor.u32 %s160, %s161
    %p163 = scmp.eq.s32.totalorder %s162, 0
    %s165 = sadd.s32 %s164, 1
    %s166 = scalar_select %p163, %s164, %s165
    %p169 = pneg %p163
    %p170 = scmp.eq.s32.totalorder %s11, 1
    %p171 = por %p169, %p170
    %p172 = scmp.ne.s32.totalorder %s164, %s167
    %p173 = scmp.eq.s32.totalorder %s11, 0
    %p174 = por %p172, %p173
    %p175 = scmp.ne.s32.totalorder %s164, %s167
    %p176 = scmp.eq.s32.totalorder %s16, 1
    %p177 = por %p175, %p176
    %p178 = scmp.ne.s32.totalorder %s167, %s168
    %p179 = scmp.eq.s32.totalorder %s16, 0
    %p180 = por %p178, %p179
    %p181 = scmp.ne.s32.totalorder %s167, %s168
    %p182 = scmp.eq.s32.totalorder %s17, 1
    %p183 = por %p181, %p182
    %p185 = scmp.ne.s32.totalorder %s168, %s184
    %p186 = scmp.eq.s32.totalorder %s17, 0
    %p187 = por %p185, %p186
    %p188 = scmp.le.s32.totalorder 1, %s11
    %p189 = scmp.lt.s32.totalorder %s11, 3
    %p190 = pnand %p188, %p189
    %p191 = pneg %p190
    // Predicated region
    $region9: #{transformer_forward.22} parent=5 // pred_check
      _
    $region10: #{transformer_forward.22} parent=5 // pred_check_branch
      %193 = sbr.rel (%p190) target = $region12
    $region11: #{transformer_forward.22} parent=5 // pred_region
      %s194 = ssub.s32 %s11, 1
      // Predicated region
      $region13: #{transformer_forward.22} parent=11 // pred_check
        %p195 = pneg %p124
      $region14: #{transformer_forward.22} parent=11 // pred_check_branch
        %197 = sbr.rel (%p195) target = $region16
      $region15: #{transformer_forward.22} parent=11 // pred_region
        _
      $region16: #{transformer_forward.22} parent=11 // pred_fallthru
        _
    $region12: #{transformer_forward.22} parent=5 // pred_fallthru
      _
    %p198 = scmp.lt.s32.totalorder %s11, 2
    // Predicated region
    $region17: #{transformer_forward.22} parent=5 // pred_check
      %p199 = pneg %p198
    $region18: #{transformer_forward.22} parent=5 // pred_check_branch
      %201 = sbr.rel (%p199) target = $region20
    $region19: #{transformer_forward.22} parent=5 // pred_region
      // Predicated region
      $region21: #{transformer_forward.22} parent=19 // pred_check
        %p202 = pneg %p45
      $region22: #{transformer_forward.22} parent=19 // pred_check_branch
        %204 = sbr.rel (%p202) target = $region24
      $region23: #{transformer_forward.22} parent=19 // pred_region
        %s205 = smul.u32 2, %s19
        %p206 = scmp.lt.s32.totalorder %s18, 1
        %s207 = scalar_select %p206, %s18, 1
        %p208 = scmp.lt.s32.totalorder %s205, 1
        %s209 = scalar_select %p208, %s205, 1
        %s210 = smul.addr %s207, 2
        %s211 = sadd.s32 %s209, %s210
        %s212 = smul.addr %s211, 4
        %s213 = scalar_lea.vmem %s0, %s212
        %s214 = smul.u32 2, %s19
      $region24: #{transformer_forward.22} parent=19 // pred_fallthru
        _
      // Predicated region
      $region25: #{transformer_forward.22} parent=19 // pred_check
        %p215 = pneg %p71
      $region26: #{transformer_forward.22} parent=19 // pred_check_branch
        %217 = sbr.rel (%p215) target = $region28
      $region27: #{transformer_forward.22} parent=19 // pred_region
        %p218 = scmp.lt.s32.totalorder %s18, 1
        %s219 = scalar_select %p218, %s18, 1
        %s220 = smul.addr %s219, 2
        %s221 = smul.addr %s220, 4
        %s222 = scalar_lea.vmem %s1, %s221
      $region28: #{transformer_forward.22} parent=19 // pred_fallthru
        _
      // Predicated region
      $region29: #{transformer_forward.22} parent=19 // pred_check
        %p223 = pneg %p97
      $region30: #{transformer_forward.22} parent=19 // pred_check_branch
        %225 = sbr.rel (%p223) target = $region32
      $region31: #{transformer_forward.22} parent=19 // pred_region
        %p226 = scmp.lt.s32.totalorder %s18, 1
        %s227 = scalar_select %p226, %s18, 1
        %s228 = smul.addr %s227, 2
        %s229 = smul.addr %s228, 4
        %s230 = scalar_lea.vmem %s2, %s229
      $region32: #{transformer_forward.22} parent=19 // pred_fallthru
        _
      // Predicated region
      $region33: #{transformer_forward.22} parent=19 // pred_check
        %p231 = pneg %p146
      $region34: #{transformer_forward.22} parent=19 // pred_check_branch
        %233 = sbr.rel (%p231) target = $region36
      $region35: #{transformer_forward.22} parent=19 // pred_region
        %s234 = smul.u32 2, %s19
        %p235 = scmp.lt.s32.totalorder %s18, 1
        %s236 = scalar_select %p235, %s18, 1
        %p237 = scmp.lt.s32.totalorder %s234, 1
        %s238 = scalar_select %p237, %s234, 1
        %s239 = smul.addr %s236, 2
        %s240 = sadd.s32 %s238, %s239
        %s241 = smul.addr %s240, 8
        %s242 = scalar_lea.vmem %s4, %s241
        %s243 = smul.u32 2, %s19
      $region36: #{transformer_forward.22} parent=19 // pred_fallthru
        _
    $region20: #{transformer_forward.22} parent=5 // pred_fallthru
      _
    %p244 = scmp.le.s32.totalorder 1, %s11
    %p245 = scmp.lt.s32.totalorder %s11, 3
    %p246 = pnand %p244, %p245
    %p247 = pneg %p246
    // Predicated region
    $region37: #{transformer_forward.22} parent=5 // pred_check
      _
    $region38: #{transformer_forward.22} parent=5 // pred_check_branch
      %249 = sbr.rel (%p246) target = $region40
    $region39: #{transformer_forward.22} parent=5 // pred_region
      %s250 = ssub.s32 %s11, 1
      %s251 = smul.u32 2, %s21
      %p252 = scmp.lt.s32.totalorder %s20, 1
      %s253 = scalar_select %p252, %s20, 1
      %p254 = scmp.lt.s32.totalorder %s251, 1
      %s255 = scalar_select %p254, %s251, 1
      %s256 = smul.addr %s253, 2
      %s257 = sadd.s32 %s255, %s256
      %s258 = smul.addr %s257, 4
      %s259 = scalar_lea.vmem %s0, %s258
      %p260 = pneg %p51
      %p261 = pneg %p48
      %p262 = scmp.lt.s32.totalorder %s20, 1
      %s263 = scalar_select %p262, %s20, 1
      %s264 = smul.addr %s263, 2
      %s265 = smul.addr %s264, 4
      %s266 = scalar_lea.vmem %s1, %s265
      %p267 = pneg %p77
      %p268 = pneg %p74
      %p269 = scmp.lt.s32.totalorder %s20, 1
      %s270 = scalar_select %p269, %s20, 1
      %s271 = smul.addr %s270, 2
      %s272 = smul.addr %s271, 4
      %s273 = scalar_lea.vmem %s2, %s272
      %p274 = pneg %p103
      %p275 = pneg %p100
      %p276 = pneg %p124
      %p277 = pneg %p121
      %s278 = smul.u32 2, %s21
      %p279 = scmp.lt.s32.totalorder %s20, 1
      %s280 = scalar_select %p279, %s20, 1
      %p281 = scmp.lt.s32.totalorder %s278, 1
      %s282 = scalar_select %p281, %s278, 1
      %s283 = smul.addr %s280, 2
      %s284 = sadd.s32 %s282, %s283
      %s285 = smul.addr %s284, 8
      %s286 = scalar_lea.vmem %s4, %s285
      %p287 = pneg %p152
      %p288 = pneg %p149
      %p289 = pneg %p180
      %p290 = pneg %p177
      %s291 = smul.u32 2, %s21
      %p292 = scmp.lt.s32.totalorder %s20, 1
      %s293 = scalar_select %p292, %s20, 1
      %p294 = scmp.lt.s32.totalorder %s291, 1
      %s295 = scalar_select %p294, %s291, 1
      %s296 = smul.addr %s293, 2
      %s297 = sadd.s32 %s295, %s296
      %s298 = smul.addr %s297, 8
      %s299 = scalar_lea.vmem %s5, %s298
      %s300 = smul.u32 2, %s21
      %p301 = scmp.lt.s32.totalorder %s20, 1
      %s302 = scalar_select %p301, %s20, 1
      %p303 = scmp.lt.s32.totalorder %s300, 1
      %s304 = scalar_select %p303, %s300, 1
      %s305 = smul.addr %s302, 2
      %s306 = sadd.s32 %s304, %s305
      %s307 = smul.addr %s306, 4
      %s308 = scalar_lea.vmem %s0, %s307
      %s309 = smul.u32 2, %s21
      %p310 = scmp.lt.s32.totalorder %s20, 1
      %s311 = scalar_select %p310, %s20, 1
      %s312 = smul.addr %s311, 2
      %s313 = smul.addr %s312, 4
      %s314 = scalar_lea.vmem %s1, %s313
      %p315 = scmp.lt.s32.totalorder %s20, 1
      %s316 = scalar_select %p315, %s20, 1
      %s317 = smul.addr %s316, 2
      %s318 = smul.addr %s317, 4
      %s319 = scalar_lea.vmem %s2, %s318
      %s320 = smul.u32 2, %s21
      %p321 = scmp.lt.s32.totalorder %s20, 1
      %s322 = scalar_select %p321, %s20, 1
      %p323 = scmp.lt.s32.totalorder %s320, 1
      %s324 = scalar_select %p323, %s320, 1
      %s325 = smul.addr %s322, 2
      %s326 = sadd.s32 %s324, %s325
      %s327 = smul.addr %s326, 8
      %s328 = scalar_lea.vmem %s4, %s327
      %s329 = smul.u32 2, %s21
      %s330 = smul.u32 2, %s21
      %p331 = scmp.lt.s32.totalorder %s20, 1
      %s332 = scalar_select %p331, %s20, 1
      %p333 = scmp.lt.s32.totalorder %s330, 1
      %s334 = scalar_select %p333, %s330, 1
      %s335 = smul.addr %s332, 2
      %s336 = sadd.s32 %s334, %s335
      %s337 = smul.addr %s336, 8
      %s338 = scalar_lea.vmem %s5, %s337
      %s339 = smul.u32 2, %s21
      %v342 = vld [vmem:[%s308] sm:$0xf]
      %v343 = vld [vmem:[%s308 + $0x4] sm:$0xf]
      %v344 = vld [vmem:[%s314] sm:$0xf]
      %v345 = vld [vmem:[%s314 + $0x4] sm:$0xf]
      %v346 = vld [vmem:[%s319] sm:$0xf]
      %v347 = vld [vmem:[%s319 + $0x4] sm:$0xf]
      %v348 = vmul.bf16 %v342, 1043676725
      %v349 = vmul.bf16 %v343, 1043676725
      %v352 = vunpack.c.l.b16 %v348
      %v353 = vunpack.c.l.b16 %v349
      %v354 = vpack.c.b16 %v353, %v352
      %v357 = vunpack.c.l.b16 %v344
      %v358 = vunpack.c.l.b16 %v345
      %v359 = vpack.c.b16 %v358, %v357
      %vm360 = vcmask 261120
      %v362 = vsel %vm360, %v354, 0
      %v365 = vsel %vm360, %v359, 0
      %367 = vmatprep.subr.bf16.mxu0 0
      %368 = vmatpush1.bf16.xpose.msra.mxu0 0
      %369 = vmatprep.subr.bf16.mxu0 0
      %370 = vmatpush1.bf16.xpose.msra.mxu0 0
      %371 = vmatprep.subr.bf16.mxu0 0
      %372 = vmatpush1.bf16.xpose.msra.mxu0 0
      %373 = vmatprep.subr.bf16.mxu0 0
      %374 = vmatpush1.bf16.xpose.msra.mxu0 0
      %375 = vmatprep.subr.bf16.mxu0 0
      %376 = vmatpush1.bf16.xpose.msra.mxu0 0
      %377 = vmatprep.subr.bf16.mxu0 0
      %378 = vmatpush1.bf16.xpose.msra.mxu0 0
      %379 = vmatprep.subr.bf16.mxu0 0
      %380 = vmatpush1.bf16.xpose.msra.mxu0 0
      %381 = vmatprep.subr.bf16.mxu0 0
      %382 = vmatpush1.bf16.xpose.msra.mxu0 %v365
      %383 = vmatprep.subr.bf16.mxu0 0
      %384 = vmatpush2.bf16.xpose.msra.mxu0 0
      %385 = vmatprep.subr.bf16.mxu0 0
      %386 = vmatpush2.bf16.xpose.msra.mxu0 0
      %387 = vmatprep.subr.bf16.mxu0 0
      %388 = vmatpush2.bf16.xpose.msra.mxu0 0
      %389 = vmatprep.subr.bf16.mxu0 0
      %390 = vmatpush2.bf16.xpose.msra.mxu0 0
      %391 = vmatprep.subr.bf16.mxu0 0
      %392 = vmatpush2.bf16.xpose.msra.mxu0 0
      %393 = vmatprep.subr.bf16.mxu0 0
      %394 = vmatpush2.bf16.xpose.msra.mxu0 0
      %395 = vmatprep.subr.bf16.mxu0 0
      %396 = vmatpush2.bf16.xpose.msra.mxu0 0
      %397 = vmatprep.subr.bf16.mxu0 0
      %398 = vmatpush2.bf16.xpose.msra.mxu0 0
      %399 = vmatprep.mubr.bf16.mxu0 0
      %400 = vmatmul.mubr.bf16.gmra.mxu0 %v362
      %v401 = vpop.f32.mrf.mxu0
      %v402 = vadd.f32 0.0, %v401
      %v403 = vpop.f32.mrf.mxu0
      %v404 = vpop.f32.mrf.mxu0
      %v405 = vadd.f32 0.0, %v404
      %v406 = vpop.f32.mrf.mxu0
      %407 = vdwg.mxu0
      %vm408 = vcmask 130048
      %v409 = vsel %vm408, %v402, -inf
      %410 = vmax.xlane.f32.xlu0 %v409
      %v411 = vpop.xlane.xlu0 %410
      %v412 = vsel %vm408, %v405, -inf
      %413 = vmax.xlane.f32.xlu0 %v412
      %v414 = vpop.xlane.xlu0 %413
      %v415 = vsub.f32 %v402, %v411
      %v416 = vsub.f32 %v405, %v414
      %v417 = vmul.f32 %v415, 1.442695
      %v418 = vpow.pop %v417
      %v419 = vmul.f32 %v416, 1.442695
      %v420 = vpow.pop %v419
      %v421 = vsel %vm408, %v418, 0.0
      %422 = vadd.xlane.f32.xlu0 %v421
      %v423 = vpop.xlane.xlu0 %422
      %v424 = vsel %vm408, %v420, 0.0
      %425 = vadd.xlane.f32.xlu0 %v424
      %v426 = vpop.xlane.xlu0 %425
      %v427 = vpack.c.bf16 %v420, %v418
      %v430 = vunpack.c.l.b16 %v346
      %v431 = vunpack.c.l.b16 %v347
      %v432 = vpack.c.b16 %v431, %v430
      %v435 = vsel %vm408, %v427, 0
      %437 = vmatprep.subr.bf16.mxu0 0
      %438 = vmatpush1.bf16.msra.mxu0 0
      %439 = vmatprep.subr.bf16.mxu0 0
      %440 = vmatpush1.bf16.msra.mxu0 0
      %441 = vmatprep.subr.bf16.mxu0 0
      %442 = vmatpush1.bf16.msra.mxu0 0
      %443 = vmatprep.subr.bf16.mxu0 0
      %444 = vmatpush1.bf16.msra.mxu0 0
      %445 = vmatprep.subr.bf16.mxu0 0
      %446 = vmatpush1.bf16.msra.mxu0 0
      %447 = vmatprep.subr.bf16.mxu0 0
      %448 = vmatpush1.bf16.msra.mxu0 0
      %449 = vmatprep.subr.bf16.mxu0 0
      %450 = vmatpush1.bf16.msra.mxu0 0
      %451 = vmatprep.subr.bf16.mxu0 0
      %452 = vmatpush1.bf16.msra.mxu0 %v432
      %453 = vmatprep.subr.bf16.mxu0 0
      %454 = vmatpush2.bf16.msra.mxu0 0
      %455 = vmatprep.subr.bf16.mxu0 0
      %456 = vmatpush2.bf16.msra.mxu0 0
      %457 = vmatprep.subr.bf16.mxu0 0
      %458 = vmatpush2.bf16.msra.mxu0 0
      %459 = vmatprep.subr.bf16.mxu0 0
      %460 = vmatpush2.bf16.msra.mxu0 0
      %461 = vmatprep.subr.bf16.mxu0 0
      %462 = vmatpush2.bf16.msra.mxu0 0
      %463 = vmatprep.subr.bf16.mxu0 0
      %464 = vmatpush2.bf16.msra.mxu0 0
      %465 = vmatprep.subr.bf16.mxu0 0
      %466 = vmatpush2.bf16.msra.mxu0 0
      %467 = vmatprep.subr.bf16.mxu0 0
      %468 = vmatpush2.bf16.msra.mxu0 0
      %469 = vmatprep.mubr.bf16.mxu0 0
      %470 = vmatmul.mubr.bf16.gmra.mxu0 %v435
      %v471 = vpop.f32.mrf.mxu0
      %v472 = vadd.f32 0.0, %v471
      %v473 = vpop.f32.mrf.mxu0
      %v474 = vpop.f32.mrf.mxu0
      %v475 = vadd.f32 0.0, %v474
      %v476 = vpop.f32.mrf.mxu0
      %477 = vdwg.mxu0
      %v478 = vrcp.pop %v423
      %v479 = vrcp.pop %v426
      %v480 = vmul.f32 %v472, %v478
      %v481 = vmul.f32 %v475, %v479
      %482 = vrot.lane.b32.xlu0 %v354, 96
      %v483 = vpop.permute.xlu0 %482
      %484 = vrot.lane.b32.xlu0 %v359, 96
      %v485 = vpop.permute.xlu0 %484
      %v487 = vsel %vm360, %v483, 0
      %v490 = vsel %vm360, %v485, 0
      %492 = vmatprep.subr.bf16.mxu0 0
      %493 = vmatpush1.bf16.xpose.msra.mxu0 0
      %494 = vmatprep.subr.bf16.mxu0 0
      %495 = vmatpush1.bf16.xpose.msra.mxu0 0
      %496 = vmatprep.subr.bf16.mxu0 0
      %497 = vmatpush1.bf16.xpose.msra.mxu0 0
      %498 = vmatprep.subr.bf16.mxu0 0
      %499 = vmatpush1.bf16.xpose.msra.mxu0 0
      %500 = vmatprep.subr.bf16.mxu0 0
      %501 = vmatpush1.bf16.xpose.msra.mxu0 0
      %502 = vmatprep.subr.bf16.mxu0 0
      %503 = vmatpush1.bf16.xpose.msra.mxu0 0
      %504 = vmatprep.subr.bf16.mxu0 0
      %505 = vmatpush1.bf16.xpose.msra.mxu0 0
      %506 = vmatprep.subr.bf16.mxu0 0
      %507 = vmatpush1.bf16.xpose.msra.mxu0 %v490
      %508 = vmatprep.subr.bf16.mxu0 0
      %509 = vmatpush2.bf16.xpose.msra.mxu0 0
      %510 = vmatprep.subr.bf16.mxu0 0
      %511 = vmatpush2.bf16.xpose.msra.mxu0 0
      %512 = vmatprep.subr.bf16.mxu0 0
      %513 = vmatpush2.bf16.xpose.msra.mxu0 0
      %514 = vmatprep.subr.bf16.mxu0 0
      %515 = vmatpush2.bf16.xpose.msra.mxu0 0
      %516 = vmatprep.subr.bf16.mxu0 0
      %517 = vmatpush2.bf16.xpose.msra.mxu0 0
      %518 = vmatprep.subr.bf16.mxu0 0
      %519 = vmatpush2.bf16.xpose.msra.mxu0 0
      %520 = vmatprep.subr.bf16.mxu0 0
      %521 = vmatpush2.bf16.xpose.msra.mxu0 0
      %522 = vmatprep.subr.bf16.mxu0 0
      %523 = vmatpush2.bf16.xpose.msra.mxu0 0
      %524 = vmatprep.mubr.bf16.mxu0 0
      %525 = vmatmul.mubr.bf16.gmra.mxu0 %v487
      %v526 = vpop.f32.mrf.mxu0
      %v527 = vadd.f32 0.0, %v526
      %v528 = vpop.f32.mrf.mxu0
      %v529 = vpop.f32.mrf.mxu0
      %v530 = vadd.f32 0.0, %v529
      %v531 = vpop.f32.mrf.mxu0
      %532 = vdwg.mxu0
      %v533 = vsel %vm408, %v527, -inf
      %534 = vmax.xlane.f32.xlu0 %v533
      %v535 = vpop.xlane.xlu0 %534
      %v536 = vsel %vm408, %v530, -inf
      %537 = vmax.xlane.f32.xlu0 %v536
      %v538 = vpop.xlane.xlu0 %537
      %v539 = vsub.f32 %v527, %v535
      %v540 = vsub.f32 %v530, %v538
      %v541 = vmul.f32 %v539, 1.442695
      %v542 = vpow.pop %v541
      %v543 = vmul.f32 %v540, 1.442695
      %v544 = vpow.pop %v543
      %v545 = vsel %vm408, %v542, 0.0
      %546 = vadd.xlane.f32.xlu0 %v545
      %v547 = vpop.xlane.xlu0 %546
      %v548 = vsel %vm408, %v544, 0.0
      %549 = vadd.xlane.f32.xlu0 %v548
      %v550 = vpop.xlane.xlu0 %549
      %v551 = vpack.c.bf16 %v544, %v542
      %552 = vrot.lane.b32.xlu0 %v432, 96
      %v553 = vpop.permute.xlu0 %552
      %v556 = vsel %vm408, %v551, 0
      %558 = vmatprep.subr.bf16.mxu0 0
      %559 = vmatpush1.bf16.msra.mxu0 0
      %560 = vmatprep.subr.bf16.mxu0 0
      %561 = vmatpush1.bf16.msra.mxu0 0
      %562 = vmatprep.subr.bf16.mxu0 0
      %563 = vmatpush1.bf16.msra.mxu0 0
      %564 = vmatprep.subr.bf16.mxu0 0
      %565 = vmatpush1.bf16.msra.mxu0 0
      %566 = vmatprep.subr.bf16.mxu0 0
      %567 = vmatpush1.bf16.msra.mxu0 0
      %568 = vmatprep.subr.bf16.mxu0 0
      %569 = vmatpush1.bf16.msra.mxu0 0
      %570 = vmatprep.subr.bf16.mxu0 0
      %571 = vmatpush1.bf16.msra.mxu0 0
      %572 = vmatprep.subr.bf16.mxu0 0
      %573 = vmatpush1.bf16.msra.mxu0 %v553
      %574 = vmatprep.subr.bf16.mxu0 0
      %575 = vmatpush2.bf16.msra.mxu0 0
      %576 = vmatprep.subr.bf16.mxu0 0
      %577 = vmatpush2.bf16.msra.mxu0 0
      %578 = vmatprep.subr.bf16.mxu0 0
      %579 = vmatpush2.bf16.msra.mxu0 0
      %580 = vmatprep.subr.bf16.mxu0 0
      %581 = vmatpush2.bf16.msra.mxu0 0
      %582 = vmatprep.subr.bf16.mxu0 0
      %583 = vmatpush2.bf16.msra.mxu0 0
      %584 = vmatprep.subr.bf16.mxu0 0
      %585 = vmatpush2.bf16.msra.mxu0 0
      %586 = vmatprep.subr.bf16.mxu0 0
      %587 = vmatpush2.bf16.msra.mxu0 0
      %588 = vmatprep.subr.bf16.mxu0 0
      %589 = vmatpush2.bf16.msra.mxu0 0
      %590 = vmatprep.mubr.bf16.mxu0 0
      %591 = vmatmul.mubr.bf16.gmra.mxu0 %v556
      %v592 = vpop.f32.mrf.mxu0
      %v593 = vadd.f32 0.0, %v592
      %v594 = vpop.f32.mrf.mxu0
      %v595 = vpop.f32.mrf.mxu0
      %v596 = vadd.f32 0.0, %v595
      %v597 = vpop.f32.mrf.mxu0
      %598 = vdwg.mxu0
      %v599 = vrcp.pop %v547
      %v600 = vrcp.pop %v550
      %v601 = vmul.f32 %v593, %v599
      %v602 = vmul.f32 %v596, %v600
      %603 = vrot.lane.b32.xlu0 %v354, 64
      %v604 = vpop.permute.xlu0 %603
      %605 = vrot.lane.b32.xlu0 %v359, 64
      %v606 = vpop.permute.xlu0 %605
      %v608 = vsel %vm360, %v604, 0
      %v611 = vsel %vm360, %v606, 0
      %613 = vmatprep.subr.bf16.mxu0 0
      %614 = vmatpush1.bf16.xpose.msra.mxu0 0
      %615 = vmatprep.subr.bf16.mxu0 0
      %616 = vmatpush1.bf16.xpose.msra.mxu0 0
      %617 = vmatprep.subr.bf16.mxu0 0
      %618 = vmatpush1.bf16.xpose.msra.mxu0 0
      %619 = vmatprep.subr.bf16.mxu0 0
      %620 = vmatpush1.bf16.xpose.msra.mxu0 0
      %621 = vmatprep.subr.bf16.mxu0 0
      %622 = vmatpush1.bf16.xpose.msra.mxu0 0
      %623 = vmatprep.subr.bf16.mxu0 0
      %624 = vmatpush1.bf16.xpose.msra.mxu0 0
      %625 = vmatprep.subr.bf16.mxu0 0
      %626 = vmatpush1.bf16.xpose.msra.mxu0 0
      %627 = vmatprep.subr.bf16.mxu0 0
      %628 = vmatpush1.bf16.xpose.msra.mxu0 %v611
      %629 = vmatprep.subr.bf16.mxu0 0
      %630 = vmatpush2.bf16.xpose.msra.mxu0 0
      %631 = vmatprep.subr.bf16.mxu0 0
      %632 = vmatpush2.bf16.xpose.msra.mxu0 0
      %633 = vmatprep.subr.bf16.mxu0 0
      %634 = vmatpush2.bf16.xpose.msra.mxu0 0
      %635 = vmatprep.subr.bf16.mxu0 0
      %636 = vmatpush2.bf16.xpose.msra.mxu0 0
      %637 = vmatprep.subr.bf16.mxu0 0
      %638 = vmatpush2.bf16.xpose.msra.mxu0 0
      %639 = vmatprep.subr.bf16.mxu0 0
      %640 = vmatpush2.bf16.xpose.msra.mxu0 0
      %641 = vmatprep.subr.bf16.mxu0 0
      %642 = vmatpush2.bf16.xpose.msra.mxu0 0
      %643 = vmatprep.subr.bf16.mxu0 0
      %644 = vmatpush2.bf16.xpose.msra.mxu0 0
      %645 = vmatprep.mubr.bf16.mxu0 0
      %646 = vmatmul.mubr.bf16.gmra.mxu0 %v608
      %v647 = vpop.f32.mrf.mxu0
      %v648 = vadd.f32 0.0, %v647
      %v649 = vpop.f32.mrf.mxu0
      %v650 = vpop.f32.mrf.mxu0
      %v651 = vadd.f32 0.0, %v650
      %v652 = vpop.f32.mrf.mxu0
      %653 = vdwg.mxu0
      %v654 = vsel %vm408, %v648, -inf
      %655 = vmax.xlane.f32.xlu0 %v654
      %v656 = vpop.xlane.xlu0 %655
      %v657 = vsel %vm408, %v651, -inf
      %658 = vmax.xlane.f32.xlu0 %v657
      %v659 = vpop.xlane.xlu0 %658
      %v660 = vsub.f32 %v648, %v656
      %v661 = vsub.f32 %v651, %v659
      %v662 = vmul.f32 %v660, 1.442695
      %v663 = vpow.pop %v662
      %v664 = vmul.f32 %v661, 1.442695
      %v665 = vpow.pop %v664
      %v666 = vsel %vm408, %v663, 0.0
      %667 = vadd.xlane.f32.xlu0 %v666
      %v668 = vpop.xlane.xlu0 %667
      %v669 = vsel %vm408, %v665, 0.0
      %670 = vadd.xlane.f32.xlu0 %v669
      %v671 = vpop.xlane.xlu0 %670
      %v672 = vpack.c.bf16 %v665, %v663
      %673 = vrot.lane.b32.xlu0 %v432, 64
      %v674 = vpop.permute.xlu0 %673
      %v677 = vsel %vm408, %v672, 0
      %679 = vmatprep.subr.bf16.mxu0 0
      %680 = vmatpush1.bf16.msra.mxu0 0
      %681 = vmatprep.subr.bf16.mxu0 0
      %682 = vmatpush1.bf16.msra.mxu0 0
      %683 = vmatprep.subr.bf16.mxu0 0
      %684 = vmatpush1.bf16.msra.mxu0 0
      %685 = vmatprep.subr.bf16.mxu0 0
      %686 = vmatpush1.bf16.msra.mxu0 0
      %687 = vmatprep.subr.bf16.mxu0 0
      %688 = vmatpush1.bf16.msra.mxu0 0
      %689 = vmatprep.subr.bf16.mxu0 0
      %690 = vmatpush1.bf16.msra.mxu0 0
      %691 = vmatprep.subr.bf16.mxu0 0
      %692 = vmatpush1.bf16.msra.mxu0 0
      %693 = vmatprep.subr.bf16.mxu0 0
      %694 = vmatpush1.bf16.msra.mxu0 %v674
      %695 = vmatprep.subr.bf16.mxu0 0
      %696 = vmatpush2.bf16.msra.mxu0 0
      %697 = vmatprep.subr.bf16.mxu0 0
      %698 = vmatpush2.bf16.msra.mxu0 0
      %699 = vmatprep.subr.bf16.mxu0 0
      %700 = vmatpush2.bf16.msra.mxu0 0
      %701 = vmatprep.subr.bf16.mxu0 0
      %702 = vmatpush2.bf16.msra.mxu0 0
      %703 = vmatprep.subr.bf16.mxu0 0
      %704 = vmatpush2.bf16.msra.mxu0 0
      %705 = vmatprep.subr.bf16.mxu0 0
      %706 = vmatpush2.bf16.msra.mxu0 0
      %707 = vmatprep.subr.bf16.mxu0 0
      %708 = vmatpush2.bf16.msra.mxu0 0
      %709 = vmatprep.subr.bf16.mxu0 0
      %710 = vmatpush2.bf16.msra.mxu0 0
      %711 = vmatprep.mubr.bf16.mxu0 0
      %712 = vmatmul.mubr.bf16.gmra.mxu0 %v677
      %v713 = vpop.f32.mrf.mxu0
      %v714 = vadd.f32 0.0, %v713
      %v715 = vpop.f32.mrf.mxu0
      %v716 = vpop.f32.mrf.mxu0
      %v717 = vadd.f32 0.0, %v716
      %v718 = vpop.f32.mrf.mxu0
      %719 = vdwg.mxu0
      %v720 = vrcp.pop %v668
      %v721 = vrcp.pop %v671
      %v722 = vmul.f32 %v714, %v720
      %v723 = vmul.f32 %v717, %v721
      %724 = vrot.lane.b32.xlu0 %v354, 32
      %v725 = vpop.permute.xlu0 %724
      %726 = vrot.lane.b32.xlu0 %v359, 32
      %v727 = vpop.permute.xlu0 %726
      %v729 = vsel %vm360, %v725, 0
      %v732 = vsel %vm360, %v727, 0
      %734 = vmatprep.subr.bf16.mxu0 0
      %735 = vmatpush1.bf16.xpose.msra.mxu0 0
      %736 = vmatprep.subr.bf16.mxu0 0
      %737 = vmatpush1.bf16.xpose.msra.mxu0 0
      %738 = vmatprep.subr.bf16.mxu0 0
      %739 = vmatpush1.bf16.xpose.msra.mxu0 0
      %740 = vmatprep.subr.bf16.mxu0 0
      %741 = vmatpush1.bf16.xpose.msra.mxu0 0
      %742 = vmatprep.subr.bf16.mxu0 0
      %743 = vmatpush1.bf16.xpose.msra.mxu0 0
      %744 = vmatprep.subr.bf16.mxu0 0
      %745 = vmatpush1.bf16.xpose.msra.mxu0 0
      %746 = vmatprep.subr.bf16.mxu0 0
      %747 = vmatpush1.bf16.xpose.msra.mxu0 0
      %748 = vmatprep.subr.bf16.mxu0 0
      %749 = vmatpush1.bf16.xpose.msra.mxu0 %v732
      %750 = vmatprep.subr.bf16.mxu0 0
      %751 = vmatpush2.bf16.xpose.msra.mxu0 0
      %752 = vmatprep.subr.bf16.mxu0 0
      %753 = vmatpush2.bf16.xpose.msra.mxu0 0
      %754 = vmatprep.subr.bf16.mxu0 0
      %755 = vmatpush2.bf16.xpose.msra.mxu0 0
      %756 = vmatprep.subr.bf16.mxu0 0
      %757 = vmatpush2.bf16.xpose.msra.mxu0 0
      %758 = vmatprep.subr.bf16.mxu0 0
      %759 = vmatpush2.bf16.xpose.msra.mxu0 0
      %760 = vmatprep.subr.bf16.mxu0 0
      %761 = vmatpush2.bf16.xpose.msra.mxu0 0
      %762 = vmatprep.subr.bf16.mxu0 0
      %763 = vmatpush2.bf16.xpose.msra.mxu0 0
      %764 = vmatprep.subr.bf16.mxu0 0
      %765 = vmatpush2.bf16.xpose.msra.mxu0 0
      %766 = vmatprep.mubr.bf16.mxu0 0
      %767 = vmatmul.mubr.bf16.gmra.mxu0 %v729
      %v768 = vpop.f32.mrf.mxu0
      %v769 = vadd.f32 0.0, %v768
      %v770 = vpop.f32.mrf.mxu0
      %v771 = vpop.f32.mrf.mxu0
      %v772 = vadd.f32 0.0, %v771
      %v773 = vpop.f32.mrf.mxu0
      %774 = vdwg.mxu0
      %v775 = vsel %vm408, %v769, -inf
      %776 = vmax.xlane.f32.xlu0 %v775
      %v777 = vpop.xlane.xlu0 %776
      %v778 = vsel %vm408, %v772, -inf
      %779 = vmax.xlane.f32.xlu0 %v778
      %v780 = vpop.xlane.xlu0 %779
      %v781 = vsub.f32 %v769, %v777
      %v782 = vsub.f32 %v772, %v780
      %v783 = vmul.f32 %v781, 1.442695
      %v784 = vpow.pop %v783
      %v785 = vmul.f32 %v782, 1.442695
      %v786 = vpow.pop %v785
      %v787 = vsel %vm408, %v784, 0.0
      %788 = vadd.xlane.f32.xlu0 %v787
      %v789 = vpop.xlane.xlu0 %788
      %v790 = vsel %vm408, %v786, 0.0
      %791 = vadd.xlane.f32.xlu0 %v790
      %v792 = vpop.xlane.xlu0 %791
      %v793 = vpack.c.bf16 %v786, %v784
      %794 = vrot.lane.b32.xlu0 %v432, 32
      %v795 = vpop.permute.xlu0 %794
      %v798 = vsel %vm408, %v793, 0
      %800 = vmatprep.subr.bf16.mxu0 0
      %801 = vmatpush1.bf16.msra.mxu0 0
      %802 = vmatprep.subr.bf16.mxu0 0
      %803 = vmatpush1.bf16.msra.mxu0 0
      %804 = vmatprep.subr.bf16.mxu0 0
      %805 = vmatpush1.bf16.msra.mxu0 0
      %806 = vmatprep.subr.bf16.mxu0 0
      %807 = vmatpush1.bf16.msra.mxu0 0
      %808 = vmatprep.subr.bf16.mxu0 0
      %809 = vmatpush1.bf16.msra.mxu0 0
      %810 = vmatprep.subr.bf16.mxu0 0
      %811 = vmatpush1.bf16.msra.mxu0 0
      %812 = vmatprep.subr.bf16.mxu0 0
      %813 = vmatpush1.bf16.msra.mxu0 0
      %814 = vmatprep.subr.bf16.mxu0 0
      %815 = vmatpush1.bf16.msra.mxu0 %v795
      %816 = vmatprep.subr.bf16.mxu0 0
      %817 = vmatpush2.bf16.msra.mxu0 0
      %818 = vmatprep.subr.bf16.mxu0 0
      %819 = vmatpush2.bf16.msra.mxu0 0
      %820 = vmatprep.subr.bf16.mxu0 0
      %821 = vmatpush2.bf16.msra.mxu0 0
      %822 = vmatprep.subr.bf16.mxu0 0
      %823 = vmatpush2.bf16.msra.mxu0 0
      %824 = vmatprep.subr.bf16.mxu0 0
      %825 = vmatpush2.bf16.msra.mxu0 0
      %826 = vmatprep.subr.bf16.mxu0 0
      %827 = vmatpush2.bf16.msra.mxu0 0
      %828 = vmatprep.subr.bf16.mxu0 0
      %829 = vmatpush2.bf16.msra.mxu0 0
      %830 = vmatprep.subr.bf16.mxu0 0
      %831 = vmatpush2.bf16.msra.mxu0 0
      %832 = vmatprep.mubr.bf16.mxu0 0
      %833 = vmatmul.mubr.bf16.gmra.mxu0 %v798
      %v834 = vpop.f32.mrf.mxu0
      %v835 = vadd.f32 0.0, %v834
      %v836 = vpop.f32.mrf.mxu0
      %v837 = vpop.f32.mrf.mxu0
      %v838 = vadd.f32 0.0, %v837
      %v839 = vpop.f32.mrf.mxu0
      %840 = vdwg.mxu0
      %v841 = vrcp.pop %v789
      %v842 = vrcp.pop %v792
      %v843 = vmul.f32 %v835, %v841
      %v844 = vmul.f32 %v838, %v842
      %847 = vrot.lane.b32.xlu0 %v601, 32
      %v848 = vpop.permute.xlu0 %847
      %849 = vrot.lane.b32.xlu0 %v602, 32
      %v850 = vpop.permute.xlu0 %849
      %855 = vrot.lane.b32.xlu0 %v722, 64
      %v856 = vpop.permute.xlu0 %855
      %857 = vrot.lane.b32.xlu0 %v723, 64
      %v858 = vpop.permute.xlu0 %857
      %863 = vrot.lane.b32.xlu0 %v843, 96
      %v864 = vpop.permute.xlu0 %863
      %865 = vrot.lane.b32.xlu0 %v844, 96
      %v866 = vpop.permute.xlu0 %865
      %v869 = vsel %vm360, %v480, %v848
      %v870 = vsel %vm360, %v481, %v850
      %vm871 = vcmask 523264
      %v872 = vsel %vm871, %v869, %v856
      %v873 = vsel %vm871, %v870, %v858
      %vm874 = vcmask 785408
      %v875 = vsel %vm874, %v872, %v864
      %v876 = vsel %vm874, %v873, %v866
      %v877 = vld [vmem:[%s328] sm:$0xff]
      %v878 = vld [vmem:[%s328 + $0x8] sm:$0xff]
      %v879 = vpack.c.bf16 %v876, %v875
      %v880 = vld [vmem:[%s3] sm:$0xf]
      %v881 = vld [vmem:[%s3 + $0x4] sm:$0xf]
      %v882 = vld [vmem:[%s3 + $0x8] sm:$0xf]
      %v883 = vld [vmem:[%s3 + $0xc] sm:$0xf]
      %v884 = vld [vmem:[%s3 + $0x10] sm:$0xf]
      %v885 = vld [vmem:[%s3 + $0x14] sm:$0xf]
      %v886 = vld [vmem:[%s3 + $0x18] sm:$0xf]
      %v887 = vld [vmem:[%s3 + $0x1c] sm:$0xf]
      %v888 = vld [vmem:[%s3 + $0x20] sm:$0xf]
      %v889 = vld [vmem:[%s3 + $0x24] sm:$0xf]
      %v890 = vld [vmem:[%s3 + $0x28] sm:$0xf]
      %v891 = vld [vmem:[%s3 + $0x2c] sm:$0xf]
      %v892 = vld [vmem:[%s3 + $0x30] sm:$0xf]
      %v893 = vld [vmem:[%s3 + $0x34] sm:$0xf]
      %v894 = vld [vmem:[%s3 + $0x38] sm:$0xf]
      %v895 = vld [vmem:[%s3 + $0x3c] sm:$0xf]
      %v912 = vunpack.c.l.b16 %v880
      %v913 = vunpack.c.l.b16 %v881
      %v914 = vunpack.c.l.b16 %v882
      %v915 = vunpack.c.l.b16 %v883
      %v916 = vunpack.c.l.b16 %v884
      %v917 = vunpack.c.l.b16 %v885
      %v918 = vunpack.c.l.b16 %v886
      %v919 = vunpack.c.l.b16 %v887
      %v920 = vunpack.c.l.b16 %v888
      %v921 = vunpack.c.l.b16 %v889
      %v922 = vunpack.c.l.b16 %v890
      %v923 = vunpack.c.l.b16 %v891
      %v924 = vunpack.c.l.b16 %v892
      %v925 = vunpack.c.l.b16 %v893
      %v926 = vunpack.c.l.b16 %v894
      %v927 = vunpack.c.l.b16 %v895
      %v928 = vpack.c.b16 %v913, %v912
      %v929 = vpack.c.b16 %v915, %v914
      %v930 = vpack.c.b16 %v917, %v916
      %v931 = vpack.c.b16 %v919, %v918
      %v932 = vpack.c.b16 %v921, %v920
      %v933 = vpack.c.b16 %v923, %v922
      %v934 = vpack.c.b16 %v925, %v924
      %v935 = vpack.c.b16 %v927, %v926
      %944 = vmatprep.subr.bf16.mxu0 0
      %945 = vmatpush1.bf16.msra.mxu0 %v935
      %946 = vmatprep.subr.bf16.mxu0 0
      %947 = vmatpush1.bf16.msra.mxu0 %v934
      %948 = vmatprep.subr.bf16.mxu0 0
      %949 = vmatpush1.bf16.msra.mxu0 %v933
      %950 = vmatprep.subr.bf16.mxu0 0
      %951 = vmatpush1.bf16.msra.mxu0 %v932
      %952 = vmatprep.subr.bf16.mxu0 0
      %953 = vmatpush1.bf16.msra.mxu0 %v931
      %954 = vmatprep.subr.bf16.mxu0 0
      %955 = vmatpush1.bf16.msra.mxu0 %v930
      %956 = vmatprep.subr.bf16.mxu0 0
      %957 = vmatpush1.bf16.msra.mxu0 %v929
      %958 = vmatprep.subr.bf16.mxu0 0
      %959 = vmatpush1.bf16.msra.mxu0 %v928
      %960 = vmatprep.subr.bf16.mxu0 0
      %961 = vmatpush2.bf16.msra.mxu0 0
      %962 = vmatprep.subr.bf16.mxu0 0
      %963 = vmatpush2.bf16.msra.mxu0 0
      %964 = vmatprep.subr.bf16.mxu0 0
      %965 = vmatpush2.bf16.msra.mxu0 0
      %966 = vmatprep.subr.bf16.mxu0 0
      %967 = vmatpush2.bf16.msra.mxu0 0
      %968 = vmatprep.subr.bf16.mxu0 0
      %969 = vmatpush2.bf16.msra.mxu0 0
      %970 = vmatprep.subr.bf16.mxu0 0
      %971 = vmatpush2.bf16.msra.mxu0 0
      %972 = vmatprep.subr.bf16.mxu0 0
      %973 = vmatpush2.bf16.msra.mxu0 0
      %974 = vmatprep.subr.bf16.mxu0 0
      %975 = vmatpush2.bf16.msra.mxu0 0
      %976 = vmatprep.mubr.bf16.mxu0 0
      %977 = vmatmul.mubr.bf16.gmra.mxu0 %v879
      %v978 = vpop.f32.mrf.mxu0
      %v979 = vadd.f32 0.0, %v978
      %v980 = vpop.f32.mrf.mxu0
      %v981 = vpop.f32.mrf.mxu0
      %v982 = vadd.f32 0.0, %v981
      %v983 = vpop.f32.mrf.mxu0
      %984 = vdwg.mxu0
      %v985 = vadd.f32 %v877, %v979
      %v986 = vadd.f32 %v878, %v982
      %987 = vst [vmem:[%s338] sm:$0xff] %v985
      %988 = vst [vmem:[%s338 + $0x8] sm:$0xff] %v986
      %s989 = smul.u32 2, %s21
      %p990 = scmp.lt.s32.totalorder %s20, 1
      %s991 = scalar_select %p990, %s20, 1
      %p992 = scmp.lt.s32.totalorder %s989, 1
      %s993 = scalar_select %p992, %s989, 1
      %s994 = smul.addr %s991, 2
      %s995 = sadd.s32 %s993, %s994
      %s996 = smul.addr %s995, 8
      %s997 = scalar_lea.vmem %s5, %s996
      // Predicated region
      $region41: #{transformer_forward.22} parent=39 // pred_check
        %p998 = pneg %p177
      $region42: #{transformer_forward.22} parent=39 // pred_check_branch
        %1000 = sbr.rel (%p998) target = $region44
      $region43: #{transformer_forward.22} parent=39 // pred_region
        %s1001 = smul.u32 2, %s21
      $region44: #{transformer_forward.22} parent=39 // pred_fallthru
        _
    $region40: #{transformer_forward.22} parent=5 // pred_fallthru
      _
    %p1002 = scmp.le.s32.totalorder 2, %s11
    // Predicated region
    $region45: #{transformer_forward.22} parent=5 // pred_check
      %p1003 = pneg %p1002
    $region46: #{transformer_forward.22} parent=5 // pred_check_branch
      %1005 = sbr.rel (%p1003) target = $region48
    $region47: #{transformer_forward.22} parent=5 // pred_region
      %s1006 = ssub.s32 %s11, 2
      // Predicated region
      $region49: #{transformer_forward.22} parent=47 // pred_check
        %p1007 = pneg %p183
      $region50: #{transformer_forward.22} parent=47 // pred_check_branch
        %1009 = sbr.rel (%p1007) target = $region52
      $region51: #{transformer_forward.22} parent=47 // pred_region
        %s1010 = smul.u32 2, %s23
        %p1011 = scmp.lt.s32.totalorder %s22, 1
        %s1012 = scalar_select %p1011, %s22, 1
        %p1013 = scmp.lt.s32.totalorder %s1010, 1
        %s1014 = scalar_select %p1013, %s1010, 1
        %s1015 = smul.addr %s1012, 2
        %s1016 = sadd.s32 %s1014, %s1015
        %s1017 = smul.addr %s1016, 8
        %s1018 = scalar_lea.vmem %s5, %s1017
      $region52: #{transformer_forward.22} parent=47 // pred_fallthru
        _
    $region48: #{transformer_forward.22} parent=5 // pred_fallthru
      _
  $region6: #{transformer_forward.22} parent=0 // loop_footer
    %s15 = sadd.s32 1, %s11
  $region7: #{transformer_forward.22} parent=0 // loop_footer_branch
    %10 = sbr.rel target = $region3
  $region8: #{transformer_forward.22} parent=0 // loop_exit
    _

// kernel: transformer_forward.41
$region0: #{transformer_forward.41}
  #allocation0 [shape = 'u32[]', space=smem, size = 0x4, offset = 0x4, fixed_abs, tag = 'smem constant byte address 0x4 - core index']
  #allocation1 [shape = 'u32[144,128]{1,0:T(1,128)}', space=vmem, size = 0x12000, scoped, tag = 'internal scratch']
  %s0 = inlined_call_operand.vmem [shape: bf16[32,128], index: 0, kind: input, shape index: {}]
  %s1 = inlined_call_operand.vmem [shape: bf16[64,128], index: 1, kind: input, shape index: {}]
  %s2 = inlined_call_operand.hbm [shape: f32[32,64], index: 2, kind: output, shape index: {}]
  %s3 = sld [smem:[#allocation0]]
  $region41: #{transformer_forward.41} parent=0
    _
  %s5 = ssub.s32 1, %s3
  %s6 = scalar_select 0, %s5, %s3
  $region1: #{transformer_forward.41} parent=0
    #allocation2 [shape = 'u8[16384]{0}', space=vmem, size = 0x4000, scoped, tag = 'output window, operand 0']
    #allocation3 [shape = 's32[2]{0}', space=sflag, size = 0x8, scoped, tag = 'scoped memory for transformer_forward.41']
    %7 = vsyncpa [#allocation3], 0
    %s8 = scalar_lea.sflag [#allocation3], 1
    %9 = vsyncpa %s8, 0
    loop: start=0, step=1, limit=4
    $region2: #{transformer_forward.41} parent=1 // loop_pre_header
      _
    $region3: #{transformer_forward.41} parent=1 // loop_header
      %s11 = sphi 0, %s15
      %p12 = scmp.ge.s32.totalorder %s11, 4
      %s18 = sphi 0, %s30
      %s19 = sphi 0, %s26
      %s20 = sphi 0, %s18
      %s21 = sphi 0, %s19
      %s22 = sphi 0, %s20
      %s23 = sphi 0, %s21
      %s33 = sphi 0, %s35
      %s36 = sphi 0, %s33
      %s37 = sphi 0, %s36
      %s53 = sphi 0, %s37
      %s59 = sphi 0, %s61
      %s62 = sphi 0, %s59
      %s63 = sphi 0, %s62
      %s79 = sphi 0, %s63
      %s87 = sphi 0, %s89
      %s90 = sphi 0, %s87
      %s91 = sphi 0, %s90
      %s107 = sphi 0, %s91
    $region4: #{transformer_forward.41} parent=1 // loop_header_branch
      %14 = sbr.rel (%p12) target = $region8
    $region5: #{transformer_forward.41} parent=1 // loop_body
      %s16 = ssub.s32 %s11, 1
      %s17 = ssub.s32 %s11, 2
      %s24 = sadd.s32 1, %s19
      %p25 = scmp.ge.s32.totalorder %s24, 1
      %s26 = scalar_select %p25, 0, %s24
      %s27 = sadd.s32 1, %s18
      %s28 = scalar_select %p25, %s27, %s18
      %p29 = scmp.ge.s32.totalorder %s28, 2
      %s30 = scalar_select %p29, 0, %s28
      %s31 = ssub.s32 %s18, %s30
      %p32 = scmp.eq.s32.totalorder %s31, 0
      %s34 = sadd.s32 %s33, 1
      %s35 = scalar_select %p32, %s33, %s34
      %p38 = pneg %p32
      %p39 = scmp.eq.s32.totalorder %s11, 1
      %p40 = por %p38, %p39
      %p41 = scmp.ne.s32.totalorder %s33, %s36
      %p42 = scmp.eq.s32.totalorder %s11, 0
      %p43 = por %p41, %p42
      %p44 = scmp.ne.s32.totalorder %s33, %s36
      %p45 = scmp.eq.s32.totalorder %s16, 1
      %p46 = por %p44, %p45
      %p47 = scmp.ne.s32.totalorder %s36, %s37
      %p48 = scmp.eq.s32.totalorder %s16, 0
      %p49 = por %p47, %p48
      %p50 = scmp.ne.s32.totalorder %s36, %s37
      %p51 = scmp.eq.s32.totalorder %s17, 1
      %p52 = por %p50, %p51
      %p54 = scmp.ne.s32.totalorder %s37, %s53
      %p55 = scmp.eq.s32.totalorder %s17, 0
      %p56 = por %p54, %p55
      %s57 = ssub.s32 %s19, %s26
      %p58 = scmp.eq.s32.totalorder %s57, 0
      %s60 = sadd.s32 %s59, 1
      %s61 = scalar_select %p58, %s59, %s60
      %p64 = pneg %p58
      %p65 = scmp.eq.s32.totalorder %s11, 1
      %p66 = por %p64, %p65
      %p67 = scmp.ne.s32.totalorder %s59, %s62
      %p68 = scmp.eq.s32.totalorder %s11, 0
      %p69 = por %p67, %p68
      %p70 = scmp.ne.s32.totalorder %s59, %s62
      %p71 = scmp.eq.s32.totalorder %s16, 1
      %p72 = por %p70, %p71
      %p73 = scmp.ne.s32.totalorder %s62, %s63
      %p74 = scmp.eq.s32.totalorder %s16, 0
      %p75 = por %p73, %p74
      %p76 = scmp.ne.s32.totalorder %s62, %s63
      %p77 = scmp.eq.s32.totalorder %s17, 1
      %p78 = por %p76, %p77
      %p80 = scmp.ne.s32.totalorder %s63, %s79
      %p81 = scmp.eq.s32.totalorder %s17, 0
      %p82 = por %p80, %p81
      %s83 = ssub.s32 %s18, %s30
      %s84 = ssub.s32 %s19, %s26
      %s85 = sor.u32 %s83, %s84
      %p86 = scmp.eq.s32.totalorder %s85, 0
      %s88 = sadd.s32 %s87, 1
      %s89 = scalar_select %p86, %s87, %s88
      %p92 = pneg %p86
      %p93 = scmp.eq.s32.totalorder %s11, 1
      %p94 = por %p92, %p93
      %p95 = scmp.ne.s32.totalorder %s87, %s90
      %p96 = scmp.eq.s32.totalorder %s11, 0
      %p97 = por %p95, %p96
      %p98 = scmp.ne.s32.totalorder %s87, %s90
      %p99 = scmp.eq.s32.totalorder %s16, 1
      %p100 = por %p98, %p99
      %p101 = scmp.ne.s32.totalorder %s90, %s91
      %p102 = scmp.eq.s32.totalorder %s16, 0
      %p103 = por %p101, %p102
      %p104 = scmp.ne.s32.totalorder %s90, %s91
      %p105 = scmp.eq.s32.totalorder %s17, 1
      %p106 = por %p104, %p105
      %p108 = scmp.ne.s32.totalorder %s91, %s107
      %p109 = scmp.eq.s32.totalorder %s17, 0
      %p110 = por %p108, %p109
      %p111 = scmp.le.s32.totalorder 1, %s11
      %p112 = scmp.lt.s32.totalorder %s11, 3
      %p113 = pnand %p111, %p112
      %p114 = pneg %p113
      // Predicated region
      $region9: #{transformer_forward.41} parent=5 // pred_check
        _
      $region10: #{transformer_forward.41} parent=5 // pred_check_branch
        %116 = sbr.rel (%p113) target = $region12
      $region11: #{transformer_forward.41} parent=5 // pred_region
        %s117 = ssub.s32 %s11, 1
        // Predicated region
        $region13: #{transformer_forward.41} parent=11 // pred_check
          %p118 = pneg %p75
        $region14: #{transformer_forward.41} parent=11 // pred_check_branch
          %120 = sbr.rel (%p118) target = $region16
        $region15: #{transformer_forward.41} parent=11 // pred_region
          %s121 = smul.u32 8, %s21
          %p122 = scmp.lt.s32.totalorder %s121, 7
          %s123 = scalar_select %p122, %s121, 7
          %s124 = smul.addr %s123, 4
          %s125 = scalar_lea.vmem %s1, %s124
          %s126 = smul.u32 8, %s21
        $region16: #{transformer_forward.41} parent=11 // pred_fallthru
          _
      $region12: #{transformer_forward.41} parent=5 // pred_fallthru
        _
      %p127 = scmp.lt.s32.totalorder %s11, 2
      // Predicated region
      $region17: #{transformer_forward.41} parent=5 // pred_check
        %p128 = pneg %p127
      $region18: #{transformer_forward.41} parent=5 // pred_check_branch
        %130 = sbr.rel (%p128) target = $region20
      $region19: #{transformer_forward.41} parent=5 // pred_region
        // Predicated region
        $region21: #{transformer_forward.41} parent=19 // pred_check
          %p131 = pneg %p43
        $region22: #{transformer_forward.41} parent=19 // pred_check_branch
          %133 = sbr.rel (%p131) target = $region24
        $region23: #{transformer_forward.41} parent=19 // pred_region
          %s134 = smul.u32 2, %s18
          %p135 = scmp.lt.s32.totalorder %s134, 3
          %s136 = scalar_select %p135, %s134, 3
          %s137 = smul.addr %s136, 4
          %s138 = scalar_lea.vmem %s0, %s137
          %s139 = smul.u32 2, %s18
        $region24: #{transformer_forward.41} parent=19 // pred_fallthru
          _
      $region20: #{transformer_forward.41} parent=5 // pred_fallthru
        _
      %p140 = scmp.le.s32.totalorder 1, %s11
      %p141 = scmp.lt.s32.totalorder %s11, 3
      %p142 = pnand %p140, %p141
      %p143 = pneg %p142
      // Predicated region
      $region25: #{transformer_forward.41} parent=5 // pred_check
        _
      $region26: #{transformer_forward.41} parent=5 // pred_check_branch
        %145 = sbr.rel (%p142) target = $region28
      $region27: #{transformer_forward.41} parent=5 // pred_region
        %s146 = ssub.s32 %s11, 1
        %s147 = smul.u32 2, %s20
        %p148 = scmp.lt.s32.totalorder %s147, 3
        %s149 = scalar_select %p148, %s147, 3
        %s150 = smul.addr %s149, 4
        %s151 = scalar_lea.vmem %s0, %s150
        %p152 = pneg %p49
        %p153 = pneg %p46
        %s154 = smul.u32 8, %s21
        %p155 = scmp.lt.s32.totalorder %s154, 7
        %s156 = scalar_select %p155, %s154, 7
        %s157 = smul.addr %s156, 4
        %s158 = scalar_lea.vmem %s1, %s157
        %p159 = pneg %p75
        %p160 = pneg %p72
        %p161 = pneg %p103
        %p162 = pneg %p100
        %s163 = sand.u32 %s90, 1
        %s164 = scalar_lea.sflag [#allocation3], %s163
        %s165 = sand.u32 %s90, 1
        %s166 = smul.addr %s165, 16
        %s167 = scalar_lea.vmem [#allocation2], %s166
        %s168 = smul.u32 2, %s20
        %p169 = scmp.lt.s32.totalorder %s168, 3
        %s170 = scalar_select %p169, %s168, 3
        %s171 = smul.addr %s170, 4
        %s172 = scalar_lea.vmem %s0, %s171
        %s173 = smul.u32 2, %s20
        %s174 = smul.u32 8, %s21
        %p175 = scmp.lt.s32.totalorder %s174, 7
        %s176 = scalar_select %p175, %s174, 7
        %s177 = smul.addr %s176, 4
        %s178 = scalar_lea.vmem %s1, %s177
        %s179 = smul.u32 8, %s21
        %s180 = smul.u32 2, %s20
        %v182 = vld [vmem:[%s172] sm:$0xf]
        %v183 = vld [vmem:[%s172 + $0x4] sm:$0xf]
        %v184 = vld [vmem:[%s178] sm:$0xf]
        %v185 = vld [vmem:[%s178 + $0x4] sm:$0xf]
        %v186 = vld [vmem:[%s178 + $0x8] sm:$0xf]
        %v187 = vld [vmem:[%s178 + $0xc] sm:$0xf]
        %v188 = vld [vmem:[%s178 + $0x10] sm:$0xf]
        %v189 = vld [vmem:[%s178 + $0x14] sm:$0xf]
        %v190 = vld [vmem:[%s178 + $0x18] sm:$0xf]
        %v191 = vld [vmem:[%s178 + $0x1c] sm:$0xf]
        %v194 = vunpack.c.l.b16 %v182
        %v195 = vunpack.c.l.b16 %v183
        %v196 = vpack.c.b16 %v195, %v194
        %v206 = vunpack.c.l.b16 %v184
        %v207 = vunpack.c.l.b16 %v185
        %v208 = vunpack.c.l.b16 %v186
        %v209 = vunpack.c.l.b16 %v187
        %v210 = vunpack.c.l.b16 %v188
        %v211 = vunpack.c.l.b16 %v189
        %v212 = vunpack.c.l.b16 %v190
        %v213 = vunpack.c.l.b16 %v191
        %v214 = vpack.c.b16 %v207, %v206
        %v215 = vpack.c.b16 %v209, %v208
        %v216 = vpack.c.b16 %v211, %v210
        %v217 = vpack.c.b16 %v213, %v212
        %222 = vmatprep.subr.bf16.mxu0 0
        %223 = vmatpush1.bf16.xpose.msra.mxu0 0
        %224 = vmatprep.subr.bf16.mxu0 0
        %225 = vmatpush1.bf16.xpose.msra.mxu0 0
        %226 = vmatprep.subr.bf16.mxu0 0
        %227 = vmatpush1.bf16.xpose.msra.mxu0 0
        %228 = vmatprep.subr.bf16.mxu0 0
        %229 = vmatpush1.bf16.xpose.msra.mxu0 0
        %230 = vmatprep.subr.bf16.mxu0 0
        %231 = vmatpush1.bf16.xpose.msra.mxu0 %v217
        %232 = vmatprep.subr.bf16.mxu0 0
        %233 = vmatpush1.bf16.xpose.msra.mxu0 %v216
        %234 = vmatprep.subr.bf16.mxu0 0
        %235 = vmatpush1.bf16.xpose.msra.mxu0 %v215
        %236 = vmatprep.subr.bf16.mxu0 0
        %237 = vmatpush1.bf16.xpose.msra.mxu0 %v214
        %238 = vmatprep.subr.bf16.mxu0 0
        %239 = vmatpush2.bf16.xpose.msra.mxu0 0
        %240 = vmatprep.subr.bf16.mxu0 0
        %241 = vmatpush2.bf16.xpose.msra.mxu0 0
        %242 = vmatprep.subr.bf16.mxu0 0
        %243 = vmatpush2.bf16.xpose.msra.mxu0 0
        %244 = vmatprep.subr.bf16.mxu0 0
        %245 = vmatpush2.bf16.xpose.msra.mxu0 0
        %246 = vmatprep.subr.bf16.mxu0 0
        %247 = vmatpush2.bf16.xpose.msra.mxu0 0
        %248 = vmatprep.subr.bf16.mxu0 0
        %249 = vmatpush2.bf16.xpose.msra.mxu0 0
        %250 = vmatprep.subr.bf16.mxu0 0
        %251 = vmatpush2.bf16.xpose.msra.mxu0 0
        %252 = vmatprep.subr.bf16.mxu0 0
        %253 = vmatpush2.bf16.xpose.msra.mxu0 0
        %254 = vmatprep.mubr.bf16.mxu0 0
        %255 = vmatmul.mubr.bf16.gmra.mxu0 %v196
        %v256 = vpop.f32.mrf.mxu0
        %v257 = vadd.f32 0.0, %v256
        %v258 = vpop.f32.mrf.mxu0
        %v259 = vpop.f32.mrf.mxu0
        %v260 = vadd.f32 0.0, %v259
        %v261 = vpop.f32.mrf.mxu0
        %262 = vdwg.mxu0
        %vm263 = vcmask 523264
        %264 = vst.msk [vmem:[%s167] sm:$0xff] %vm263, %v257
        %265 = vst.msk [vmem:[%s167 + $0x8] sm:$0xff] %vm263, %v260
        %s266 = sand.u32 %s90, 1
        %s267 = scalar_lea.sflag [#allocation3], %s266
        %s268 = sand.u32 %s90, 1
        %s269 = smul.addr %s268, 16
        %s270 = scalar_lea.vmem [#allocation2], %s269
        // Predicated region
        $region29: #{transformer_forward.41} parent=27 // pred_check
          %p271 = pneg %p100
        $region30: #{transformer_forward.41} parent=27 // pred_check_branch
          %273 = sbr.rel (%p271) target = $region32
        $region31: #{transformer_forward.41} parent=27 // pred_region
          %s274 = smul.u32 2, %s20
          %s276 = ssub.s32 256, 256
          %277 = vsyncadd %s267, %s276
          %s278 = sadd.s32 %s21, %s274
          %s279 = smul.addr %s278, 128
          %s280 = scalar_lea.hbm %s2, %s279
          %s281 = sshll.u32 %s270, 4
          %s282 = int_to_ptr.vmem [resolvable:$true] %s281
          %287 = dma.vmem_to_hbm [thread:$0]  %s282, 256, %s280, %s267, 128, 128, 8
        $region32: #{transformer_forward.41} parent=27 // pred_fallthru
          _
      $region28: #{transformer_forward.41} parent=5 // pred_fallthru
        _
      %p288 = scmp.le.s32.totalorder 2, %s11
      // Predicated region
      $region33: #{transformer_forward.41} parent=5 // pred_check
        %p289 = pneg %p288
      $region34: #{transformer_forward.41} parent=5 // pred_check_branch
        %291 = sbr.rel (%p289) target = $region36
      $region35: #{transformer_forward.41} parent=5 // pred_region
        %s292 = ssub.s32 %s11, 2
        // Predicated region
        $region37: #{transformer_forward.41} parent=35 // pred_check
          %p293 = pneg %p106
        $region38: #{transformer_forward.41} parent=35 // pred_check_branch
          %295 = sbr.rel (%p293) target = $region40
        $region39: #{transformer_forward.41} parent=35 // pred_region
          %s296 = sand.u32 %s91, 1
          %s297 = scalar_lea.sflag [#allocation3], %s296
          %s298 = sand.u32 %s91, 1
          %s299 = smul.addr %s298, 16
          %s300 = scalar_lea.vmem [#allocation2], %s299
          %301 = dma.done %s297, 256
        $region40: #{transformer_forward.41} parent=35 // pred_fallthru
          _
      $region36: #{transformer_forward.41} parent=5 // pred_fallthru
        _
    $region6: #{transformer_forward.41} parent=1 // loop_footer
      %s15 = sadd.s32 1, %s11
    $region7: #{transformer_forward.41} parent=1 // loop_footer_branch
      %10 = sbr.rel target = $region3
    $region8: #{transformer_forward.41} parent=1 // loop_exit
      _
    %302 = vsyncpa [#allocation3], 1
    %s303 = scalar_lea.sflag [#allocation3], 1
    %304 = vsyncpa %s303, 1

// kernel: transformer_forward.30
$region0: #{transformer_forward.30}
  #allocation0 [shape = 'u32[]', space=smem, size = 0x4, offset = 0x4, fixed_abs, tag = 'smem constant byte address 0x4 - core index']
  #allocation1 [shape = 'u32[144,128]{1,0:T(1,128)}', space=vmem, size = 0x12000, scoped, tag = 'internal scratch']
  %s0 = inlined_call_operand.vmem [shape: f32[32,128], index: 0, kind: input, shape index: {}]
  %s1 = inlined_call_operand.vmem [shape: f32[1,128], index: 1, kind: input, shape index: {}]
  %s2 = inlined_call_operand.vmem [shape: f32[1,128], index: 2, kind: input, shape index: {}]
  %s3 = inlined_call_operand.vmem [shape: bf16[128,128], index: 3, kind: input, shape index: {}]
  %s4 = inlined_call_operand.vmem [shape: bf16[32,128], index: 4, kind: output, shape index: {}]
  %s5 = sld [smem:[#allocation0]]
  $region49: #{transformer_forward.30} parent=0
    _
  %s7 = ssub.s32 1, %s5
  %s8 = scalar_select 0, %s7, %s5
  loop: start=0, step=1, limit=4
  $region2: #{transformer_forward.30} parent=0 // loop_pre_header
    _
  $region3: #{transformer_forward.30} parent=0 // loop_header
    %s10 = sphi 0, %s14
    %p11 = scmp.ge.s32.totalorder %s10, 4
    %s20 = sphi 0, %s22
    %s23 = sphi 0, %s20
    %s24 = sphi 0, %s23
    %s40 = sphi 0, %s24
    %s44 = sphi 0, %s44
    %s46 = sphi 0, %s44
    %s47 = sphi 0, %s46
    %s61 = sphi 0, %s47
    %s65 = sphi 0, %s65
    %s67 = sphi 0, %s65
    %s68 = sphi 0, %s67
    %s82 = sphi 0, %s68
    %s86 = sphi 0, %s86
    %s88 = sphi 0, %s86
    %s89 = sphi 0, %s88
    %s103 = sphi 0, %s89
    %s109 = sphi 0, %s111
    %s112 = sphi 0, %s109
    %s113 = sphi 0, %s112
    %s129 = sphi 0, %s113
  $region4: #{transformer_forward.30} parent=0 // loop_header_branch
    %13 = sbr.rel (%p11) target = $region8
  $region5: #{transformer_forward.30} parent=0 // loop_body
    %s15 = ssub.s32 %s10, 1
    %s16 = ssub.s32 %s10, 2
    %s17 = sadd.s32 %s10, 1
    %s18 = ssub.s32 %s10, %s17
    %p19 = scmp.eq.s32.totalorder %s18, 0
    %s21 = sadd.s32 %s20, 1
    %s22 = scalar_select %p19, %s20, %s21
    %p25 = pneg %p19
    %p26 = scmp.eq.s32.totalorder %s10, 1
    %p27 = por %p25, %p26
    %p28 = scmp.ne.s32.totalorder %s20, %s23
    %p29 = scmp.eq.s32.totalorder %s10, 0
    %p30 = por %p28, %p29
    %p31 = scmp.ne.s32.totalorder %s20, %s23
    %p32 = scmp.eq.s32.totalorder %s15, 1
    %p33 = por %p31, %p32
    %p34 = scmp.ne.s32.totalorder %s23, %s24
    %p35 = scmp.eq.s32.totalorder %s15, 0
    %p36 = por %p34, %p35
    %p37 = scmp.ne.s32.totalorder %s23, %s24
    %p38 = scmp.eq.s32.totalorder %s16, 1
    %p39 = por %p37, %p38
    %p41 = scmp.ne.s32.totalorder %s24, %s40
    %p42 = scmp.eq.s32.totalorder %s16, 0
    %p43 = por %p41, %p42
    %s45 = sadd.s32 %s44, 1
    %p48 = scmp.eq.s32.totalorder %s10, 1
    %p49 = scmp.ne.s32.totalorder %s44, %s46
    %p50 = scmp.eq.s32.totalorder %s10, 0
    %p51 = por %p49, %p50
    %p52 = scmp.ne.s32.totalorder %s44, %s46
    %p53 = scmp.eq.s32.totalorder %s15, 1
    %p54 = por %p52, %p53
    %p55 = scmp.ne.s32.totalorder %s46, %s47
    %p56 = scmp.eq.s32.totalorder %s15, 0
    %p57 = por %p55, %p56
    %p58 = scmp.ne.s32.totalorder %s46, %s47
    %p59 = scmp.eq.s32.totalorder %s16, 1
    %p60 = por %p58, %p59
    %p62 = scmp.ne.s32.totalorder %s47, %s61
    %p63 = scmp.eq.s32.totalorder %s16, 0
    %p64 = por %p62, %p63
    %s66 = sadd.s32 %s65, 1
    %p69 = scmp.eq.s32.totalorder %s10, 1
    %p70 = scmp.ne.s32.totalorder %s65, %s67
    %p71 = scmp.eq.s32.totalorder %s10, 0
    %p72 = por %p70, %p71
    %p73 = scmp.ne.s32.totalorder %s65, %s67
    %p74 = scmp.eq.s32.totalorder %s15, 1
    %p75 = por %p73, %p74
    %p76 = scmp.ne.s32.totalorder %s67, %s68
    %p77 = scmp.eq.s32.totalorder %s15, 0
    %p78 = por %p76, %p77
    %p79 = scmp.ne.s32.totalorder %s67, %s68
    %p80 = scmp.eq.s32.totalorder %s16, 1
    %p81 = por %p79, %p80
    %p83 = scmp.ne.s32.totalorder %s68, %s82
    %p84 = scmp.eq.s32.totalorder %s16, 0
    %p85 = por %p83, %p84
    %s87 = sadd.s32 %s86, 1
    %p90 = scmp.eq.s32.totalorder %s10, 1
    %p91 = scmp.ne.s32.totalorder %s86, %s88
    %p92 = scmp.eq.s32.totalorder %s10, 0
    %p93 = por %p91, %p92
    %p94 = scmp.ne.s32.totalorder %s86, %s88
    %p95 = scmp.eq.s32.totalorder %s15, 1
    %p96 = por %p94, %p95
    %p97 = scmp.ne.s32.totalorder %s88, %s89
    %p98 = scmp.eq.s32.totalorder %s15, 0
    %p99 = por %p97, %p98
    %p100 = scmp.ne.s32.totalorder %s88, %s89
    %p101 = scmp.eq.s32.totalorder %s16, 1
    %p102 = por %p100, %p101
    %p104 = scmp.ne.s32.totalorder %s89, %s103
    %p105 = scmp.eq.s32.totalorder %s16, 0
    %p106 = por %p104, %p105
    %s107 = ssub.s32 %s10, %s17
    %p108 = scmp.eq.s32.totalorder %s107, 0
    %s110 = sadd.s32 %s109, 1
    %s111 = scalar_select %p108, %s109, %s110
    %p114 = pneg %p108
    %p115 = scmp.eq.s32.totalorder %s10, 1
    %p116 = por %p114, %p115
    %p117 = scmp.ne.s32.totalorder %s109, %s112
    %p118 = scmp.eq.s32.totalorder %s10, 0
    %p119 = por %p117, %p118
    %p120 = scmp.ne.s32.totalorder %s109, %s112
    %p121 = scmp.eq.s32.totalorder %s15, 1
    %p122 = por %p120, %p121
    %p123 = scmp.ne.s32.totalorder %s112, %s113
    %p124 = scmp.eq.s32.totalorder %s15, 0
    %p125 = por %p123, %p124
    %p126 = scmp.ne.s32.totalorder %s112, %s113
    %p127 = scmp.eq.s32.totalorder %s16, 1
    %p128 = por %p126, %p127
    %p130 = scmp.ne.s32.totalorder %s113, %s129
    %p131 = scmp.eq.s32.totalorder %s16, 0
    %p132 = por %p130, %p131
    %p133 = scmp.le.s32.totalorder 1, %s10
    %p134 = scmp.lt.s32.totalorder %s10, 3
    %p135 = pnand %p133, %p134
    %p136 = pneg %p135
    // Predicated region
    $region9: #{transformer_forward.30} parent=5 // pred_check
      _
    $region10: #{transformer_forward.30} parent=5 // pred_check_branch
      %138 = sbr.rel (%p135) target = $region12
    $region11: #{transformer_forward.30} parent=5 // pred_region
      %s139 = ssub.s32 %s10, 1
      // Predicated region
      $region13: #{transformer_forward.30} parent=11 // pred_check
        %p140 = pneg %p57
      $region14: #{transformer_forward.30} parent=11 // pred_check_branch
        %142 = sbr.rel (%p140) target = $region16
      $region15: #{transformer_forward.30} parent=11 // pred_region
        _
      $region16: #{transformer_forward.30} parent=11 // pred_fallthru
        _
      // Predicated region
      $region17: #{transformer_forward.30} parent=11 // pred_check
        %p143 = pneg %p78
      $region18: #{transformer_forward.30} parent=11 // pred_check_branch
        %145 = sbr.rel (%p143) target = $region20
      $region19: #{transformer_forward.30} parent=11 // pred_region
        _
      $region20: #{transformer_forward.30} parent=11 // pred_fallthru
        _
      // Predicated region
      $region21: #{transformer_forward.30} parent=11 // pred_check
        %p146 = pneg %p99
      $region22: #{transformer_forward.30} parent=11 // pred_check_branch
        %148 = sbr.rel (%p146) target = $region24
      $region23: #{transformer_forward.30} parent=11 // pred_region
        _
      $region24: #{transformer_forward.30} parent=11 // pred_fallthru
        _
    $region12: #{transformer_forward.30} parent=5 // pred_fallthru
      _
    %p149 = scmp.lt.s32.totalorder %s10, 2
    // Predicated region
    $region25: #{transformer_forward.30} parent=5 // pred_check
      %p150 = pneg %p149
    $region26: #{transformer_forward.30} parent=5 // pred_check_branch
      %152 = sbr.rel (%p150) target = $region28
    $region27: #{transformer_forward.30} parent=5 // pred_region
      // Predicated region
      $region29: #{transformer_forward.30} parent=27 // pred_check
        %p153 = pneg %p30
      $region30: #{transformer_forward.30} parent=27 // pred_check_branch
        %155 = sbr.rel (%p153) target = $region32
      $region31: #{transformer_forward.30} parent=27 // pred_region
        %s156 = smul.u32 2, %s10
        %p157 = scmp.lt.s32.totalorder %s156, 3
        %s158 = scalar_select %p157, %s156, 3
        %s159 = smul.addr %s158, 8
        %s160 = scalar_lea.vmem %s0, %s159
        %s161 = smul.u32 2, %s10
      $region32: #{transformer_forward.30} parent=27 // pred_fallthru
        _
    $region28: #{transformer_forward.30} parent=5 // pred_fallthru
      _
    %p162 = scmp.le.s32.totalorder 1, %s10
    %p163 = scmp.lt.s32.totalorder %s10, 3
    %p164 = pnand %p162, %p163
    %p165 = pneg %p164
    // Predicated region
    $region33: #{transformer_forward.30} parent=5 // pred_check
      _
    $region34: #{transformer_forward.30} parent=5 // pred_check_branch
      %167 = sbr.rel (%p164) target = $region36
    $region35: #{transformer_forward.30} parent=5 // pred_region
      %s168 = ssub.s32 %s10, 1
      %s169 = smul.u32 2, %s15
      %p170 = scmp.lt.s32.totalorder %s169, 3
      %s171 = scalar_select %p170, %s169, 3
      %s172 = smul.addr %s171, 8
      %s173 = scalar_lea.vmem %s0, %s172
      %p174 = pneg %p36
      %p175 = pneg %p33
      %p176 = pneg %p57
      %p177 = pneg %p54
      %p178 = pneg %p78
      %p179 = pneg %p75
      %p180 = pneg %p99
      %p181 = pneg %p96
      %p182 = pneg %p125
      %p183 = pneg %p122
      %s184 = smul.u32 2, %s15
      %p185 = scmp.lt.s32.totalorder %s184, 3
      %s186 = scalar_select %p185, %s184, 3
      %s187 = smul.addr %s186, 4
      %s188 = scalar_lea.vmem %s4, %s187
      %s189 = smul.u32 2, %s15
      %p190 = scmp.lt.s32.totalorder %s189, 3
      %s191 = scalar_select %p190, %s189, 3
      %s192 = smul.addr %s191, 8
      %s193 = scalar_lea.vmem %s0, %s192
      %s194 = smul.u32 2, %s15
      %s195 = smul.u32 2, %s15
      %p196 = scmp.lt.s32.totalorder %s195, 3
      %s197 = scalar_select %p196, %s195, 3
      %s198 = smul.addr %s197, 4
      %s199 = scalar_lea.vmem %s4, %s198
      %s200 = smul.u32 2, %s15
      %v202 = vld [vmem:[%s193] sm:$0xff]
      %v203 = vld [vmem:[%s193 + $0x8] sm:$0xff]
      %204 = vadd.xlane.f32.xlu0 %v202
      %v205 = vpop.xlane.xlu0 %204
      %206 = vadd.xlane.f32.xlu0 %v203
      %v207 = vpop.xlane.xlu0 %206
      %v208 = vrcp.pop 128.0
      %v209 = vmul.f32 %v205, %v208
      %v210 = vmul.f32 %v207, %v208
      %v211 = vsub.f32 %v202, %v209
      %v212 = vsub.f32 %v203, %v210
      %v213 = vmul.f32 %v211, %v211
      %v214 = vmul.f32 %v212, %v212
      %215 = vadd.xlane.f32.xlu0 %v213
      %v216 = vpop.xlane.xlu0 %215
      %217 = vadd.xlane.f32.xlu0 %v214
      %v218 = vpop.xlane.xlu0 %217
      %v219 = vmul.f32 %v216, %v208
      %v220 = vmul.f32 %v218, %v208
      %v221 = vadd.f32 %v219, 1e-06
      %v222 = vadd.f32 %v220, 1e-06
      %v223 = vrsqrt.pop %v221
      %v224 = vrsqrt.pop %v222
      %v225 = vmul.f32 %v211, %v223
      %v226 = vmul.f32 %v212, %v224
      %v227 = vld [vmem:[%s1] sm:$0x1]
      %v229 = vlaneseq
      %v230 = vshrl.u32 %v229, 7
      %v231 = vsub.s32 0, %v230
      %v232 = vrot.slane %v227, %v231
      %v234 = vmul.f32 %v225, %v232
      %v235 = vmul.f32 %v226, %v232
      %v236 = vld [vmem:[%s2] sm:$0x1]
      %v238 = vlaneseq
      %v239 = vshrl.u32 %v238, 7
      %v240 = vsub.s32 0, %v239
      %v241 = vrot.slane %v236, %v240
      %v243 = vadd.f32 %v234, %v241
      %v244 = vadd.f32 %v235, %v241
      %v245 = vpack.c.bf16 %v244, %v243
      %v246 = vld [vmem:[%s3] sm:$0xf]
      %v247 = vld [vmem:[%s3 + $0x4] sm:$0xf]
      %v248 = vld [vmem:[%s3 + $0x8] sm:$0xf]
      %v249 = vld [vmem:[%s3 + $0xc] sm:$0xf]
      %v250 = vld [vmem:[%s3 + $0x10] sm:$0xf]
      %v251 = vld [vmem:[%s3 + $0x14] sm:$0xf]
      %v252 = vld [vmem:[%s3 + $0x18] sm:$0xf]
      %v253 = vld [vmem:[%s3 + $0x1c] sm:$0xf]
      %v254 = vld [vmem:[%s3 + $0x20] sm:$0xf]
      %v255 = vld [vmem:[%s3 + $0x24] sm:$0xf]
      %v256 = vld [vmem:[%s3 + $0x28] sm:$0xf]
      %v257 = vld [vmem:[%s3 + $0x2c] sm:$0xf]
      %v258 = vld [vmem:[%s3 + $0x30] sm:$0xf]
      %v259 = vld [vmem:[%s3 + $0x34] sm:$0xf]
      %v260 = vld [vmem:[%s3 + $0x38] sm:$0xf]
      %v261 = vld [vmem:[%s3 + $0x3c] sm:$0xf]
      %v278 = vunpack.c.l.b16 %v246
      %v279 = vunpack.c.l.b16 %v247
      %v280 = vunpack.c.l.b16 %v248
      %v281 = vunpack.c.l.b16 %v249
      %v282 = vunpack.c.l.b16 %v250
      %v283 = vunpack.c.l.b16 %v251
      %v284 = vunpack.c.l.b16 %v252
      %v285 = vunpack.c.l.b16 %v253
      %v286 = vunpack.c.l.b16 %v254
      %v287 = vunpack.c.l.b16 %v255
      %v288 = vunpack.c.l.b16 %v256
      %v289 = vunpack.c.l.b16 %v257
      %v290 = vunpack.c.l.b16 %v258
      %v291 = vunpack.c.l.b16 %v259
      %v292 = vunpack.c.l.b16 %v260
      %v293 = vunpack.c.l.b16 %v261
      %v294 = vpack.c.b16 %v279, %v278
      %v295 = vpack.c.b16 %v281, %v280
      %v296 = vpack.c.b16 %v283, %v282
      %v297 = vpack.c.b16 %v285, %v284
      %v298 = vpack.c.b16 %v287, %v286
      %v299 = vpack.c.b16 %v289, %v288
      %v300 = vpack.c.b16 %v291, %v290
      %v301 = vpack.c.b16 %v293, %v292
      %310 = vmatprep.subr.bf16.mxu0 0
      %311 = vmatpush1.bf16.msra.mxu0 %v301
      %312 = vmatprep.subr.bf16.mxu0 0
      %313 = vmatpush1.bf16.msra.mxu0 %v300
      %314 = vmatprep.subr.bf16.mxu0 0
      %315 = vmatpush1.bf16.msra.mxu0 %v299
      %316 = vmatprep.subr.bf16.mxu0 0
      %317 = vmatpush1.bf16.msra.mxu0 %v298
      %318 = vmatprep.subr.bf16.mxu0 0
      %319 = vmatpush1.bf16.msra.mxu0 %v297
      %320 = vmatprep.subr.bf16.mxu0 0
      %321 = vmatpush1.bf16.msra.mxu0 %v296
      %322 = vmatprep.subr.bf16.mxu0 0
      %323 = vmatpush1.bf16.msra.mxu0 %v295
      %324 = vmatprep.subr.bf16.mxu0 0
      %325 = vmatpush1.bf16.msra.mxu0 %v294
      %326 = vmatprep.subr.bf16.mxu0 0
      %327 = vmatpush2.bf16.msra.mxu0 0
      %328 = vmatprep.subr.bf16.mxu0 0
      %329 = vmatpush2.bf16.msra.mxu0 0
      %330 = vmatprep.subr.bf16.mxu0 0
      %331 = vmatpush2.bf16.msra.mxu0 0
      %332 = vmatprep.subr.bf16.mxu0 0
      %333 = vmatpush2.bf16.msra.mxu0 0
      %334 = vmatprep.subr.bf16.mxu0 0
      %335 = vmatpush2.bf16.msra.mxu0 0
      %336 = vmatprep.subr.bf16.mxu0 0
      %337 = vmatpush2.bf16.msra.mxu0 0
      %338 = vmatprep.subr.bf16.mxu0 0
      %339 = vmatpush2.bf16.msra.mxu0 0
      %340 = vmatprep.subr.bf16.mxu0 0
      %341 = vmatpush2.bf16.msra.mxu0 0
      %342 = vmatprep.mubr.bf16.mxu0 0
      %343 = vmatmul.mubr.bf16.gmra.mxu0 %v245
      %v344 = vpop.f32.mrf.mxu0
      %v345 = vadd.f32 0.0, %v344
      %v346 = vpop.f32.mrf.mxu0
      %v347 = vpop.f32.mrf.mxu0
      %v348 = vadd.f32 0.0, %v347
      %v349 = vpop.f32.mrf.mxu0
      %350 = vdwg.mxu0
      %v351 = vpack.c.bf16 %v348, %v345
      %v353 = vunpack.c.l.b16 %v351
      %v354 = vunpack.c.h.b16 %v351
      %v355 = vpack.c.b16 %v353, %v353
      %v356 = vpack.c.b16 %v354, %v354
      %359 = vst [vmem:[%s199] sm:$0xf] %v355
      %360 = vst [vmem:[%s199 + $0x4] sm:$0xf] %v356
      %s361 = smul.u32 2, %s15
      %p362 = scmp.lt.s32.totalorder %s361, 3
      %s363 = scalar_select %p362, %s361, 3
      %s364 = smul.addr %s363, 4
      %s365 = scalar_lea.vmem %s4, %s364
      // Predicated region
      $region37: #{transformer_forward.30} parent=35 // pred_check
        %p366 = pneg %p122
      $region38: #{transformer_forward.30} parent=35 // pred_check_branch
        %368 = sbr.rel (%p366) target = $region40
      $region39: #{transformer_forward.30} parent=35 // pred_region
        %s369 = smul.u32 2, %s15
      $region40: #{transformer_forward.30} parent=35 // pred_fallthru
        _
    $region36: #{transformer_forward.30} parent=5 // pred_fallthru
      _
    %p370 = scmp.le.s32.totalorder 2, %s10
    // Predicated region
    $region41: #{transformer_forward.30} parent=5 // pred_check
      %p371 = pneg %p370
    $region42: #{transformer_forward.30} parent=5 // pred_check_branch
      %373 = sbr.rel (%p371) target = $region44
    $region43: #{transformer_forward.30} parent=5 // pred_region
      %s374 = ssub.s32 %s10, 2
      // Predicated region
      $region45: #{transformer_forward.30} parent=43 // pred_check
        %p375 = pneg %p128
      $region46: #{transformer_forward.30} parent=43 // pred_check_branch
        %377 = sbr.rel (%p375) target = $region48
      $region47: #{transformer_forward.30} parent=43 // pred_region
        %s378 = smul.u32 2, %s16
        %p379 = scmp.lt.s32.totalorder %s378, 3
        %s380 = scalar_select %p379, %s378, 3
        %s381 = smul.addr %s380, 4
        %s382 = scalar_lea.vmem %s4, %s381
      $region48: #{transformer_forward.30} parent=43 // pred_fallthru
        _
    $region44: #{transformer_forward.30} parent=5 // pred_fallthru
      _
  $region6: #{transformer_forward.30} parent=0 // loop_footer
    %s14 = sadd.s32 1, %s10
  $region7: #{transformer_forward.30} parent=0 // loop_footer_branch
    %9 = sbr.rel target = $region3
  $region8: #{transformer_forward.30} parent=0 // loop_exit
    _

// kernel: transformer_forward.28
$region0: #{transformer_forward.28}
  #allocation0 [shape = 'u32[]', space=smem, size = 0x4, offset = 0x4, fixed_abs, tag = 'smem constant byte address 0x4 - core index']
  #allocation1 [shape = 'u32[144,128]{1,0:T(1,128)}', space=vmem, size = 0x12000, scoped, tag = 'internal scratch']
  %s0 = inlined_call_operand.vmem [shape: bf16[2,16,128], index: 0, kind: input, shape index: {}]
  %s1 = inlined_call_operand.vmem [shape: bf16[2,16,128], index: 1, kind: input, shape index: {}]
  %s2 = inlined_call_operand.vmem [shape: bf16[2,16,128], index: 2, kind: input, shape index: {}]
  %s3 = inlined_call_operand.vmem [shape: bf16[128,128], index: 3, kind: input, shape index: {}]
  %s4 = inlined_call_operand.vmem [shape: f32[2,16,128], index: 4, kind: input, shape index: {}]
  %s5 = inlined_call_operand.vmem [shape: f32[2,16,128], index: 5, kind: output, shape index: {}]
  %s6 = sld [smem:[#allocation0]]
  $region53: #{transformer_forward.28} parent=0
    _
  %s8 = ssub.s32 1, %s6
  %s9 = scalar_select 0, %s8, %s6
  loop: start=0, step=1, limit=4
  $region2: #{transformer_forward.28} parent=0 // loop_pre_header
    _
  $region3: #{transformer_forward.28} parent=0 // loop_header
    %s11 = sphi 0, %s15
    %p12 = scmp.ge.s32.totalorder %s11, 4
    %s18 = sphi 0, %s30
    %s19 = sphi 0, %s26
    %s20 = sphi 0, %s18
    %s21 = sphi 0, %s19
    %s22 = sphi 0, %s20
    %s23 = sphi 0, %s21
    %s35 = sphi 0, %s37
    %s38 = sphi 0, %s35
    %s39 = sphi 0, %s38
    %s55 = sphi 0, %s39
    %s61 = sphi 0, %s63
    %s64 = sphi 0, %s61
    %s65 = sphi 0, %s64
    %s81 = sphi 0, %s65
    %s87 = sphi 0, %s89
    %s90 = sphi 0, %s87
    %s91 = sphi 0, %s90
    %s107 = sphi 0, %s91
    %s111 = sphi 0, %s111
    %s113 = sphi 0, %s111
    %s114 = sphi 0, %s113
    %s128 = sphi 0, %s114
    %s136 = sphi 0, %s138
    %s139 = sphi 0, %s136
    %s140 = sphi 0, %s139
    %s156 = sphi 0, %s140
    %s164 = sphi 0, %s166
    %s167 = sphi 0, %s164
    %s168 = sphi 0, %s167
    %s184 = sphi 0, %s168
  $region4: #{transformer_forward.28} parent=0 // loop_header_branch
    %14 = sbr.rel (%p12) target = $region8
  $region5: #{transformer_forward.28} parent=0 // loop_body
    %s16 = ssub.s32 %s11, 1
    %s17 = ssub.s32 %s11, 2
    %s24 = sadd.s32 1, %s19
    %p25 = scmp.ge.s32.totalorder %s24, 1
    %s26 = scalar_select %p25, 0, %s24
    %s27 = sadd.s32 1, %s18
    %s28 = scalar_select %p25, %s27, %s18
    %p29 = scmp.ge.s32.totalorder %s28, 2
    %s30 = scalar_select %p29, 0, %s28
    %s31 = ssub.s32 %s18, %s30
    %s32 = ssub.s32 %s19, %s26
    %s33 = sor.u32 %s31, %s32
    %p34 = scmp.eq.s32.totalorder %s33, 0
    %s36 = sadd.s32 %s35, 1
    %s37 = scalar_select %p34, %s35, %s36
    %p40 = pneg %p34
    %p41 = scmp.eq.s32.totalorder %s11, 1
    %p42 = por %p40, %p41
    %p43 = scmp.ne.s32.totalorder %s35, %s38
    %p44 = scmp.eq.s32.totalorder %s11, 0
    %p45 = por %p43, %p44
    %p46 = scmp.ne.s32.totalorder %s35, %s38
    %p47 = scmp.eq.s32.totalorder %s16, 1
    %p48 = por %p46, %p47
    %p49 = scmp.ne.s32.totalorder %s38, %s39
    %p50 = scmp.eq.s32.totalorder %s16, 0
    %p51 = por %p49, %p50
    %p52 = scmp.ne.s32.totalorder %s38, %s39
    %p53 = scmp.eq.s32.totalorder %s17, 1
    %p54 = por %p52, %p53
    %p56 = scmp.ne.s32.totalorder %s39, %s55
    %p57 = scmp.eq.s32.totalorder %s17, 0
    %p58 = por %p56, %p57
    %s59 = ssub.s32 %s18, %s30
    %p60 = scmp.eq.s32.totalorder %s59, 0
    %s62 = sadd.s32 %s61, 1
    %s63 = scalar_select %p60, %s61, %s62
    %p66 = pneg %p60
    %p67 = scmp.eq.s32.totalorder %s11, 1
    %p68 = por %p66, %p67
    %p69 = scmp.ne.s32.totalorder %s61, %s64
    %p70 = scmp.eq.s32.totalorder %s11, 0
    %p71 = por %p69, %p70
    %p72 = scmp.ne.s32.totalorder %s61, %s64
    %p73 = scmp.eq.s32.totalorder %s16, 1
    %p74 = por %p72, %p73
    %p75 = scmp.ne.s32.totalorder %s64, %s65
    %p76 = scmp.eq.s32.totalorder %s16, 0
    %p77 = por %p75, %p76
    %p78 = scmp.ne.s32.totalorder %s64, %s65
    %p79 = scmp.eq.s32.totalorder %s17, 1
    %p80 = por %p78, %p79
    %p82 = scmp.ne.s32.totalorder %s65, %s81
    %p83 = scmp.eq.s32.totalorder %s17, 0
    %p84 = por %p82, %p83
    %s85 = ssub.s32 %s18, %s30
    %p86 = scmp.eq.s32.totalorder %s85, 0
    %s88 = sadd.s32 %s87, 1
    %s89 = scalar_select %p86, %s87, %s88
    %p92 = pneg %p86
    %p93 = scmp.eq.s32.totalorder %s11, 1
    %p94 = por %p92, %p93
    %p95 = scmp.ne.s32.totalorder %s87, %s90
    %p96 = scmp.eq.s32.totalorder %s11, 0
    %p97 = por %p95, %p96
    %p98 = scmp.ne.s32.totalorder %s87, %s90
    %p99 = scmp.eq.s32.totalorder %s16, 1
    %p100 = por %p98, %p99
    %p101 = scmp.ne.s32.totalorder %s90, %s91
    %p102 = scmp.eq.s32.totalorder %s16, 0
    %p103 = por %p101, %p102
    %p104 = scmp.ne.s32.totalorder %s90, %s91
    %p105 = scmp.eq.s32.totalorder %s17, 1
    %p106 = por %p104, %p105
    %p108 = scmp.ne.s32.totalorder %s91, %s107
    %p109 = scmp.eq.s32.totalorder %s17, 0
    %p110 = por %p108, %p109
    %s112 = sadd.s32 %s111, 1
    %p115 = scmp.eq.s32.totalorder %s11, 1
    %p116 = scmp.ne.s32.totalorder %s111, %s113
    %p117 = scmp.eq.s32.totalorder %s11, 0
    %p118 = por %p116, %p117
    %p119 = scmp.ne.s32.totalorder %s111, %s113
    %p120 = scmp.eq.s32.totalorder %s16, 1
    %p121 = por %p119, %p120
    %p122 = scmp.ne.s32.totalorder %s113, %s114
    %p123 = scmp.eq.s32.totalorder %s16, 0
    %p124 = por %p122, %p123
    %p125 = scmp.ne.s32.totalorder %s113, %s114
    %p126 = scmp.eq.s32.totalorder %s17, 1
    %p127 = por %p125, %p126
    %p129 = scmp.ne.s32.totalorder %s114, %s128
    %p130 = scmp.eq.s32.totalorder %s17, 0
    %p131 = por %p129, %p130
    %s132 = ssub.s32 %s18, %s30
    %s133 = ssub.s32 %s19, %s26
    %s134 = sor.u32 %s132, %s133
    %p135 = scmp.eq.s32.totalorder %s134, 0
    %s137 = sadd.s32 %s136, 1
    %s138 = scalar_select %p135, %s136, %s137
    %p141 = pneg %p135
    %p142 = scmp.eq.s32.totalorder %s11, 1
    %p143 = por %p141, %p142
    %p144 = scmp.ne.s32.totalorder %s136, %s139
    %p145 = scmp.eq.s32.totalorder %s11, 0
    %p146 = por %p144, %p145
    %p147 = scmp.ne.s32.totalorder %s136, %s139
    %p148 = scmp.eq.s32.totalorder %s16, 1
    %p149 = por %p147, %p148
    %p150 = scmp.ne.s32.totalorder %s139, %s140
    %p151 = scmp.eq.s32.totalorder %s16, 0
    %p152 = por %p150, %p151
    %p153 = scmp.ne.s32.totalorder %s139, %s140
    %p154 = scmp.eq.s32.totalorder %s17, 1
    %p155 = por %p153, %p154
    %p157 = scmp.ne.s32.totalorder %s140, %s156
    %p158 = scmp.eq.s32.totalorder %s17, 0
    %p159 = por %p157, %p158
    %s160 = ssub.s32 %s18, %s30
    %s161 = ssub.s32 %s19, %s26
    %s162 = sor.u32 %s160, %s161
    %p163 = scmp.eq.s32.totalorder %s162, 0
    %s165 = sadd.s32 %s164, 1
    %s166 = scalar_select %p163, %s164, %s165
    %p169 = pneg %p163
    %p170 = scmp.eq.s32.totalorder %s11, 1
    %p171 = por %p169, %p170
    %p172 = scmp.ne.s32.totalorder %s164, %s167
    %p173 = scmp.eq.s32.totalorder %s11, 0
    %p174 = por %p172, %p173
    %p175 = scmp.ne.s32.totalorder %s164, %s167
    %p176 = scmp.eq.s32.totalorder %s16, 1
    %p177 = por %p175, %p176
    %p178 = scmp.ne.s32.totalorder %s167, %s168
    %p179 = scmp.eq.s32.totalorder %s16, 0
    %p180 = por %p178, %p179
    %p181 = scmp.ne.s32.totalorder %s167, %s168
    %p182 = scmp.eq.s32.totalorder %s17, 1
    %p183 = por %p181, %p182
    %p185 = scmp.ne.s32.totalorder %s168, %s184
    %p186 = scmp.eq.s32.totalorder %s17, 0
    %p187 = por %p185, %p186
    %p188 = scmp.le.s32.totalorder 1, %s11
    %p189 = scmp.lt.s32.totalorder %s11, 3
    %p190 = pnand %p188, %p189
    %p191 = pneg %p190
    // Predicated region
    $region9: #{transformer_forward.28} parent=5 // pred_check
      _
    $region10: #{transformer_forward.28} parent=5 // pred_check_branch
      %193 = sbr.rel (%p190) target = $region12
    $region11: #{transformer_forward.28} parent=5 // pred_region
      %s194 = ssub.s32 %s11, 1
      // Predicated region
      $region13: #{transformer_forward.28} parent=11 // pred_check
        %p195 = pneg %p124
      $region14: #{transformer_forward.28} parent=11 // pred_check_branch
        %197 = sbr.rel (%p195) target = $region16
      $region15: #{transformer_forward.28} parent=11 // pred_region
        _
      $region16: #{transformer_forward.28} parent=11 // pred_fallthru
        _
    $region12: #{transformer_forward.28} parent=5 // pred_fallthru
      _
    %p198 = scmp.lt.s32.totalorder %s11, 2
    // Predicated region
    $region17: #{transformer_forward.28} parent=5 // pred_check
      %p199 = pneg %p198
    $region18: #{transformer_forward.28} parent=5 // pred_check_branch
      %201 = sbr.rel (%p199) target = $region20
    $region19: #{transformer_forward.28} parent=5 // pred_region
      // Predicated region
      $region21: #{transformer_forward.28} parent=19 // pred_check
        %p202 = pneg %p45
      $region22: #{transformer_forward.28} parent=19 // pred_check_branch
        %204 = sbr.rel (%p202) target = $region24
      $region23: #{transformer_forward.28} parent=19 // pred_region
        %s205 = smul.u32 2, %s19
        %p206 = scmp.lt.s32.totalorder %s18, 1
        %s207 = scalar_select %p206, %s18, 1
        %p208 = scmp.lt.s32.totalorder %s205, 1
        %s209 = scalar_select %p208, %s205, 1
        %s210 = smul.addr %s207, 2
        %s211 = sadd.s32 %s209, %s210
        %s212 = smul.addr %s211, 4
        %s213 = scalar_lea.vmem %s0, %s212
        %s214 = smul.u32 2, %s19
      $region24: #{transformer_forward.28} parent=19 // pred_fallthru
        _
      // Predicated region
      $region25: #{transformer_forward.28} parent=19 // pred_check
        %p215 = pneg %p71
      $region26: #{transformer_forward.28} parent=19 // pred_check_branch
        %217 = sbr.rel (%p215) target = $region28
      $region27: #{transformer_forward.28} parent=19 // pred_region
        %p218 = scmp.lt.s32.totalorder %s18, 1
        %s219 = scalar_select %p218, %s18, 1
        %s220 = smul.addr %s219, 2
        %s221 = smul.addr %s220, 4
        %s222 = scalar_lea.vmem %s1, %s221
      $region28: #{transformer_forward.28} parent=19 // pred_fallthru
        _
      // Predicated region
      $region29: #{transformer_forward.28} parent=19 // pred_check
        %p223 = pneg %p97
      $region30: #{transformer_forward.28} parent=19 // pred_check_branch
        %225 = sbr.rel (%p223) target = $region32
      $region31: #{transformer_forward.28} parent=19 // pred_region
        %p226 = scmp.lt.s32.totalorder %s18, 1
        %s227 = scalar_select %p226, %s18, 1
        %s228 = smul.addr %s227, 2
        %s229 = smul.addr %s228, 4
        %s230 = scalar_lea.vmem %s2, %s229
      $region32: #{transformer_forward.28} parent=19 // pred_fallthru
        _
      // Predicated region
      $region33: #{transformer_forward.28} parent=19 // pred_check
        %p231 = pneg %p146
      $region34: #{transformer_forward.28} parent=19 // pred_check_branch
        %233 = sbr.rel (%p231) target = $region36
      $region35: #{transformer_forward.28} parent=19 // pred_region
        %s234 = smul.u32 2, %s19
        %p235 = scmp.lt.s32.totalorder %s18, 1
        %s236 = scalar_select %p235, %s18, 1
        %p237 = scmp.lt.s32.totalorder %s234, 1
        %s238 = scalar_select %p237, %s234, 1
        %s239 = smul.addr %s236, 2
        %s240 = sadd.s32 %s238, %s239
        %s241 = smul.addr %s240, 8
        %s242 = scalar_lea.vmem %s4, %s241
        %s243 = smul.u32 2, %s19
      $region36: #{transformer_forward.28} parent=19 // pred_fallthru
        _
    $region20: #{transformer_forward.28} parent=5 // pred_fallthru
      _
    %p244 = scmp.le.s32.totalorder 1, %s11
    %p245 = scmp.lt.s32.totalorder %s11, 3
    %p246 = pnand %p244, %p245
    %p247 = pneg %p246
    // Predicated region
    $region37: #{transformer_forward.28} parent=5 // pred_check
      _
    $region38: #{transformer_forward.28} parent=5 // pred_check_branch
      %249 = sbr.rel (%p246) target = $region40
    $region39: #{transformer_forward.28} parent=5 // pred_region
      %s250 = ssub.s32 %s11, 1
      %s251 = smul.u32 2, %s21
      %p252 = scmp.lt.s32.totalorder %s20, 1
      %s253 = scalar_select %p252, %s20, 1
      %p254 = scmp.lt.s32.totalorder %s251, 1
      %s255 = scalar_select %p254, %s251, 1
      %s256 = smul.addr %s253, 2
      %s257 = sadd.s32 %s255, %s256
      %s258 = smul.addr %s257, 4
      %s259 = scalar_lea.vmem %s0, %s258
      %p260 = pneg %p51
      %p261 = pneg %p48
      %p262 = scmp.lt.s32.totalorder %s20, 1
      %s263 = scalar_select %p262, %s20, 1
      %s264 = smul.addr %s263, 2
      %s265 = smul.addr %s264, 4
      %s266 = scalar_lea.vmem %s1, %s265
      %p267 = pneg %p77
      %p268 = pneg %p74
      %p269 = scmp.lt.s32.totalorder %s20, 1
      %s270 = scalar_select %p269, %s20, 1
      %s271 = smul.addr %s270, 2
      %s272 = smul.addr %s271, 4
      %s273 = scalar_lea.vmem %s2, %s272
      %p274 = pneg %p103
      %p275 = pneg %p100
      %p276 = pneg %p124
      %p277 = pneg %p121
      %s278 = smul.u32 2, %s21
      %p279 = scmp.lt.s32.totalorder %s20, 1
      %s280 = scalar_select %p279, %s20, 1
      %p281 = scmp.lt.s32.totalorder %s278, 1
      %s282 = scalar_select %p281, %s278, 1
      %s283 = smul.addr %s280, 2
      %s284 = sadd.s32 %s282, %s283
      %s285 = smul.addr %s284, 8
      %s286 = scalar_lea.vmem %s4, %s285
      %p287 = pneg %p152
      %p288 = pneg %p149
      %p289 = pneg %p180
      %p290 = pneg %p177
      %s291 = smul.u32 2, %s21
      %p292 = scmp.lt.s32.totalorder %s20, 1
      %s293 = scalar_select %p292, %s20, 1
      %p294 = scmp.lt.s32.totalorder %s291, 1
      %s295 = scalar_select %p294, %s291, 1
      %s296 = smul.addr %s293, 2
      %s297 = sadd.s32 %s295, %s296
      %s298 = smul.addr %s297, 8
      %s299 = scalar_lea.vmem %s5, %s298
      %s300 = smul.u32 2, %s21
      %p301 = scmp.lt.s32.totalorder %s20, 1
      %s302 = scalar_select %p301, %s20, 1
      %p303 = scmp.lt.s32.totalorder %s300, 1
      %s304 = scalar_select %p303, %s300, 1
      %s305 = smul.addr %s302, 2
      %s306 = sadd.s32 %s304, %s305
      %s307 = smul.addr %s306, 4
      %s308 = scalar_lea.vmem %s0, %s307
      %s309 = smul.u32 2, %s21
      %p310 = scmp.lt.s32.totalorder %s20, 1
      %s311 = scalar_select %p310, %s20, 1
      %s312 = smul.addr %s311, 2
      %s313 = smul.addr %s312, 4
      %s314 = scalar_lea.vmem %s1, %s313
      %p315 = scmp.lt.s32.totalorder %s20, 1
      %s316 = scalar_select %p315, %s20, 1
      %s317 = smul.addr %s316, 2
      %s318 = smul.addr %s317, 4
      %s319 = scalar_lea.vmem %s2, %s318
      %s320 = smul.u32 2, %s21
      %p321 = scmp.lt.s32.totalorder %s20, 1
      %s322 = scalar_select %p321, %s20, 1
      %p323 = scmp.lt.s32.totalorder %s320, 1
      %s324 = scalar_select %p323, %s320, 1
      %s325 = smul.addr %s322, 2
      %s326 = sadd.s32 %s324, %s325
      %s327 = smul.addr %s326, 8
      %s328 = scalar_lea.vmem %s4, %s327
      %s329 = smul.u32 2, %s21
      %s330 = smul.u32 2, %s21
      %p331 = scmp.lt.s32.totalorder %s20, 1
      %s332 = scalar_select %p331, %s20, 1
      %p333 = scmp.lt.s32.totalorder %s330, 1
      %s334 = scalar_select %p333, %s330, 1
      %s335 = smul.addr %s332, 2
      %s336 = sadd.s32 %s334, %s335
      %s337 = smul.addr %s336, 8
      %s338 = scalar_lea.vmem %s5, %s337
      %s339 = smul.u32 2, %s21
      %v342 = vld [vmem:[%s308] sm:$0xf]
      %v343 = vld [vmem:[%s308 + $0x4] sm:$0xf]
      %v344 = vld [vmem:[%s314] sm:$0xf]
      %v345 = vld [vmem:[%s314 + $0x4] sm:$0xf]
      %v346 = vld [vmem:[%s319] sm:$0xf]
      %v347 = vld [vmem:[%s319 + $0x4] sm:$0xf]
      %v348 = vmul.bf16 %v342, 1043676725
      %v349 = vmul.bf16 %v343, 1043676725
      %s350 = smul.u32 %s21, 16
      %v351 = vlaneseq
      %v352 = vshrl.u32 %v351, 7
      %v353 = vadd.s32 %v352, 8
      %v354 = vstv %s350
      %v355 = vadd.s32 %v354, %v352
      %v356 = vadd.s32 %v354, %v353
      %v357 = vlaneseq
      %v358 = vand.u32 %v357, 127
      %vm359 = vcmp.gt.s32.totalorder %v358, %v355
      %vm360 = vcmp.gt.s32.totalorder %v358, %v356
      %v361 = vsel %vm359, -1e+09, 0.0
      %v362 = vsel %vm360, -1e+09, 0.0
      %v365 = vunpack.c.l.b16 %v348
      %v366 = vunpack.c.l.b16 %v349
      %v367 = vpack.c.b16 %v366, %v365
      %v370 = vunpack.c.l.b16 %v344
      %v371 = vunpack.c.l.b16 %v345
      %v372 = vpack.c.b16 %v371, %v370
      %vm373 = vcmask 261120
      %v375 = vsel %vm373, %v367, 0
      %v378 = vsel %vm373, %v372, 0
      %380 = vmatprep.subr.bf16.mxu0 0
      %381 = vmatpush1.bf16.xpose.msra.mxu0 0
      %382 = vmatprep.subr.bf16.mxu0 0
      %383 = vmatpush1.bf16.xpose.msra.mxu0 0
      %384 = vmatprep.subr.bf16.mxu0 0
      %385 = vmatpush1.bf16.xpose.msra.mxu0 0
      %386 = vmatprep.subr.bf16.mxu0 0
      %387 = vmatpush1.bf16.xpose.msra.mxu0 0
      %388 = vmatprep.subr.bf16.mxu0 0
      %389 = vmatpush1.bf16.xpose.msra.mxu0 0
      %390 = vmatprep.subr.bf16.mxu0 0
      %391 = vmatpush1.bf16.xpose.msra.mxu0 0
      %392 = vmatprep.subr.bf16.mxu0 0
      %393 = vmatpush1.bf16.xpose.msra.mxu0 0
      %394 = vmatprep.subr.bf16.mxu0 0
      %395 = vmatpush1.bf16.xpose.msra.mxu0 %v378
      %396 = vmatprep.subr.bf16.mxu0 0
      %397 = vmatpush2.bf16.xpose.msra.mxu0 0
      %398 = vmatprep.subr.bf16.mxu0 0
      %399 = vmatpush2.bf16.xpose.msra.mxu0 0
      %400 = vmatprep.subr.bf16.mxu0 0
      %401 = vmatpush2.bf16.xpose.msra.mxu0 0
      %402 = vmatprep.subr.bf16.mxu0 0
      %403 = vmatpush2.bf16.xpose.msra.mxu0 0
      %404 = vmatprep.subr.bf16.mxu0 0
      %405 = vmatpush2.bf16.xpose.msra.mxu0 0
      %406 = vmatprep.subr.bf16.mxu0 0
      %407 = vmatpush2.bf16.xpose.msra.mxu0 0
      %408 = vmatprep.subr.bf16.mxu0 0
      %409 = vmatpush2.bf16.xpose.msra.mxu0 0
      %410 = vmatprep.subr.bf16.mxu0 0
      %411 = vmatpush2.bf16.xpose.msra.mxu0 0
      %412 = vmatprep.mubr.bf16.mxu0 0
      %413 = vmatmul.mubr.bf16.gmra.mxu0 %v375
      %v414 = vpop.f32.mrf.mxu0
      %v415 = vadd.f32 %v361, %v414
      %v416 = vpop.f32.mrf.mxu0
      %v417 = vpop.f32.mrf.mxu0
      %v418 = vadd.f32 %v362, %v417
      %v419 = vpop.f32.mrf.mxu0
      %420 = vdwg.mxu0
      %vm421 = vcmask 130048
      %v422 = vsel %vm421, %v415, -inf
      %423 = vmax.xlane.f32.xlu0 %v422
      %v424 = vpop.xlane.xlu0 %423
      %v425 = vsel %vm421, %v418, -inf
      %426 = vmax.xlane.f32.xlu0 %v425
      %v427 = vpop.xlane.xlu0 %426
      %v428 = vsub.f32 %v415, %v424
      %v429 = vsub.f32 %v418, %v427
      %v430 = vmul.f32 %v428, 1.442695
      %v431 = vpow.pop %v430
      %v432 = vmul.f32 %v429, 1.442695
      %v433 = vpow.pop %v432
      %v434 = vsel %vm421, %v431, 0.0
      %435 = vadd.xlane.f32.xlu0 %v434
      %v436 = vpop.xlane.xlu0 %435
      %v437 = vsel %vm421, %v433, 0.0
      %438 = vadd.xlane.f32.xlu0 %v437
      %v439 = vpop.xlane.xlu0 %438
      %v440 = vpack.c.bf16 %v433, %v431
      %v443 = vunpack.c.l.b16 %v346
      %v444 = vunpack.c.l.b16 %v347
      %v445 = vpack.c.b16 %v444, %v443
      %v448 = vsel %vm421, %v440, 0
      %450 = vmatprep.subr.bf16.mxu0 0
      %451 = vmatpush1.bf16.msra.mxu0 0
      %452 = vmatprep.subr.bf16.mxu0 0
      %453 = vmatpush1.bf16.msra.mxu0 0
      %454 = vmatprep.subr.bf16.mxu0 0
      %455 = vmatpush1.bf16.msra.mxu0 0
      %456 = vmatprep.subr.bf16.mxu0 0
      %457 = vmatpush1.bf16.msra.mxu0 0
      %458 = vmatprep.subr.bf16.mxu0 0
      %459 = vmatpush1.bf16.msra.mxu0 0
      %460 = vmatprep.subr.bf16.mxu0 0
      %461 = vmatpush1.bf16.msra.mxu0 0
      %462 = vmatprep.subr.bf16.mxu0 0
      %463 = vmatpush1.bf16.msra.mxu0 0
      %464 = vmatprep.subr.bf16.mxu0 0
      %465 = vmatpush1.bf16.msra.mxu0 %v445
      %466 = vmatprep.subr.bf16.mxu0 0
      %467 = vmatpush2.bf16.msra.mxu0 0
      %468 = vmatprep.subr.bf16.mxu0 0
      %469 = vmatpush2.bf16.msra.mxu0 0
      %470 = vmatprep.subr.bf16.mxu0 0
      %471 = vmatpush2.bf16.msra.mxu0 0
      %472 = vmatprep.subr.bf16.mxu0 0
      %473 = vmatpush2.bf16.msra.mxu0 0
      %474 = vmatprep.subr.bf16.mxu0 0
      %475 = vmatpush2.bf16.msra.mxu0 0
      %476 = vmatprep.subr.bf16.mxu0 0
      %477 = vmatpush2.bf16.msra.mxu0 0
      %478 = vmatprep.subr.bf16.mxu0 0
      %479 = vmatpush2.bf16.msra.mxu0 0
      %480 = vmatprep.subr.bf16.mxu0 0
      %481 = vmatpush2.bf16.msra.mxu0 0
      %482 = vmatprep.mubr.bf16.mxu0 0
      %483 = vmatmul.mubr.bf16.gmra.mxu0 %v448
      %v484 = vpop.f32.mrf.mxu0
      %v485 = vadd.f32 0.0, %v484
      %v486 = vpop.f32.mrf.mxu0
      %v487 = vpop.f32.mrf.mxu0
      %v488 = vadd.f32 0.0, %v487
      %v489 = vpop.f32.mrf.mxu0
      %490 = vdwg.mxu0
      %v491 = vrcp.pop %v436
      %v492 = vrcp.pop %v439
      %v493 = vmul.f32 %v485, %v491
      %v494 = vmul.f32 %v488, %v492
      %495 = vrot.lane.b32.xlu0 %v367, 96
      %v496 = vpop.permute.xlu0 %495
      %497 = vrot.lane.b32.xlu0 %v372, 96
      %v498 = vpop.permute.xlu0 %497
      %v500 = vsel %vm373, %v496, 0
      %v503 = vsel %vm373, %v498, 0
      %505 = vmatprep.subr.bf16.mxu0 0
      %506 = vmatpush1.bf16.xpose.msra.mxu0 0
      %507 = vmatprep.subr.bf16.mxu0 0
      %508 = vmatpush1.bf16.xpose.msra.mxu0 0
      %509 = vmatprep.subr.bf16.mxu0 0
      %510 = vmatpush1.bf16.xpose.msra.mxu0 0
      %511 = vmatprep.subr.bf16.mxu0 0
      %512 = vmatpush1.bf16.xpose.msra.mxu0 0
      %513 = vmatprep.subr.bf16.mxu0 0
      %514 = vmatpush1.bf16.xpose.msra.mxu0 0
      %515 = vmatprep.subr.bf16.mxu0 0
      %516 = vmatpush1.bf16.xpose.msra.mxu0 0
      %517 = vmatprep.subr.bf16.mxu0 0
      %518 = vmatpush1.bf16.xpose.msra.mxu0 0
      %519 = vmatprep.subr.bf16.mxu0 0
      %520 = vmatpush1.bf16.xpose.msra.mxu0 %v503
      %521 = vmatprep.subr.bf16.mxu0 0
      %522 = vmatpush2.bf16.xpose.msra.mxu0 0
      %523 = vmatprep.subr.bf16.mxu0 0
      %524 = vmatpush2.bf16.xpose.msra.mxu0 0
      %525 = vmatprep.subr.bf16.mxu0 0
      %526 = vmatpush2.bf16.xpose.msra.mxu0 0
      %527 = vmatprep.subr.bf16.mxu0 0
      %528 = vmatpush2.bf16.xpose.msra.mxu0 0
      %529 = vmatprep.subr.bf16.mxu0 0
      %530 = vmatpush2.bf16.xpose.msra.mxu0 0
      %531 = vmatprep.subr.bf16.mxu0 0
      %532 = vmatpush2.bf16.xpose.msra.mxu0 0
      %533 = vmatprep.subr.bf16.mxu0 0
      %534 = vmatpush2.bf16.xpose.msra.mxu0 0
      %535 = vmatprep.subr.bf16.mxu0 0
      %536 = vmatpush2.bf16.xpose.msra.mxu0 0
      %537 = vmatprep.mubr.bf16.mxu0 0
      %538 = vmatmul.mubr.bf16.gmra.mxu0 %v500
      %v539 = vpop.f32.mrf.mxu0
      %v540 = vadd.f32 %v361, %v539
      %v541 = vpop.f32.mrf.mxu0
      %v542 = vpop.f32.mrf.mxu0
      %v543 = vadd.f32 %v362, %v542
      %v544 = vpop.f32.mrf.mxu0
      %545 = vdwg.mxu0
      %v546 = vsel %vm421, %v540, -inf
      %547 = vmax.xlane.f32.xlu0 %v546
      %v548 = vpop.xlane.xlu0 %547
      %v549 = vsel %vm421, %v543, -inf
      %550 = vmax.xlane.f32.xlu0 %v549
      %v551 = vpop.xlane.xlu0 %550
      %v552 = vsub.f32 %v540, %v548
      %v553 = vsub.f32 %v543, %v551
      %v554 = vmul.f32 %v552, 1.442695
      %v555 = vpow.pop %v554
      %v556 = vmul.f32 %v553, 1.442695
      %v557 = vpow.pop %v556
      %v558 = vsel %vm421, %v555, 0.0
      %559 = vadd.xlane.f32.xlu0 %v558
      %v560 = vpop.xlane.xlu0 %559
      %v561 = vsel %vm421, %v557, 0.0
      %562 = vadd.xlane.f32.xlu0 %v561
      %v563 = vpop.xlane.xlu0 %562
      %v564 = vpack.c.bf16 %v557, %v555
      %565 = vrot.lane.b32.xlu0 %v445, 96
      %v566 = vpop.permute.xlu0 %565
      %v569 = vsel %vm421, %v564, 0
      %571 = vmatprep.subr.bf16.mxu0 0
      %572 = vmatpush1.bf16.msra.mxu0 0
      %573 = vmatprep.subr.bf16.mxu0 0
      %574 = vmatpush1.bf16.msra.mxu0 0
      %575 = vmatprep.subr.bf16.mxu0 0
      %576 = vmatpush1.bf16.msra.mxu0 0
      %577 = vmatprep.subr.bf16.mxu0 0
      %578 = vmatpush1.bf16.msra.mxu0 0
      %579 = vmatprep.subr.bf16.mxu0 0
      %580 = vmatpush1.bf16.msra.mxu0 0
      %581 = vmatprep.subr.bf16.mxu0 0
      %582 = vmatpush1.bf16.msra.mxu0 0
      %583 = vmatprep.subr.bf16.mxu0 0
      %584 = vmatpush1.bf16.msra.mxu0 0
      %585 = vmatprep.subr.bf16.mxu0 0
      %586 = vmatpush1.bf16.msra.mxu0 %v566
      %587 = vmatprep.subr.bf16.mxu0 0
      %588 = vmatpush2.bf16.msra.mxu0 0
      %589 = vmatprep.subr.bf16.mxu0 0
      %590 = vmatpush2.bf16.msra.mxu0 0
      %591 = vmatprep.subr.bf16.mxu0 0
      %592 = vmatpush2.bf16.msra.mxu0 0
      %593 = vmatprep.subr.bf16.mxu0 0
      %594 = vmatpush2.bf16.msra.mxu0 0
      %595 = vmatprep.subr.bf16.mxu0 0
      %596 = vmatpush2.bf16.msra.mxu0 0
      %597 = vmatprep.subr.bf16.mxu0 0
      %598 = vmatpush2.bf16.msra.mxu0 0
      %599 = vmatprep.subr.bf16.mxu0 0
      %600 = vmatpush2.bf16.msra.mxu0 0
      %601 = vmatprep.subr.bf16.mxu0 0
      %602 = vmatpush2.bf16.msra.mxu0 0
      %603 = vmatprep.mubr.bf16.mxu0 0
      %604 = vmatmul.mubr.bf16.gmra.mxu0 %v569
      %v605 = vpop.f32.mrf.mxu0
      %v606 = vadd.f32 0.0, %v605
      %v607 = vpop.f32.mrf.mxu0
      %v608 = vpop.f32.mrf.mxu0
      %v609 = vadd.f32 0.0, %v608
      %v610 = vpop.f32.mrf.mxu0
      %611 = vdwg.mxu0
      %v612 = vrcp.pop %v560
      %v613 = vrcp.pop %v563
      %v614 = vmul.f32 %v606, %v612
      %v615 = vmul.f32 %v609, %v613
      %616 = vrot.lane.b32.xlu0 %v367, 64
      %v617 = vpop.permute.xlu0 %616
      %618 = vrot.lane.b32.xlu0 %v372, 64
      %v619 = vpop.permute.xlu0 %618
      %v621 = vsel %vm373, %v617, 0
      %v624 = vsel %vm373, %v619, 0
      %626 = vmatprep.subr.bf16.mxu0 0
      %627 = vmatpush1.bf16.xpose.msra.mxu0 0
      %628 = vmatprep.subr.bf16.mxu0 0
      %629 = vmatpush1.bf16.xpose.msra.mxu0 0
      %630 = vmatprep.subr.bf16.mxu0 0
      %631 = vmatpush1.bf16.xpose.msra.mxu0 0
      %632 = vmatprep.subr.bf16.mxu0 0
      %633 = vmatpush1.bf16.xpose.msra.mxu0 0
      %634 = vmatprep.subr.bf16.mxu0 0
      %635 = vmatpush1.bf16.xpose.msra.mxu0 0
      %636 = vmatprep.subr.bf16.mxu0 0
      %637 = vmatpush1.bf16.xpose.msra.mxu0 0
      %638 = vmatprep.subr.bf16.mxu0 0
      %639 = vmatpush1.bf16.xpose.msra.mxu0 0
      %640 = vmatprep.subr.bf16.mxu0 0
      %641 = vmatpush1.bf16.xpose.msra.mxu0 %v624
      %642 = vmatprep.subr.bf16.mxu0 0
      %643 = vmatpush2.bf16.xpose.msra.mxu0 0
      %644 = vmatprep.subr.bf16.mxu0 0
      %645 = vmatpush2.bf16.xpose.msra.mxu0 0
      %646 = vmatprep.subr.bf16.mxu0 0
      %647 = vmatpush2.bf16.xpose.msra.mxu0 0
      %648 = vmatprep.subr.bf16.mxu0 0
      %649 = vmatpush2.bf16.xpose.msra.mxu0 0
      %650 = vmatprep.subr.bf16.mxu0 0
      %651 = vmatpush2.bf16.xpose.msra.mxu0 0
      %652 = vmatprep.subr.bf16.mxu0 0
      %653 = vmatpush2.bf16.xpose.msra.mxu0 0
      %654 = vmatprep.subr.bf16.mxu0 0
      %655 = vmatpush2.bf16.xpose.msra.mxu0 0
      %656 = vmatprep.subr.bf16.mxu0 0
      %657 = vmatpush2.bf16.xpose.msra.mxu0 0
      %658 = vmatprep.mubr.bf16.mxu0 0
      %659 = vmatmul.mubr.bf16.gmra.mxu0 %v621
      %v660 = vpop.f32.mrf.mxu0
      %v661 = vadd.f32 %v361, %v660
      %v662 = vpop.f32.mrf.mxu0
      %v663 = vpop.f32.mrf.mxu0
      %v664 = vadd.f32 %v362, %v663
      %v665 = vpop.f32.mrf.mxu0
      %666 = vdwg.mxu0
      %v667 = vsel %vm421, %v661, -inf
      %668 = vmax.xlane.f32.xlu0 %v667
      %v669 = vpop.xlane.xlu0 %668
      %v670 = vsel %vm421, %v664, -inf
      %671 = vmax.xlane.f32.xlu0 %v670
      %v672 = vpop.xlane.xlu0 %671
      %v673 = vsub.f32 %v661, %v669
      %v674 = vsub.f32 %v664, %v672
      %v675 = vmul.f32 %v673, 1.442695
      %v676 = vpow.pop %v675
      %v677 = vmul.f32 %v674, 1.442695
      %v678 = vpow.pop %v677
      %v679 = vsel %vm421, %v676, 0.0
      %680 = vadd.xlane.f32.xlu0 %v679
      %v681 = vpop.xlane.xlu0 %680
      %v682 = vsel %vm421, %v678, 0.0
      %683 = vadd.xlane.f32.xlu0 %v682
      %v684 = vpop.xlane.xlu0 %683
      %v685 = vpack.c.bf16 %v678, %v676
      %686 = vrot.lane.b32.xlu0 %v445, 64
      %v687 = vpop.permute.xlu0 %686
      %v690 = vsel %vm421, %v685, 0
      %692 = vmatprep.subr.bf16.mxu0 0
      %693 = vmatpush1.bf16.msra.mxu0 0
      %694 = vmatprep.subr.bf16.mxu0 0
      %695 = vmatpush1.bf16.msra.mxu0 0
      %696 = vmatprep.subr.bf16.mxu0 0
      %697 = vmatpush1.bf16.msra.mxu0 0
      %698 = vmatprep.subr.bf16.mxu0 0
      %699 = vmatpush1.bf16.msra.mxu0 0
      %700 = vmatprep.subr.bf16.mxu0 0
      %701 = vmatpush1.bf16.msra.mxu0 0
      %702 = vmatprep.subr.bf16.mxu0 0
      %703 = vmatpush1.bf16.msra.mxu0 0
      %704 = vmatprep.subr.bf16.mxu0 0
      %705 = vmatpush1.bf16.msra.mxu0 0
      %706 = vmatprep.subr.bf16.mxu0 0
      %707 = vmatpush1.bf16.msra.mxu0 %v687
      %708 = vmatprep.subr.bf16.mxu0 0
      %709 = vmatpush2.bf16.msra.mxu0 0
      %710 = vmatprep.subr.bf16.mxu0 0
      %711 = vmatpush2.bf16.msra.mxu0 0
      %712 = vmatprep.subr.bf16.mxu0 0
      %713 = vmatpush2.bf16.msra.mxu0 0
      %714 = vmatprep.subr.bf16.mxu0 0
      %715 = vmatpush2.bf16.msra.mxu0 0
      %716 = vmatprep.subr.bf16.mxu0 0
      %717 = vmatpush2.bf16.msra.mxu0 0
      %718 = vmatprep.subr.bf16.mxu0 0
      %719 = vmatpush2.bf16.msra.mxu0 0
      %720 = vmatprep.subr.bf16.mxu0 0
      %721 = vmatpush2.bf16.msra.mxu0 0
      %722 = vmatprep.subr.bf16.mxu0 0
      %723 = vmatpush2.bf16.msra.mxu0 0
      %724 = vmatprep.mubr.bf16.mxu0 0
      %725 = vmatmul.mubr.bf16.gmra.mxu0 %v690
      %v726 = vpop.f32.mrf.mxu0
      %v727 = vadd.f32 0.0, %v726
      %v728 = vpop.f32.mrf.mxu0
      %v729 = vpop.f32.mrf.mxu0
      %v730 = vadd.f32 0.0, %v729
      %v731 = vpop.f32.mrf.mxu0
      %732 = vdwg.mxu0
      %v733 = vrcp.pop %v681
      %v734 = vrcp.pop %v684
      %v735 = vmul.f32 %v727, %v733
      %v736 = vmul.f32 %v730, %v734
      %737 = vrot.lane.b32.xlu0 %v367, 32
      %v738 = vpop.permute.xlu0 %737
      %739 = vrot.lane.b32.xlu0 %v372, 32
      %v740 = vpop.permute.xlu0 %739
      %v742 = vsel %vm373, %v738, 0
      %v745 = vsel %vm373, %v740, 0
      %747 = vmatprep.subr.bf16.mxu0 0
      %748 = vmatpush1.bf16.xpose.msra.mxu0 0
      %749 = vmatprep.subr.bf16.mxu0 0
      %750 = vmatpush1.bf16.xpose.msra.mxu0 0
      %751 = vmatprep.subr.bf16.mxu0 0
      %752 = vmatpush1.bf16.xpose.msra.mxu0 0
      %753 = vmatprep.subr.bf16.mxu0 0
      %754 = vmatpush1.bf16.xpose.msra.mxu0 0
      %755 = vmatprep.subr.bf16.mxu0 0
      %756 = vmatpush1.bf16.xpose.msra.mxu0 0
      %757 = vmatprep.subr.bf16.mxu0 0
      %758 = vmatpush1.bf16.xpose.msra.mxu0 0
      %759 = vmatprep.subr.bf16.mxu0 0
      %760 = vmatpush1.bf16.xpose.msra.mxu0 0
      %761 = vmatprep.subr.bf16.mxu0 0
      %762 = vmatpush1.bf16.xpose.msra.mxu0 %v745
      %763 = vmatprep.subr.bf16.mxu0 0
      %764 = vmatpush2.bf16.xpose.msra.mxu0 0
      %765 = vmatprep.subr.bf16.mxu0 0
      %766 = vmatpush2.bf16.xpose.msra.mxu0 0
      %767 = vmatprep.subr.bf16.mxu0 0
      %768 = vmatpush2.bf16.xpose.msra.mxu0 0
      %769 = vmatprep.subr.bf16.mxu0 0
      %770 = vmatpush2.bf16.xpose.msra.mxu0 0
      %771 = vmatprep.subr.bf16.mxu0 0
      %772 = vmatpush2.bf16.xpose.msra.mxu0 0
      %773 = vmatprep.subr.bf16.mxu0 0
      %774 = vmatpush2.bf16.xpose.msra.mxu0 0
      %775 = vmatprep.subr.bf16.mxu0 0
      %776 = vmatpush2.bf16.xpose.msra.mxu0 0
      %777 = vmatprep.subr.bf16.mxu0 0
      %778 = vmatpush2.bf16.xpose.msra.mxu0 0
      %779 = vmatprep.mubr.bf16.mxu0 0
      %780 = vmatmul.mubr.bf16.gmra.mxu0 %v742
      %v781 = vpop.f32.mrf.mxu0
      %v782 = vadd.f32 %v361, %v781
      %v783 = vpop.f32.mrf.mxu0
      %v784 = vpop.f32.mrf.mxu0
      %v785 = vadd.f32 %v362, %v784
      %v786 = vpop.f32.mrf.mxu0
      %787 = vdwg.mxu0
      %v788 = vsel %vm421, %v782, -inf
      %789 = vmax.xlane.f32.xlu0 %v788
      %v790 = vpop.xlane.xlu0 %789
      %v791 = vsel %vm421, %v785, -inf
      %792 = vmax.xlane.f32.xlu0 %v791
      %v793 = vpop.xlane.xlu0 %792
      %v794 = vsub.f32 %v782, %v790
      %v795 = vsub.f32 %v785, %v793
      %v796 = vmul.f32 %v794, 1.442695
      %v797 = vpow.pop %v796
      %v798 = vmul.f32 %v795, 1.442695
      %v799 = vpow.pop %v798
      %v800 = vsel %vm421, %v797, 0.0
      %801 = vadd.xlane.f32.xlu0 %v800
      %v802 = vpop.xlane.xlu0 %801
      %v803 = vsel %vm421, %v799, 0.0
      %804 = vadd.xlane.f32.xlu0 %v803
      %v805 = vpop.xlane.xlu0 %804
      %v806 = vpack.c.bf16 %v799, %v797
      %807 = vrot.lane.b32.xlu0 %v445, 32
      %v808 = vpop.permute.xlu0 %807
      %v811 = vsel %vm421, %v806, 0
      %813 = vmatprep.subr.bf16.mxu0 0
      %814 = vmatpush1.bf16.msra.mxu0 0
      %815 = vmatprep.subr.bf16.mxu0 0
      %816 = vmatpush1.bf16.msra.mxu0 0
      %817 = vmatprep.subr.bf16.mxu0 0
      %818 = vmatpush1.bf16.msra.mxu0 0
      %819 = vmatprep.subr.bf16.mxu0 0
      %820 = vmatpush1.bf16.msra.mxu0 0
      %821 = vmatprep.subr.bf16.mxu0 0
      %822 = vmatpush1.bf16.msra.mxu0 0
      %823 = vmatprep.subr.bf16.mxu0 0
      %824 = vmatpush1.bf16.msra.mxu0 0
      %825 = vmatprep.subr.bf16.mxu0 0
      %826 = vmatpush1.bf16.msra.mxu0 0
      %827 = vmatprep.subr.bf16.mxu0 0
      %828 = vmatpush1.bf16.msra.mxu0 %v808
      %829 = vmatprep.subr.bf16.mxu0 0
      %830 = vmatpush2.bf16.msra.mxu0 0
      %831 = vmatprep.subr.bf16.mxu0 0
      %832 = vmatpush2.bf16.msra.mxu0 0
      %833 = vmatprep.subr.bf16.mxu0 0
      %834 = vmatpush2.bf16.msra.mxu0 0
      %835 = vmatprep.subr.bf16.mxu0 0
      %836 = vmatpush2.bf16.msra.mxu0 0
      %837 = vmatprep.subr.bf16.mxu0 0
      %838 = vmatpush2.bf16.msra.mxu0 0
      %839 = vmatprep.subr.bf16.mxu0 0
      %840 = vmatpush2.bf16.msra.mxu0 0
      %841 = vmatprep.subr.bf16.mxu0 0
      %842 = vmatpush2.bf16.msra.mxu0 0
      %843 = vmatprep.subr.bf16.mxu0 0
      %844 = vmatpush2.bf16.msra.mxu0 0
      %845 = vmatprep.mubr.bf16.mxu0 0
      %846 = vmatmul.mubr.bf16.gmra.mxu0 %v811
      %v847 = vpop.f32.mrf.mxu0
      %v848 = vadd.f32 0.0, %v847
      %v849 = vpop.f32.mrf.mxu0
      %v850 = vpop.f32.mrf.mxu0
      %v851 = vadd.f32 0.0, %v850
      %v852 = vpop.f32.mrf.mxu0
      %853 = vdwg.mxu0
      %v854 = vrcp.pop %v802
      %v855 = vrcp.pop %v805
      %v856 = vmul.f32 %v848, %v854
      %v857 = vmul.f32 %v851, %v855
      %860 = vrot.lane.b32.xlu0 %v614, 32
      %v861 = vpop.permute.xlu0 %860
      %862 = vrot.lane.b32.xlu0 %v615, 32
      %v863 = vpop.permute.xlu0 %862
      %868 = vrot.lane.b32.xlu0 %v735, 64
      %v869 = vpop.permute.xlu0 %868
      %870 = vrot.lane.b32.xlu0 %v736, 64
      %v871 = vpop.permute.xlu0 %870
      %876 = vrot.lane.b32.xlu0 %v856, 96
      %v877 = vpop.permute.xlu0 %876
      %878 = vrot.lane.b32.xlu0 %v857, 96
      %v879 = vpop.permute.xlu0 %878
      %v882 = vsel %vm373, %v493, %v861
      %v883 = vsel %vm373, %v494, %v863
      %vm884 = vcmask 523264
      %v885 = vsel %vm884, %v882, %v869
      %v886 = vsel %vm884, %v883, %v871
      %vm887 = vcmask 785408
      %v888 = vsel %vm887, %v885, %v877
      %v889 = vsel %vm887, %v886, %v879
      %v890 = vld [vmem:[%s328] sm:$0xff]
      %v891 = vld [vmem:[%s328 + $0x8] sm:$0xff]
      %v892 = vpack.c.bf16 %v889, %v888
      %v893 = vld [vmem:[%s3] sm:$0xf]
      %v894 = vld [vmem:[%s3 + $0x4] sm:$0xf]
      %v895 = vld [vmem:[%s3 + $0x8] sm:$0xf]
      %v896 = vld [vmem:[%s3 + $0xc] sm:$0xf]
      %v897 = vld [vmem:[%s3 + $0x10] sm:$0xf]
      %v898 = vld [vmem:[%s3 + $0x14] sm:$0xf]
      %v899 = vld [vmem:[%s3 + $0x18] sm:$0xf]
      %v900 = vld [vmem:[%s3 + $0x1c] sm:$0xf]
      %v901 = vld [vmem:[%s3 + $0x20] sm:$0xf]
      %v902 = vld [vmem:[%s3 + $0x24] sm:$0xf]
      %v903 = vld [vmem:[%s3 + $0x28] sm:$0xf]
      %v904 = vld [vmem:[%s3 + $0x2c] sm:$0xf]
      %v905 = vld [vmem:[%s3 + $0x30] sm:$0xf]
      %v906 = vld [vmem:[%s3 + $0x34] sm:$0xf]
      %v907 = vld [vmem:[%s3 + $0x38] sm:$0xf]
      %v908 = vld [vmem:[%s3 + $0x3c] sm:$0xf]
      %v925 = vunpack.c.l.b16 %v893
      %v926 = vunpack.c.l.b16 %v894
      %v927 = vunpack.c.l.b16 %v895
      %v928 = vunpack.c.l.b16 %v896
      %v929 = vunpack.c.l.b16 %v897
      %v930 = vunpack.c.l.b16 %v898
      %v931 = vunpack.c.l.b16 %v899
      %v932 = vunpack.c.l.b16 %v900
      %v933 = vunpack.c.l.b16 %v901
      %v934 = vunpack.c.l.b16 %v902
      %v935 = vunpack.c.l.b16 %v903
      %v936 = vunpack.c.l.b16 %v904
      %v937 = vunpack.c.l.b16 %v905
      %v938 = vunpack.c.l.b16 %v906
      %v939 = vunpack.c.l.b16 %v907
      %v940 = vunpack.c.l.b16 %v908
      %v941 = vpack.c.b16 %v926, %v925
      %v942 = vpack.c.b16 %v928, %v927
      %v943 = vpack.c.b16 %v930, %v929
      %v944 = vpack.c.b16 %v932, %v931
      %v945 = vpack.c.b16 %v934, %v933
      %v946 = vpack.c.b16 %v936, %v935
      %v947 = vpack.c.b16 %v938, %v937
      %v948 = vpack.c.b16 %v940, %v939
      %957 = vmatprep.subr.bf16.mxu0 0
      %958 = vmatpush1.bf16.msra.mxu0 %v948
      %959 = vmatprep.subr.bf16.mxu0 0
      %960 = vmatpush1.bf16.msra.mxu0 %v947
      %961 = vmatprep.subr.bf16.mxu0 0
      %962 = vmatpush1.bf16.msra.mxu0 %v946
      %963 = vmatprep.subr.bf16.mxu0 0
      %964 = vmatpush1.bf16.msra.mxu0 %v945
      %965 = vmatprep.subr.bf16.mxu0 0
      %966 = vmatpush1.bf16.msra.mxu0 %v944
      %967 = vmatprep.subr.bf16.mxu0 0
      %968 = vmatpush1.bf16.msra.mxu0 %v943
      %969 = vmatprep.subr.bf16.mxu0 0
      %970 = vmatpush1.bf16.msra.mxu0 %v942
      %971 = vmatprep.subr.bf16.mxu0 0
      %972 = vmatpush1.bf16.msra.mxu0 %v941
      %973 = vmatprep.subr.bf16.mxu0 0
      %974 = vmatpush2.bf16.msra.mxu0 0
      %975 = vmatprep.subr.bf16.mxu0 0
      %976 = vmatpush2.bf16.msra.mxu0 0
      %977 = vmatprep.subr.bf16.mxu0 0
      %978 = vmatpush2.bf16.msra.mxu0 0
      %979 = vmatprep.subr.bf16.mxu0 0
      %980 = vmatpush2.bf16.msra.mxu0 0
      %981 = vmatprep.subr.bf16.mxu0 0
      %982 = vmatpush2.bf16.msra.mxu0 0
      %983 = vmatprep.subr.bf16.mxu0 0
      %984 = vmatpush2.bf16.msra.mxu0 0
      %985 = vmatprep.subr.bf16.mxu0 0
      %986 = vmatpush2.bf16.msra.mxu0 0
      %987 = vmatprep.subr.bf16.mxu0 0
      %988 = vmatpush2.bf16.msra.mxu0 0
      %989 = vmatprep.mubr.bf16.mxu0 0
      %990 = vmatmul.mubr.bf16.gmra.mxu0 %v892
      %v991 = vpop.f32.mrf.mxu0
      %v992 = vadd.f32 0.0, %v991
      %v993 = vpop.f32.mrf.mxu0
      %v994 = vpop.f32.mrf.mxu0
      %v995 = vadd.f32 0.0, %v994
      %v996 = vpop.f32.mrf.mxu0
      %997 = vdwg.mxu0
      %v998 = vadd.f32 %v890, %v992
      %v999 = vadd.f32 %v891, %v995
      %1000 = vst [vmem:[%s338] sm:$0xff] %v998
      %1001 = vst [vmem:[%s338 + $0x8] sm:$0xff] %v999
      %s1002 = smul.u32 2, %s21
      %p1003 = scmp.lt.s32.totalorder %s20, 1
      %s1004 = scalar_select %p1003, %s20, 1
      %p1005 = scmp.lt.s32.totalorder %s1002, 1
      %s1006 = scalar_select %p1005, %s1002, 1
      %s1007 = smul.addr %s1004, 2
      %s1008 = sadd.s32 %s1006, %s1007
      %s1009 = smul.addr %s1008, 8
      %s1010 = scalar_lea.vmem %s5, %s1009
      // Predicated region
      $region41: #{transformer_forward.28} parent=39 // pred_check
        %p1011 = pneg %p177
      $region42: #{transformer_forward.28} parent=39 // pred_check_branch
        %1013 = sbr.rel (%p1011) target = $region44
      $region43: #{transformer_forward.28} parent=39 // pred_region
        %s1014 = smul.u32 2, %s21
      $region44: #{transformer_forward.28} parent=39 // pred_fallthru
        _
    $region40: #{transformer_forward.28} parent=5 // pred_fallthru
      _
    %p1015 = scmp.le.s32.totalorder 2, %s11
    // Predicated region
    $region45: #{transformer_forward.28} parent=5 // pred_check
      %p1016 = pneg %p1015
    $region46: #{transformer_forward.28} parent=5 // pred_check_branch
      %1018 = sbr.rel (%p1016) target = $region48
    $region47: #{transformer_forward.28} parent=5 // pred_region
      %s1019 = ssub.s32 %s11, 2
      // Predicated region
      $region49: #{transformer_forward.28} parent=47 // pred_check
        %p1020 = pneg %p183
      $region50: #{transformer_forward.28} parent=47 // pred_check_branch
        %1022 = sbr.rel (%p1020) target = $region52
      $region51: #{transformer_forward.28} parent=47 // pred_region
        %s1023 = smul.u32 2, %s23
        %p1024 = scmp.lt.s32.totalorder %s22, 1
        %s1025 = scalar_select %p1024, %s22, 1
        %p1026 = scmp.lt.s32.totalorder %s1023, 1
        %s1027 = scalar_select %p1026, %s1023, 1
        %s1028 = smul.addr %s1025, 2
        %s1029 = sadd.s32 %s1027, %s1028
        %s1030 = smul.addr %s1029, 8
        %s1031 = scalar_lea.vmem %s5, %s1030
      $region52: #{transformer_forward.28} parent=47 // pred_fallthru
        _
    $region48: #{transformer_forward.28} parent=5 // pred_fallthru
      _
  $region6: #{transformer_forward.28} parent=0 // loop_footer
    %s15 = sadd.s32 1, %s11
  $region7: #{transformer_forward.28} parent=0 // loop_footer_branch
    %10 = sbr.rel target = $region3
  $region8: #{transformer_forward.28} parent=0 // loop_exit
    _

</llo_original>
